<compile_context>
chip_gen: v7x
topology: tpu7x:2x2x1
jax: 0.10.0
libtpu: 0.0.40
codegen_flags: <defaults>
</compile_context>

<pallas_src>
import math
import numpy as np

import jax
import jax.numpy as jnp
from jax import lax
from jax.experimental import pallas as pl
from jax.experimental.pallas import tpu as pltpu

SLOPE = 0.2
LN_EPS = 1e-5
INV_SQRT2 = 0.7071067811865476
VMEM_LIMIT = 32 * 1024 * 1024


# ----------------------------- Pallas kernels ------------------------------ #

def make_spatial_kernel(C, HW, shifts):
    """[conv_1 | identity1] fused 1x1 matmul -> LReLU -> grouped 3x3 conv
    (9 pltpu.roll lane shifts + boundary masks + per-channel FMAs) -> LReLU
    -> + identity1."""

    def kernel(x_ref, wbig_ref, bbig_ref, w2_ref, mask_ref, b2_ref, o_ref):
        x16 = x_ref[...].astype(jnp.bfloat16)                      # (C, HW)
        # one wide matmul: rows [0:2C) = conv_1 (a-rows then b-rows), [2C:3C) = identity1
        big = jnp.dot(wbig_ref[...], x16,
                      preferred_element_type=jnp.float32) + bbig_ref[...]
        t = big[:2 * C, :]
        t = jnp.where(t > 0, t, SLOPE * t)                         # LeakyReLU(0.2)
        ident = big[2 * C:, :]

        # depthwise 3x3 (groups=C) as 9 lane rolls + boundary masks + VPU FMAs
        acc = jnp.zeros((2 * C, HW), jnp.float32)
        for tap in range(9):
            if tap == 4:
                # center tap: no shift, boundary mask is all-ones
                acc = acc + t * w2_ref[tap]
            else:
                rolled = pltpu.roll(t, shifts[tap], axis=1)
                acc = acc + rolled * mask_ref[tap] * w2_ref[tap]
        dw = acc[:C, :] + acc[C:, :] + b2_ref[...]
        dw = jnp.where(dw > 0, dw, SLOPE * dw)                     # LeakyReLU(0.2)
        o_ref[...] = dw + ident

    return kernel


def _freq_kernel(xf_ref, wf1_ref, bf1_ref, wf2_ref, bf2_ref, o_ref):
    """conv_f1 (1x1) -> GELU(exact) -> conv_f2 (1x1) on Re{FFT(x)}."""
    x16 = xf_ref[...].astype(jnp.bfloat16)
    t = jnp.dot(wf1_ref[...], x16, preferred_element_type=jnp.float32) + bf1_ref[...]
    t = 0.5 * t * (1.0 + lax.erf(t * INV_SQRT2))                   # exact GELU (erf)
    o_ref[...] = (jnp.dot(wf2_ref[...], t.astype(jnp.bfloat16),
                          preferred_element_type=jnp.float32) + bf2_ref[...])


def _fuse_kernel(out_ref, xrec_ref, x_ref, wid2_ref, bid2_ref, wF_ref, bF_ref, o_ref):
    """x_rec += identity2(x);  f = con2X1(cat([out, x_rec], channel))."""
    x16 = x_ref[...].astype(jnp.bfloat16)
    xr2 = (xrec_ref[...]
           + jnp.dot(wid2_ref[...], x16, preferred_element_type=jnp.float32)
           + bid2_ref[...])
    cat = jnp.concatenate([out_ref[...], xr2], axis=0).astype(jnp.bfloat16)  # (2C, HWT)
    o_ref[...] = (jnp.dot(wF_ref[...], cat,
                          preferred_element_type=jnp.float32) + bF_ref[...])


def make_agssf_kernel(HW):
    """AGSSF without the FFT round trip:
    avg_pool(inv_mag(f)) = Re{exp(i*angle(F[0,0]))} / HW = sign(sum_spatial f) / HW
    (exact identity: the spatial mean of an iFFT is its DC coefficient / HW, and
    F[0,0] = sum_spatial(f) is real).  Then conv1d over channels (Toeplitz matmul)
    -> sigmoid -> f * y."""
    inv_hw = 1.0 / HW

    def kernel(f_ref, m_ref, o_ref):
        s = jnp.sum(f_ref[...], axis=1, keepdims=True)              # (C, 1)
        m = jnp.where(s < 0, -inv_hw, inv_hw)                       # angle(0)=0 -> +1/HW
        y = jnp.dot(m_ref[...], m, preferred_element_type=jnp.float32)
        y = jax.nn.sigmoid(y)
        o_ref[...] = f_ref[...] * y                                 # broadcast over HW

    return kernel


def make_layernorm_kernel(C):
    """LayerNorm over runs of C consecutive elements; data packed as (N, 128) lane
    rows (C | 128).  Per-chunk stats via a constant block-diagonal 128x128 matmul
    so reductions and stores stay lane-dense."""
    inv_c = 1.0 / C

    def kernel(r_ref, p_ref, g_ref, b_ref, o_ref):
        r = r_ref[...]                                              # (TR, 128)
        p = p_ref[...]                                              # (128, 128) 0/1
        mean = jnp.dot(r, p, preferred_element_type=jnp.float32,
                       precision=lax.Precision.HIGHEST) * inv_c
        cen = r - mean
        var = jnp.dot(cen * cen, p, preferred_element_type=jnp.float32,
                      precision=lax.Precision.HIGHEST) * inv_c      # biased, like torch
        o_ref[...] = cen * lax.rsqrt(var + LN_EPS) * g_ref[...] + b_ref[...]

    return kernel


# ----------------------------- pallas_call wrappers ------------------------ #

def _param_spec(shape):
    nd = len(shape)
    return pl.BlockSpec(shape, lambda *_, _nd=nd: (0,) * _nd)


def _pick_tile(total, candidates):
    for t in candidates:
        if t <= total and total % t == 0:
            return t
    return total


def spatial_branch(x_cn, wbig, bbig, w2taps, masks, b2, shifts):
    # TODO(synk): tile HW with 1-row halos for very large H*W (full-HW blocks here).
    B, C, HW = x_cn.shape
    kernel = make_spatial_kernel(C, HW, shifts)
    row = pl.BlockSpec((None, C, HW), lambda b: (b, 0, 0))
    params = (wbig, bbig, w2taps, masks, b2)
    return pl.pallas_call(
        kernel,
        out_shape=jax.ShapeDtypeStruct((B, C, HW), jnp.float32),
        grid=(B,),
        in_specs=[row] + [_param_spec(p.shape) for p in params],
        out_specs=row,
        compiler_params=pltpu.CompilerParams(
            dimension_semantics=("parallel",), vmem_limit_bytes=VMEM_LIMIT),
    )(x_cn, *params)


def freq_pointwise(xf_cn, wf1, bf1, wf2, bf2):
    B, C, HW = xf_cn.shape
    hwt = _pick_tile(HW, (2048, 1024, 512, 256, 128))
    row = pl.BlockSpec((None, C, hwt), lambda b, t: (b, 0, t))
    params = (wf1, bf1, wf2, bf2)
    return pl.pallas_call(
        _freq_kernel,
        out_shape=jax.ShapeDtypeStruct((B, C, HW), jnp.float32),
        grid=(B, HW // hwt),
        in_specs=[row] + [_param_spec(p.shape) for p in params],
        out_specs=row,
        compiler_params=pltpu.CompilerParams(
            dimension_semantics=("parallel", "parallel"), vmem_limit_bytes=VMEM_LIMIT),
    )(xf_cn, *params)


def fuse(out_cn, xrec_cn, x_cn, wid2, bid2, wF, bF):
    B, C, HW = out_cn.shape
    hwt = _pick_tile(HW, (2048, 1024, 512, 256, 128))
    row = pl.BlockSpec((None, C, hwt), lambda b, t: (b, 0, t))
    params = (wid2, bid2, wF, bF)
    return pl.pallas_call(
        _fuse_kernel,
        out_shape=jax.ShapeDtypeStruct((B, C, HW), jnp.float32),
        grid=(B, HW // hwt),
        in_specs=[row, row, row] + [_param_spec(p.shape) for p in params],
        out_specs=row,
        compiler_params=pltpu.CompilerParams(
            dimension_semantics=("parallel", "parallel"), vmem_limit_bytes=VMEM_LIMIT),
    )(out_cn, xrec_cn, x_cn, *params)


def agssf_scale(f_cn, M1d):
    B, C, HW = f_cn.shape
    kernel = make_agssf_kernel(HW)
    row = pl.BlockSpec((None, C, HW), lambda b: (b, 0, 0))
    return pl.pallas_call(
        kernel,
        out_shape=jax.ShapeDtypeStruct((B, C, HW), jnp.float32),
        grid=(B,),
        in_specs=[row, _param_spec(M1d.shape)],
        out_specs=row,
        compiler_params=pltpu.CompilerParams(
            dimension_semantics=("parallel",), vmem_limit_bytes=VMEM_LIMIT),
    )(f_cn, M1d)


def layernorm_lanes(flat, P, g_t, b_t, C):
    N = flat.shape[0]
    tr = _pick_tile(N, (1024, 512, 256, 128, 64, 32, 16, 8))
    kernel = make_layernorm_kernel(C)
    row = pl.BlockSpec((tr, 128), lambda i: (i, 0))
    params = (P, g_t, b_t)
    return pl.pallas_call(
        kernel,
        out_shape=jax.ShapeDtypeStruct((N, 128), jnp.float32),
        grid=(N // tr,),
        in_specs=[row] + [_param_spec(p.shape) for p in params],
        out_specs=row,
        compiler_params=pltpu.CompilerParams(
            dimension_semantics=("parallel",), vmem_limit_bytes=VMEM_LIMIT),
    )(flat, *params)


# ----------------------------- parameter setup (glue) ---------------------- #

def agssf_kernel_size(channels, b=1, gamma=2):
    k = int(abs(math.log2(channels) / gamma + b / gamma))
    return k if k % 2 else k + 1


def build_tap_masks(H, W):
    """masks[tap, 0, y*W+x] = 1 iff input pixel (y+dy, x+dx) is inside the image."""
    yy, xx = np.meshgrid(np.arange(H), np.arange(W), indexing="ij")
    masks = np.zeros((9, 1, H * W), np.float32)
    for ky in range(3):
        for kx in range(3):
            dy, dx = ky - 1, kx - 1
            ok = (yy + dy >= 0) & (yy + dy < H) & (xx + dx >= 0) & (xx + dx < W)
            masks[ky * 3 + kx, 0] = ok.reshape(-1).astype(np.float32)
    return jnp.asarray(masks)


def tap_shifts(H, W):
    """Static lane-roll amounts so roll(t, s)[n] == t[(n + dy*W + dx) % HW]."""
    HW = H * W
    return [(-(dy * W + dx)) % HW for dy in (-1, 0, 1) for dx in (-1, 0, 1)]


def build_conv1d_toeplitz(w1d, C):
    """M @ m  ==  Conv1d(1, 1, k, padding=(k-1)//2, bias=False) over the channel dim."""
    w = np.asarray(w1d)
    k = w.shape[0]
    pad = (k - 1) // 2
    co = np.arange(C)[:, None]
    ci = np.arange(C)[None, :]
    j = ci - co + pad
    M = np.where((j >= 0) & (j < k), w[np.clip(j, 0, k - 1)], 0.0).astype(np.float32)
    return jnp.asarray(M)


def build_ln_constants(C):
    assert 128 % C == 0, "lane-folded LayerNorm requires channels to divide 128"
    idx = np.arange(128)
    P = (idx[:, None] // C == idx[None, :] // C).astype(np.float32)   # block-diagonal
    g = np.tile(np.ones((C,), np.float32), 128 // C)[None, :]          # LN weight (ones)
    b = np.zeros((1, 128), np.float32)                                 # LN bias (zeros)
    return jnp.asarray(P), jnp.asarray(g), jnp.asarray(b)


def init_params(C, H, W, key):
    ks = jax.random.split(key, 16)

    def nrm(k, shape, scale=0.1):
        return (scale * jax.random.normal(k, shape)).astype(jnp.float32)

    # PyTorch-layout weights (deterministic synthetic init).
    W_conv1 = nrm(ks[0], (2 * C, C));   b_conv1 = nrm(ks[1], (2 * C,))
    W_conv2 = nrm(ks[2], (C, 2, 3, 3)); b_conv2 = nrm(ks[3], (C,))
    W_id1 = nrm(ks[4], (C, C));         b_id1 = nrm(ks[5], (C,))
    W_id2 = nrm(ks[6], (C, C));         b_id2 = nrm(ks[7], (C,))
    W_f1 = nrm(ks[8], (2 * C, C));      b_f1 = nrm(ks[9], (2 * C,))
    W_f2 = nrm(ks[10], (C, 2 * C));     b_f2 = nrm(ks[11], (C,))
    W_fx = nrm(ks[12], (C, 2 * C));     b_fx = nrm(ks[13], (C,))
    w1d = nrm(ks[14], (agssf_kernel_size(C),))

    # conv_1 rows permuted so rows [0:C) feed group-input channel 2g and rows [C:2C)
    # feed channel 2g+1, then fused with identity1 into a single (3C, C) matmul weight.
    perm = jnp.concatenate([jnp.arange(0, 2 * C, 2), jnp.arange(1, 2 * C, 2)])
    wbig = jnp.concatenate([W_conv1[perm], W_id1], axis=0).astype(jnp.bfloat16)
    bbig = jnp.concatenate([b_conv1[perm], b_id1])[:, None]

    # grouped 3x3 conv: per-tap, per-row coefficients in the same (a-rows, b-rows) order
    w2a = W_conv2[:, 0].reshape(C, 9)
    w2b = W_conv2[:, 1].reshape(C, 9)
    w2taps = jnp.transpose(jnp.concatenate([w2a, w2b], axis=0))[:, :, None]  # (9, 2C, 1)

    P, ln_g_t, ln_b_t = build_ln_constants(C)

    return dict(
        wbig=wbig, bbig=bbig, w2taps=w2taps, b2=b_conv2[:, None],
        wf1=W_f1.astype(jnp.bfloat16), bf1=b_f1[:, None],
        wf2=W_f2.astype(jnp.bfloat16), bf2=b_f2[:, None],
        wid2=W_id2.astype(jnp.bfloat16), bid2=b_id2[:, None],
        wF=W_fx.astype(jnp.bfloat16), bF=b_fx[:, None],
        M1d=build_conv1d_toeplitz(w1d, C),
        masks=build_tap_masks(H, W),
        P=P, ln_g_t=ln_g_t, ln_b_t=ln_b_t,
    )


# ----------------------------- SFCA forward -------------------------------- #

def sfca_forward(x, p):
    B, L, C = x.shape
    H = int(round(math.sqrt(L)))
    W = H
    HW = H * W
    assert (B * C * HW) % 128 == 0

    # torch: x.view(b, c, h, w) -- raw reinterpretation of the (B, L, C) buffer.
    # All reshapes below preserve memory order (no transposes, no extra HBM passes).
    x_cn = x.reshape(B, C, HW)                      # channels on sublane, HW on lanes
    shifts = tap_shifts(H, W)

    # ---- spatial branch (Pallas: fused 1x1 matmul + roll/mask depthwise 3x3) ----
    out_cn = spatial_branch(x_cn, p['wbig'], p['bbig'], p['w2taps'],
                            p['masks'], p['b2'], shifts)

    # ---- frequency branch: FFT in JAX, pointwise convs in Pallas ----
    # TODO(synk): FFT / iFFT remain plain-JAX (no Pallas FFT primitive on TPU).
    x_fft = jnp.fft.fftn(x_cn.reshape(B, C, H, W), axes=(-2, -1)).real
    xf_out = freq_pointwise(x_fft.reshape(B, C, HW),
                            p['wf1'], p['bf1'], p['wf2'], p['bf2'])
    x_rec = jnp.fft.ifftn(xf_out.reshape(B, C, H, W), axes=(-2, -1)).real

    # ---- fusion: identity2 add + con2X1 (Pallas) ----
    f_cn = fuse(out_cn, x_rec.reshape(B, C, HW), x_cn,
                p['wid2'], p['bid2'], p['wF'], p['bF'])

    # ---- AGSSF: avg_pool(inv_mag(f)) == sign(sum_spatial f)/HW (exact identity),
    # so the phase-only FFT round trip is eliminated; all of AGSSF runs in Pallas ----
    scaled_cn = agssf_scale(f_cn, p['M1d'])

    # ---- torch: f_out.view(b, -1, c) on NCHW-contiguous data, then LayerNorm(C) ----
    flat = scaled_cn.reshape((B * C * HW) // 128, 128)    # order-preserving lane fold
    normed = layernorm_lanes(flat, p['P'], p['ln_g_t'], p['ln_b_t'], C)
    return normed.reshape(B, HW, C)


# ----------------------------- main ----------------------------------------- #

if __name__ == "__main__":
    B, C, H, Wd = 2, 16, 16, 16       # channels=16 -> AGSSF conv1d kernel_size=3
    L = H * Wd

    key = jax.random.PRNGKey(0)
    kx, kp = jax.random.split(key)
    x = jax.random.normal(kx, (B, L, C), dtype=jnp.float32)
    params = init_params(C, H, Wd, kp)

    out = jax.jit(sfca_forward)(x, params)
    jax.block_until_ready(out)
    assert out.shape == (B, L, C) and out.dtype == jnp.float32
    print("KERNEL_OK")
</pallas_src>

<mosaic_0001>
module attributes {stable_mosaic.version = 11 : i64} {
  func.func @_freq_kernel(%arg0: i32, %arg1: i32, %arg2: memref<1x16x256xf32, #tpu.memory_space<vmem>>, %arg3: memref<32x16xbf16, #tpu.memory_space<vmem>>, %arg4: memref<32x1xf32, #tpu.memory_space<vmem>>, %arg5: memref<16x32xbf16, #tpu.memory_space<vmem>>, %arg6: memref<16x1xf32, #tpu.memory_space<vmem>>, %arg7: memref<1x16x256xf32, #tpu.memory_space<vmem>>) attributes {dimension_semantics = [#tpu.dimension_semantics<parallel>, #tpu.dimension_semantics<parallel>], iteration_bounds = array<i64: 2, 1>, scalar_prefetch = 0 : i64, scratch_operands = 0 : i64, tpu.core_type = #tpu.core_type<tc>, window_params = [{transform_indices = @transform_0, window_bounds = array<i64: 1, 16, 256>}, {pipeline_mode = #tpu.pipeline_mode<synchronous>, transform_indices = @transform_1, window_bounds = array<i64: 32, 16>}, {pipeline_mode = #tpu.pipeline_mode<synchronous>, transform_indices = @transform_2, window_bounds = array<i64: 32, 1>}, {pipeline_mode = #tpu.pipeline_mode<synchronous>, transform_indices = @transform_3, window_bounds = array<i64: 16, 32>}, {pipeline_mode = #tpu.pipeline_mode<synchronous>, transform_indices = @transform_4, window_bounds = array<i64: 16, 1>}, {transform_indices = @transform_5, window_bounds = array<i64: 1, 16, 256>}]} {
    %c0 = arith.constant 0 : index
    %c0_0 = arith.constant 0 : index
    %c0_1 = arith.constant 0 : index
    %0 = vector.load %arg2[%c0, %c0_0, %c0_1] : memref<1x16x256xf32, #tpu.memory_space<vmem>>, vector<1x16x256xf32>
    %1 = vector.shape_cast %0 : vector<1x16x256xf32> to vector<16x256xf32>
    %2 = arith.truncf %1 : vector<16x256xf32> to vector<16x256xbf16>
    %c0_2 = arith.constant 0 : index
    %c0_3 = arith.constant 0 : index
    %3 = vector.load %arg3[%c0_2, %c0_3] : memref<32x16xbf16, #tpu.memory_space<vmem>>, vector<32x16xbf16>
    %cst = arith.constant dense<0.000000e+00> : vector<32x256xf32>
    %4 = tpu.matmul %3, %2, %cst {dimension_numbers = #tpu.dot_dimension_numbers<[1], [0], [0], [1], [0, 0, 1, 1], [], []>} : vector<32x16xbf16>, vector<16x256xbf16>, vector<32x256xf32> -> vector<32x256xf32>
    %c0_4 = arith.constant 0 : index
    %c0_5 = arith.constant 0 : index
    %5 = vector.load %arg4[%c0_4, %c0_5] : memref<32x1xf32, #tpu.memory_space<vmem>>, vector<32x1xf32>
    %6 = vector.broadcast %5 : vector<32x1xf32> to vector<32x256xf32>
    %7 = arith.addf %4, %6 : vector<32x256xf32>
    %cst_6 = arith.constant 5.000000e-01 : f32
    %8 = vector.broadcast %cst_6 : f32 to vector<32x256xf32>
    %9 = arith.mulf %8, %7 : vector<32x256xf32>
    %cst_7 = arith.constant 0.707106769 : f32
    %10 = vector.broadcast %cst_7 : f32 to vector<32x256xf32>
    %11 = arith.mulf %7, %10 : vector<32x256xf32>
    %12 = math.erf %11 : vector<32x256xf32>
    %cst_8 = arith.constant 1.000000e+00 : f32
    %13 = vector.broadcast %cst_8 : f32 to vector<32x256xf32>
    %14 = arith.addf %13, %12 : vector<32x256xf32>
    %15 = arith.mulf %9, %14 : vector<32x256xf32>
    %c0_9 = arith.constant 0 : index
    %c0_10 = arith.constant 0 : index
    %16 = vector.load %arg5[%c0_9, %c0_10] : memref<16x32xbf16, #tpu.memory_space<vmem>>, vector<16x32xbf16>
    %17 = arith.truncf %15 : vector<32x256xf32> to vector<32x256xbf16>
    %cst_11 = arith.constant dense<0.000000e+00> : vector<16x256xf32>
    %18 = tpu.matmul %16, %17, %cst_11 {dimension_numbers = #tpu.dot_dimension_numbers<[1], [0], [0], [1], [0, 0, 1, 1], [], []>} : vector<16x32xbf16>, vector<32x256xbf16>, vector<16x256xf32> -> vector<16x256xf32>
    %c0_12 = arith.constant 0 : index
    %c0_13 = arith.constant 0 : index
    %19 = vector.load %arg6[%c0_12, %c0_13] : memref<16x1xf32, #tpu.memory_space<vmem>>, vector<16x1xf32>
    %20 = vector.broadcast %19 : vector<16x1xf32> to vector<16x256xf32>
    %21 = arith.addf %18, %20 : vector<16x256xf32>
    %c0_14 = arith.constant 0 : index
    %c0_15 = arith.constant 0 : index
    %c0_16 = arith.constant 0 : index
    %22 = vector.load %arg7[%c0_14, %c0_15, %c0_16] : memref<1x16x256xf32, #tpu.memory_space<vmem>>, vector<1x16x256xf32>
    %23 = vector.shape_cast %22 : vector<1x16x256xf32> to vector<16x256xf32>
    %24 = vector.shape_cast %21 : vector<16x256xf32> to vector<1x16x256xf32>
    tpu.vector_store %arg7[%c0_14, %c0_15, %c0_16], %24 {strides = array<i32>} : memref<1x16x256xf32, #tpu.memory_space<vmem>>, vector<1x16x256xf32>,
    return
  }
  func.func @transform_0(%arg0: i32, %arg1: i32) -> (i32, i32, i32) {
    %c0_i32 = arith.constant 0 : i32
    %c0_i32_0 = arith.constant 0 : i32
    return %arg0, %c0_i32, %arg1 : i32, i32, i32
  }
  func.func @transform_1(%arg0: i32, %arg1: i32) -> (i32, i32) {
    %c0_i32 = arith.constant 0 : i32
    %c0_i32_0 = arith.constant 0 : i32
    %c0_i32_1 = arith.constant 0 : i32
    return %c0_i32, %c0_i32_0 : i32, i32
  }
  func.func @transform_2(%arg0: i32, %arg1: i32) -> (i32, i32) {
    %c0_i32 = arith.constant 0 : i32
    %c0_i32_0 = arith.constant 0 : i32
    %c0_i32_1 = arith.constant 0 : i32
    return %c0_i32, %c0_i32_0 : i32, i32
  }
  func.func @transform_3(%arg0: i32, %arg1: i32) -> (i32, i32) {
    %c0_i32 = arith.constant 0 : i32
    %c0_i32_0 = arith.constant 0 : i32
    %c0_i32_1 = arith.constant 0 : i32
    return %c0_i32, %c0_i32_0 : i32, i32
  }
  func.func @transform_4(%arg0: i32, %arg1: i32) -> (i32, i32) {
    %c0_i32 = arith.constant 0 : i32
    %c0_i32_0 = arith.constant 0 : i32
    %c0_i32_1 = arith.constant 0 : i32
    return %c0_i32, %c0_i32_0 : i32, i32
  }
  func.func @transform_5(%arg0: i32, %arg1: i32) -> (i32, i32, i32) {
    %c0_i32 = arith.constant 0 : i32
    %c0_i32_0 = arith.constant 0 : i32
    return %arg0, %c0_i32, %arg1 : i32, i32, i32
  }
}

module attributes {stable_mosaic.version = 11 : i64} {
  func.func @kernel(%arg0: i32, %arg1: memref<1x16x256xf32, #tpu.memory_space<vmem>>, %arg2: memref<48x16xbf16, #tpu.memory_space<vmem>>, %arg3: memref<48x1xf32, #tpu.memory_space<vmem>>, %arg4: memref<9x32x1xf32, #tpu.memory_space<vmem>>, %arg5: memref<9x1x256xf32, #tpu.memory_space<vmem>>, %arg6: memref<16x1xf32, #tpu.memory_space<vmem>>, %arg7: memref<1x16x256xf32, #tpu.memory_space<vmem>>) attributes {dimension_semantics = [#tpu.dimension_semantics<parallel>], iteration_bounds = array<i64: 2>, scalar_prefetch = 0 : i64, scratch_operands = 0 : i64, tpu.core_type = #tpu.core_type<tc>, window_params = [{transform_indices = @transform_0, window_bounds = array<i64: 1, 16, 256>}, {pipeline_mode = #tpu.pipeline_mode<synchronous>, transform_indices = @transform_1, window_bounds = array<i64: 48, 16>}, {pipeline_mode = #tpu.pipeline_mode<synchronous>, transform_indices = @transform_2, window_bounds = array<i64: 48, 1>}, {pipeline_mode = #tpu.pipeline_mode<synchronous>, transform_indices = @transform_3, window_bounds = array<i64: 9, 32, 1>}, {pipeline_mode = #tpu.pipeline_mode<synchronous>, transform_indices = @transform_4, window_bounds = array<i64: 9, 1, 256>}, {pipeline_mode = #tpu.pipeline_mode<synchronous>, transform_indices = @transform_5, window_bounds = array<i64: 16, 1>}, {transform_indices = @transform_6, window_bounds = array<i64: 1, 16, 256>}]} {
    %c0 = arith.constant 0 : index
    %c0_0 = arith.constant 0 : index
    %c0_1 = arith.constant 0 : index
    %0 = vector.load %arg1[%c0, %c0_0, %c0_1] : memref<1x16x256xf32, #tpu.memory_space<vmem>>, vector<1x16x256xf32>
    %1 = vector.shape_cast %0 : vector<1x16x256xf32> to vector<16x256xf32>
    %2 = arith.truncf %1 : vector<16x256xf32> to vector<16x256xbf16>
    %c0_2 = arith.constant 0 : index
    %c0_3 = arith.constant 0 : index
    %3 = vector.load %arg2[%c0_2, %c0_3] : memref<48x16xbf16, #tpu.memory_space<vmem>>, vector<48x16xbf16>
    %cst = arith.constant dense<0.000000e+00> : vector<48x256xf32>
    %4 = tpu.matmul %3, %2, %cst {dimension_numbers = #tpu.dot_dimension_numbers<[1], [0], [0], [1], [0, 0, 1, 1], [], []>} : vector<48x16xbf16>, vector<16x256xbf16>, vector<48x256xf32> -> vector<48x256xf32>
    %c0_4 = arith.constant 0 : index
    %c0_5 = arith.constant 0 : index
    %5 = vector.load %arg3[%c0_4, %c0_5] : memref<48x1xf32, #tpu.memory_space<vmem>>, vector<48x1xf32>
    %6 = vector.broadcast %5 : vector<48x1xf32> to vector<48x256xf32>
    %7 = arith.addf %4, %6 : vector<48x256xf32>
    %8 = vector.extract_strided_slice %7 {offsets = [0, 0], sizes = [32, 256], strides = [1, 1]} : vector<48x256xf32> to vector<32x256xf32>
    %cst_6 = arith.constant 0.000000e+00 : f32
    %9 = vector.broadcast %cst_6 : f32 to vector<32x256xf32>
    %10 = arith.cmpf ogt, %8, %9 : vector<32x256xf32>
    %cst_7 = arith.constant 2.000000e-01 : f32
    %11 = vector.broadcast %cst_7 : f32 to vector<32x256xf32>
    %12 = arith.mulf %11, %8 : vector<32x256xf32>
    %13 = arith.select %10, %8, %12 : vector<32x256xi1>, vector<32x256xf32>
    %14 = vector.extract_strided_slice %7 {offsets = [32, 0], sizes = [16, 256], strides = [1, 1]} : vector<48x256xf32> to vector<16x256xf32>
    %cst_8 = arith.constant 0.000000e+00 : f32
    %15 = vector.broadcast %cst_8 : f32 to vector<32x256xf32>
    %c17_i32 = arith.constant 17 : i32
    %16 = tpu.dynamic_rotate %13 by %c17_i32 dim 1 : vector<32x256xf32>, i32 -> vector<32x256xf32>
    %c0_9 = arith.constant 0 : index
    %c0_10 = arith.constant 0 : index
    %c0_11 = arith.constant 0 : index
    %17 = vector.load %arg5[%c0_9, %c0_10, %c0_11] : memref<9x1x256xf32, #tpu.memory_space<vmem>>, vector<1x1x256xf32>
    %18 = vector.shape_cast %17 : vector<1x1x256xf32> to vector<1x256xf32>
    %19 = vector.broadcast %18 : vector<1x256xf32> to vector<32x256xf32>
    %20 = arith.mulf %16, %19 : vector<32x256xf32>
    %c0_12 = arith.constant 0 : index
    %c0_13 = arith.constant 0 : index
    %c0_14 = arith.constant 0 : index
    %21 = vector.load %arg4[%c0_12, %c0_13, %c0_14] : memref<9x32x1xf32, #tpu.memory_space<vmem>>, vector<1x32x1xf32>
    %22 = vector.shape_cast %21 : vector<1x32x1xf32> to vector<32x1xf32>
    %23 = vector.broadcast %22 : vector<32x1xf32> to vector<32x256xf32>
    %24 = arith.mulf %20, %23 : vector<32x256xf32>
    %25 = arith.addf %15, %24 : vector<32x256xf32>
    %c16_i32 = arith.constant 16 : i32
    %26 = tpu.dynamic_rotate %13 by %c16_i32 dim 1 : vector<32x256xf32>, i32 -> vector<32x256xf32>
    %c1 = arith.constant 1 : index
    %c0_15 = arith.constant 0 : index
    %c0_16 = arith.constant 0 : index
    %27 = vector.load %arg5[%c1, %c0_15, %c0_16] : memref<9x1x256xf32, #tpu.memory_space<vmem>>, vector<1x1x256xf32>
    %28 = vector.shape_cast %27 : vector<1x1x256xf32> to vector<1x256xf32>
    %29 = vector.broadcast %28 : vector<1x256xf32> to vector<32x256xf32>
    %30 = arith.mulf %26, %29 : vector<32x256xf32>
    %c1_17 = arith.constant 1 : index
    %c0_18 = arith.constant 0 : index
    %c0_19 = arith.constant 0 : index
    %31 = vector.load %arg4[%c1_17, %c0_18, %c0_19] : memref<9x32x1xf32, #tpu.memory_space<vmem>>, vector<1x32x1xf32>
    %32 = vector.shape_cast %31 : vector<1x32x1xf32> to vector<32x1xf32>
    %33 = vector.broadcast %32 : vector<32x1xf32> to vector<32x256xf32>
    %34 = arith.mulf %30, %33 : vector<32x256xf32>
    %35 = arith.addf %25, %34 : vector<32x256xf32>
    %c15_i32 = arith.constant 15 : i32
    %36 = tpu.dynamic_rotate %13 by %c15_i32 dim 1 : vector<32x256xf32>, i32 -> vector<32x256xf32>
    %c2 = arith.constant 2 : index
    %c0_20 = arith.constant 0 : index
    %c0_21 = arith.constant 0 : index
    %37 = vector.load %arg5[%c2, %c0_20, %c0_21] : memref<9x1x256xf32, #tpu.memory_space<vmem>>, vector<1x1x256xf32>
    %38 = vector.shape_cast %37 : vector<1x1x256xf32> to vector<1x256xf32>
    %39 = vector.broadcast %38 : vector<1x256xf32> to vector<32x256xf32>
    %40 = arith.mulf %36, %39 : vector<32x256xf32>
    %c2_22 = arith.constant 2 : index
    %c0_23 = arith.constant 0 : index
    %c0_24 = arith.constant 0 : index
    %41 = vector.load %arg4[%c2_22, %c0_23, %c0_24] : memref<9x32x1xf32, #tpu.memory_space<vmem>>, vector<1x32x1xf32>
    %42 = vector.shape_cast %41 : vector<1x32x1xf32> to vector<32x1xf32>
    %43 = vector.broadcast %42 : vector<32x1xf32> to vector<32x256xf32>
    %44 = arith.mulf %40, %43 : vector<32x256xf32>
    %45 = arith.addf %35, %44 : vector<32x256xf32>
    %c1_i32 = arith.constant 1 : i32
    %46 = tpu.dynamic_rotate %13 by %c1_i32 dim 1 : vector<32x256xf32>, i32 -> vector<32x256xf32>
    %c3 = arith.constant 3 : index
    %c0_25 = arith.constant 0 : index
    %c0_26 = arith.constant 0 : index
    %47 = vector.load %arg5[%c3, %c0_25, %c0_26] : memref<9x1x256xf32, #tpu.memory_space<vmem>>, vector<1x1x256xf32>
    %48 = vector.shape_cast %47 : vector<1x1x256xf32> to vector<1x256xf32>
    %49 = vector.broadcast %48 : vector<1x256xf32> to vector<32x256xf32>
    %50 = arith.mulf %46, %49 : vector<32x256xf32>
    %c3_27 = arith.constant 3 : index
    %c0_28 = arith.constant 0 : index
    %c0_29 = arith.constant 0 : index
    %51 = vector.load %arg4[%c3_27, %c0_28, %c0_29] : memref<9x32x1xf32, #tpu.memory_space<vmem>>, vector<1x32x1xf32>
    %52 = vector.shape_cast %51 : vector<1x32x1xf32> to vector<32x1xf32>
    %53 = vector.broadcast %52 : vector<32x1xf32> to vector<32x256xf32>
    %54 = arith.mulf %50, %53 : vector<32x256xf32>
    %55 = arith.addf %45, %54 : vector<32x256xf32>
    %c4 = arith.constant 4 : index
    %c0_30 = arith.constant 0 : index
    %c0_31 = arith.constant 0 : index
    %56 = vector.load %arg4[%c4, %c0_30, %c0_31] : memref<9x32x1xf32, #tpu.memory_space<vmem>>, vector<1x32x1xf32>
    %57 = vector.shape_cast %56 : vector<1x32x1xf32> to vector<32x1xf32>
    %58 = vector.broadcast %57 : vector<32x1xf32> to vector<32x256xf32>
    %59 = arith.mulf %13, %58 : vector<32x256xf32>
    %60 = arith.addf %55, %59 : vector<32x256xf32>
    %c255_i32 = arith.constant 255 : i32
    %61 = tpu.dynamic_rotate %13 by %c255_i32 dim 1 : vector<32x256xf32>, i32 -> vector<32x256xf32>
    %c5 = arith.constant 5 : index
    %c0_32 = arith.constant 0 : index
    %c0_33 = arith.constant 0 : index
    %62 = vector.load %arg5[%c5, %c0_32, %c0_33] : memref<9x1x256xf32, #tpu.memory_space<vmem>>, vector<1x1x256xf32>
    %63 = vector.shape_cast %62 : vector<1x1x256xf32> to vector<1x256xf32>
    %64 = vector.broadcast %63 : vector<1x256xf32> to vector<32x256xf32>
    %65 = arith.mulf %61, %64 : vector<32x256xf32>
    %c5_34 = arith.constant 5 : index
    %c0_35 = arith.constant 0 : index
    %c0_36 = arith.constant 0 : index
    %66 = vector.load %arg4[%c5_34, %c0_35, %c0_36] : memref<9x32x1xf32, #tpu.memory_space<vmem>>, vector<1x32x1xf32>
    %67 = vector.shape_cast %66 : vector<1x32x1xf32> to vector<32x1xf32>
    %68 = vector.broadcast %67 : vector<32x1xf32> to vector<32x256xf32>
    %69 = arith.mulf %65, %68 : vector<32x256xf32>
    %70 = arith.addf %60, %69 : vector<32x256xf32>
    %c241_i32 = arith.constant 241 : i32
    %71 = tpu.dynamic_rotate %13 by %c241_i32 dim 1 : vector<32x256xf32>, i32 -> vector<32x256xf32>
    %c6 = arith.constant 6 : index
    %c0_37 = arith.constant 0 : index
    %c0_38 = arith.constant 0 : index
    %72 = vector.load %arg5[%c6, %c0_37, %c0_38] : memref<9x1x256xf32, #tpu.memory_space<vmem>>, vector<1x1x256xf32>
    %73 = vector.shape_cast %72 : vector<1x1x256xf32> to vector<1x256xf32>
    %74 = vector.broadcast %73 : vector<1x256xf32> to vector<32x256xf32>
    %75 = arith.mulf %71, %74 : vector<32x256xf32>
    %c6_39 = arith.constant 6 : index
    %c0_40 = arith.constant 0 : index
    %c0_41 = arith.constant 0 : index
    %76 = vector.load %arg4[%c6_39, %c0_40, %c0_41] : memref<9x32x1xf32, #tpu.memory_space<vmem>>, vector<1x32x1xf32>
    %77 = vector.shape_cast %76 : vector<1x32x1xf32> to vector<32x1xf32>
    %78 = vector.broadcast %77 : vector<32x1xf32> to vector<32x256xf32>
    %79 = arith.mulf %75, %78 : vector<32x256xf32>
    %80 = arith.addf %70, %79 : vector<32x256xf32>
    %c240_i32 = arith.constant 240 : i32
    %81 = tpu.dynamic_rotate %13 by %c240_i32 dim 1 : vector<32x256xf32>, i32 -> vector<32x256xf32>
    %c7 = arith.constant 7 : index
    %c0_42 = arith.constant 0 : index
    %c0_43 = arith.constant 0 : index
    %82 = vector.load %arg5[%c7, %c0_42, %c0_43] : memref<9x1x256xf32, #tpu.memory_space<vmem>>, vector<1x1x256xf32>
    %83 = vector.shape_cast %82 : vector<1x1x256xf32> to vector<1x256xf32>
    %84 = vector.broadcast %83 : vector<1x256xf32> to vector<32x256xf32>
    %85 = arith.mulf %81, %84 : vector<32x256xf32>
    %c7_44 = arith.constant 7 : index
    %c0_45 = arith.constant 0 : index
    %c0_46 = arith.constant 0 : index
    %86 = vector.load %arg4[%c7_44, %c0_45, %c0_46] : memref<9x32x1xf32, #tpu.memory_space<vmem>>, vector<1x32x1xf32>
    %87 = vector.shape_cast %86 : vector<1x32x1xf32> to vector<32x1xf32>
    %88 = vector.broadcast %87 : vector<32x1xf32> to vector<32x256xf32>
    %89 = arith.mulf %85, %88 : vector<32x256xf32>
    %90 = arith.addf %80, %89 : vector<32x256xf32>
    %c239_i32 = arith.constant 239 : i32
    %91 = tpu.dynamic_rotate %13 by %c239_i32 dim 1 : vector<32x256xf32>, i32 -> vector<32x256xf32>
    %c8 = arith.constant 8 : index
    %c0_47 = arith.constant 0 : index
    %c0_48 = arith.constant 0 : index
    %92 = vector.load %arg5[%c8, %c0_47, %c0_48] : memref<9x1x256xf32, #tpu.memory_space<vmem>>, vector<1x1x256xf32>
    %93 = vector.shape_cast %92 : vector<1x1x256xf32> to vector<1x256xf32>
    %94 = vector.broadcast %93 : vector<1x256xf32> to vector<32x256xf32>
    %95 = arith.mulf %91, %94 : vector<32x256xf32>
    %c8_49 = arith.constant 8 : index
    %c0_50 = arith.constant 0 : index
    %c0_51 = arith.constant 0 : index
    %96 = vector.load %arg4[%c8_49, %c0_50, %c0_51] : memref<9x32x1xf32, #tpu.memory_space<vmem>>, vector<1x32x1xf32>
    %97 = vector.shape_cast %96 : vector<1x32x1xf32> to vector<32x1xf32>
    %98 = vector.broadcast %97 : vector<32x1xf32> to vector<32x256xf32>
    %99 = arith.mulf %95, %98 : vector<32x256xf32>
    %100 = arith.addf %90, %99 : vector<32x256xf32>
    %101 = vector.extract_strided_slice %100 {offsets = [0, 0], sizes = [16, 256], strides = [1, 1]} : vector<32x256xf32> to vector<16x256xf32>
    %102 = vector.extract_strided_slice %100 {offsets = [16, 0], sizes = [16, 256], strides = [1, 1]} : vector<32x256xf32> to vector<16x256xf32>
    %103 = arith.addf %101, %102 : vector<16x256xf32>
    %c0_52 = arith.constant 0 : index
    %c0_53 = arith.constant 0 : index
    %104 = vector.load %arg6[%c0_52, %c0_53] : memref<16x1xf32, #tpu.memory_space<vmem>>, vector<16x1xf32>
    %105 = vector.broadcast %104 : vector<16x1xf32> to vector<16x256xf32>
    %106 = arith.addf %103, %105 : vector<16x256xf32>
    %cst_54 = arith.constant 0.000000e+00 : f32
    %107 = vector.broadcast %cst_54 : f32 to vector<16x256xf32>
    %108 = arith.cmpf ogt, %106, %107 : vector<16x256xf32>
    %cst_55 = arith.constant 2.000000e-01 : f32
    %109 = vector.broadcast %cst_55 : f32 to vector<16x256xf32>
    %110 = arith.mulf %109, %106 : vector<16x256xf32>
    %111 = arith.select %108, %106, %110 : vector<16x256xi1>, vector<16x256xf32>
    %112 = arith.addf %111, %14 : vector<16x256xf32>
    %c0_56 = arith.constant 0 : index
    %c0_57 = arith.constant 0 : index
    %c0_58 = arith.constant 0 : index
    %113 = vector.load %arg7[%c0_56, %c0_57, %c0_58] : memref<1x16x256xf32, #tpu.memory_space<vmem>>, vector<1x16x256xf32>
    %114 = vector.shape_cast %113 : vector<1x16x256xf32> to vector<16x256xf32>
    %115 = vector.shape_cast %112 : vector<16x256xf32> to vector<1x16x256xf32>
    tpu.vector_store %arg7[%c0_56, %c0_57, %c0_58], %115 {strides = array<i32>} : memref<1x16x256xf32, #tpu.memory_space<vmem>>, vector<1x16x256xf32>,
    return
  }
  func.func @transform_0(%arg0: i32) -> (i32, i32, i32) {
    %c0_i32 = arith.constant 0 : i32
    %c0_i32_0 = arith.constant 0 : i32
    %c0_i32_1 = arith.constant 0 : i32
    return %arg0, %c0_i32, %c0_i32_0 : i32, i32, i32
  }
  func.func @transform_1(%arg0: i32) -> (i32, i32) {
    %c0_i32 = arith.constant 0 : i32
    %c0_i32_0 = arith.constant 0 : i32
    %c0_i32_1 = arith.constant 0 : i32
    return %c0_i32, %c0_i32_0 : i32, i32
  }
  func.func @transform_2(%arg0: i32) -> (i32, i32) {
    %c0_i32 = arith.constant 0 : i32
    %c0_i32_0 = arith.constant 0 : i32
    %c0_i32_1 = arith.constant 0 : i32
    return %c0_i32, %c0_i32_0 : i32, i32
  }
  func.func @transform_3(%arg0: i32) -> (i32, i32, i32) {
    %c0_i32 = arith.constant 0 : i32
    %c0_i32_0 = arith.constant 0 : i32
    %c0_i32_1 = arith.constant 0 : i32
    %c0_i32_2 = arith.constant 0 : i32
    return %c0_i32, %c0_i32_0, %c0_i32_1 : i32, i32, i32
  }
  func.func @transform_4(%arg0: i32) -> (i32, i32, i32) {
    %c0_i32 = arith.constant 0 : i32
    %c0_i32_0 = arith.constant 0 : i32
    %c0_i32_1 = arith.constant 0 : i32
    %c0_i32_2 = arith.constant 0 : i32
    return %c0_i32, %c0_i32_0, %c0_i32_1 : i32, i32, i32
  }
  func.func @transform_5(%arg0: i32) -> (i32, i32) {
    %c0_i32 = arith.constant 0 : i32
    %c0_i32_0 = arith.constant 0 : i32
    %c0_i32_1 = arith.constant 0 : i32
    return %c0_i32, %c0_i32_0 : i32, i32
  }
  func.func @transform_6(%arg0: i32) -> (i32, i32, i32) {
    %c0_i32 = arith.constant 0 : i32
    %c0_i32_0 = arith.constant 0 : i32
    %c0_i32_1 = arith.constant 0 : i32
    return %arg0, %c0_i32, %c0_i32_0 : i32, i32, i32
  }
}

module attributes {stable_mosaic.version = 11 : i64} {
  func.func @_fuse_kernel(%arg0: i32, %arg1: i32, %arg2: memref<1x16x256xf32, #tpu.memory_space<vmem>>, %arg3: memref<1x16x256xf32, #tpu.memory_space<vmem>>, %arg4: memref<1x16x256xf32, #tpu.memory_space<vmem>>, %arg5: memref<16x16xbf16, #tpu.memory_space<vmem>>, %arg6: memref<16x1xf32, #tpu.memory_space<vmem>>, %arg7: memref<16x32xbf16, #tpu.memory_space<vmem>>, %arg8: memref<16x1xf32, #tpu.memory_space<vmem>>, %arg9: memref<1x16x256xf32, #tpu.memory_space<vmem>>) attributes {dimension_semantics = [#tpu.dimension_semantics<parallel>, #tpu.dimension_semantics<parallel>], iteration_bounds = array<i64: 2, 1>, scalar_prefetch = 0 : i64, scratch_operands = 0 : i64, tpu.core_type = #tpu.core_type<tc>, window_params = [{transform_indices = @transform_0, window_bounds = array<i64: 1, 16, 256>}, {transform_indices = @transform_1, window_bounds = array<i64: 1, 16, 256>}, {transform_indices = @transform_2, window_bounds = array<i64: 1, 16, 256>}, {pipeline_mode = #tpu.pipeline_mode<synchronous>, transform_indices = @transform_3, window_bounds = array<i64: 16, 16>}, {pipeline_mode = #tpu.pipeline_mode<synchronous>, transform_indices = @transform_4, window_bounds = array<i64: 16, 1>}, {pipeline_mode = #tpu.pipeline_mode<synchronous>, transform_indices = @transform_5, window_bounds = array<i64: 16, 32>}, {pipeline_mode = #tpu.pipeline_mode<synchronous>, transform_indices = @transform_6, window_bounds = array<i64: 16, 1>}, {transform_indices = @transform_7, window_bounds = array<i64: 1, 16, 256>}]} {
    %c0 = arith.constant 0 : index
    %c0_0 = arith.constant 0 : index
    %c0_1 = arith.constant 0 : index
    %0 = vector.load %arg4[%c0, %c0_0, %c0_1] : memref<1x16x256xf32, #tpu.memory_space<vmem>>, vector<1x16x256xf32>
    %1 = vector.shape_cast %0 : vector<1x16x256xf32> to vector<16x256xf32>
    %2 = arith.truncf %1 : vector<16x256xf32> to vector<16x256xbf16>
    %c0_2 = arith.constant 0 : index
    %c0_3 = arith.constant 0 : index
    %c0_4 = arith.constant 0 : index
    %3 = vector.load %arg3[%c0_2, %c0_3, %c0_4] : memref<1x16x256xf32, #tpu.memory_space<vmem>>, vector<1x16x256xf32>
    %4 = vector.shape_cast %3 : vector<1x16x256xf32> to vector<16x256xf32>
    %c0_5 = arith.constant 0 : index
    %c0_6 = arith.constant 0 : index
    %5 = vector.load %arg5[%c0_5, %c0_6] : memref<16x16xbf16, #tpu.memory_space<vmem>>, vector<16x16xbf16>
    %cst = arith.constant dense<0.000000e+00> : vector<16x256xf32>
    %6 = tpu.matmul %5, %2, %cst {dimension_numbers = #tpu.dot_dimension_numbers<[1], [0], [0], [1], [0, 0, 1, 1], [], []>} : vector<16x16xbf16>, vector<16x256xbf16>, vector<16x256xf32> -> vector<16x256xf32>
    %7 = arith.addf %4, %6 : vector<16x256xf32>
    %c0_7 = arith.constant 0 : index
    %c0_8 = arith.constant 0 : index
    %8 = vector.load %arg6[%c0_7, %c0_8] : memref<16x1xf32, #tpu.memory_space<vmem>>, vector<16x1xf32>
    %9 = vector.broadcast %8 : vector<16x1xf32> to vector<16x256xf32>
    %10 = arith.addf %7, %9 : vector<16x256xf32>
    %c0_9 = arith.constant 0 : index
    %c0_10 = arith.constant 0 : index
    %c0_11 = arith.constant 0 : index
    %11 = vector.load %arg2[%c0_9, %c0_10, %c0_11] : memref<1x16x256xf32, #tpu.memory_space<vmem>>, vector<1x16x256xf32>
    %12 = vector.shape_cast %11 : vector<1x16x256xf32> to vector<16x256xf32>
    %13 = tpu.concatenate %12, %10 in 0 : vector<16x256xf32>, vector<16x256xf32> -> vector<32x256xf32>
    %14 = arith.truncf %13 : vector<32x256xf32> to vector<32x256xbf16>
    %c0_12 = arith.constant 0 : index
    %c0_13 = arith.constant 0 : index
    %15 = vector.load %arg7[%c0_12, %c0_13] : memref<16x32xbf16, #tpu.memory_space<vmem>>, vector<16x32xbf16>
    %cst_14 = arith.constant dense<0.000000e+00> : vector<16x256xf32>
    %16 = tpu.matmul %15, %14, %cst_14 {dimension_numbers = #tpu.dot_dimension_numbers<[1], [0], [0], [1], [0, 0, 1, 1], [], []>} : vector<16x32xbf16>, vector<32x256xbf16>, vector<16x256xf32> -> vector<16x256xf32>
    %c0_15 = arith.constant 0 : index
    %c0_16 = arith.constant 0 : index
    %17 = vector.load %arg8[%c0_15, %c0_16] : memref<16x1xf32, #tpu.memory_space<vmem>>, vector<16x1xf32>
    %18 = vector.broadcast %17 : vector<16x1xf32> to vector<16x256xf32>
    %19 = arith.addf %16, %18 : vector<16x256xf32>
    %c0_17 = arith.constant 0 : index
    %c0_18 = arith.constant 0 : index
    %c0_19 = arith.constant 0 : index
    %20 = vector.load %arg9[%c0_17, %c0_18, %c0_19] : memref<1x16x256xf32, #tpu.memory_space<vmem>>, vector<1x16x256xf32>
    %21 = vector.shape_cast %20 : vector<1x16x256xf32> to vector<16x256xf32>
    %22 = vector.shape_cast %19 : vector<16x256xf32> to vector<1x16x256xf32>
    tpu.vector_store %arg9[%c0_17, %c0_18, %c0_19], %22 {strides = array<i32>} : memref<1x16x256xf32, #tpu.memory_space<vmem>>, vector<1x16x256xf32>,
    return
  }
  func.func @transform_0(%arg0: i32, %arg1: i32) -> (i32, i32, i32) {
    %c0_i32 = arith.constant 0 : i32
    %c0_i32_0 = arith.constant 0 : i32
    return %arg0, %c0_i32, %arg1 : i32, i32, i32
  }
  func.func @transform_1(%arg0: i32, %arg1: i32) -> (i32, i32, i32) {
    %c0_i32 = arith.constant 0 : i32
    %c0_i32_0 = arith.constant 0 : i32
    return %arg0, %c0_i32, %arg1 : i32, i32, i32
  }
  func.func @transform_2(%arg0: i32, %arg1: i32) -> (i32, i32, i32) {
    %c0_i32 = arith.constant 0 : i32
    %c0_i32_0 = arith.constant 0 : i32
    return %arg0, %c0_i32, %arg1 : i32, i32, i32
  }
  func.func @transform_3(%arg0: i32, %arg1: i32) -> (i32, i32) {
    %c0_i32 = arith.constant 0 : i32
    %c0_i32_0 = arith.constant 0 : i32
    %c0_i32_1 = arith.constant 0 : i32
    return %c0_i32, %c0_i32_0 : i32, i32
  }
  func.func @transform_4(%arg0: i32, %arg1: i32) -> (i32, i32) {
    %c0_i32 = arith.constant 0 : i32
    %c0_i32_0 = arith.constant 0 : i32
    %c0_i32_1 = arith.constant 0 : i32
    return %c0_i32, %c0_i32_0 : i32, i32
  }
  func.func @transform_5(%arg0: i32, %arg1: i32) -> (i32, i32) {
    %c0_i32 = arith.constant 0 : i32
    %c0_i32_0 = arith.constant 0 : i32
    %c0_i32_1 = arith.constant 0 : i32
    return %c0_i32, %c0_i32_0 : i32, i32
  }
  func.func @transform_6(%arg0: i32, %arg1: i32) -> (i32, i32) {
    %c0_i32 = arith.constant 0 : i32
    %c0_i32_0 = arith.constant 0 : i32
    %c0_i32_1 = arith.constant 0 : i32
    return %c0_i32, %c0_i32_0 : i32, i32
  }
  func.func @transform_7(%arg0: i32, %arg1: i32) -> (i32, i32, i32) {
    %c0_i32 = arith.constant 0 : i32
    %c0_i32_0 = arith.constant 0 : i32
    return %arg0, %c0_i32, %arg1 : i32, i32, i32
  }
}

module attributes {stable_mosaic.version = 11 : i64} {
  func.func @kernel(%arg0: i32, %arg1: memref<1x16x256xf32, #tpu.memory_space<vmem>>, %arg2: memref<16x16xf32, #tpu.memory_space<vmem>>, %arg3: memref<1x16x256xf32, #tpu.memory_space<vmem>>) attributes {dimension_semantics = [#tpu.dimension_semantics<parallel>], iteration_bounds = array<i64: 2>, scalar_prefetch = 0 : i64, scratch_operands = 0 : i64, tpu.core_type = #tpu.core_type<tc>, window_params = [{transform_indices = @transform_0, window_bounds = array<i64: 1, 16, 256>}, {pipeline_mode = #tpu.pipeline_mode<synchronous>, transform_indices = @transform_1, window_bounds = array<i64: 16, 16>}, {transform_indices = @transform_2, window_bounds = array<i64: 1, 16, 256>}]} {
    %c0 = arith.constant 0 : index
    %c0_0 = arith.constant 0 : index
    %c0_1 = arith.constant 0 : index
    %0 = vector.load %arg1[%c0, %c0_0, %c0_1] : memref<1x16x256xf32, #tpu.memory_space<vmem>>, vector<1x16x256xf32>
    %1 = vector.shape_cast %0 : vector<1x16x256xf32> to vector<16x256xf32>
    %cst = arith.constant dense<0.000000e+00> : vector<16xf32>
    %2 = vector.multi_reduction <add>, %1, %cst [1] : vector<16x256xf32> to vector<16xf32>
    %3 = vector.shape_cast %2 : vector<16xf32> to vector<16x1xf32>
    %cst_2 = arith.constant 0.000000e+00 : f32
    %4 = vector.broadcast %cst_2 : f32 to vector<16x1xf32>
    %5 = arith.cmpf olt, %3, %4 : vector<16x1xf32>
    %cst_3 = arith.constant -3.906250e-03 : f32
    %cst_4 = arith.constant 3.906250e-03 : f32
    %6 = vector.broadcast %cst_3 : f32 to vector<16x1xf32>
    %7 = vector.broadcast %cst_4 : f32 to vector<16x1xf32>
    %8 = arith.select %5, %6, %7 : vector<16x1xi1>, vector<16x1xf32>
    %c0_5 = arith.constant 0 : index
    %c0_6 = arith.constant 0 : index
    %9 = vector.load %arg2[%c0_5, %c0_6] : memref<16x16xf32, #tpu.memory_space<vmem>>, vector<16x16xf32>
    %cst_7 = arith.constant dense<0.000000e+00> : vector<16x1xf32>
    %10 = tpu.matmul %9, %8, %cst_7 {dimension_numbers = #tpu.dot_dimension_numbers<[1], [0], [0], [1], [0, 0, 1, 1], [], []>} : vector<16x16xf32>, vector<16x1xf32>, vector<16x1xf32> -> vector<16x1xf32>
    %11 = arith.negf %10 : vector<16x1xf32>
    %12 = math.exp %11 : vector<16x1xf32>
    %cst_8 = arith.constant 1.000000e+00 : f32
    %13 = vector.broadcast %cst_8 : f32 to vector<16x1xf32>
    %14 = arith.addf %13, %12 : vector<16x1xf32>
    %15 = arith.divf %13, %14 : vector<16x1xf32>
    %c0_9 = arith.constant 0 : index
    %c0_10 = arith.constant 0 : index
    %c0_11 = arith.constant 0 : index
    %16 = vector.load %arg1[%c0_9, %c0_10, %c0_11] : memref<1x16x256xf32, #tpu.memory_space<vmem>>, vector<1x16x256xf32>
    %17 = vector.shape_cast %16 : vector<1x16x256xf32> to vector<16x256xf32>
    %18 = vector.broadcast %15 : vector<16x1xf32> to vector<16x256xf32>
    %19 = arith.mulf %17, %18 : vector<16x256xf32>
    %c0_12 = arith.constant 0 : index
    %c0_13 = arith.constant 0 : index
    %c0_14 = arith.constant 0 : index
    %20 = vector.load %arg3[%c0_12, %c0_13, %c0_14] : memref<1x16x256xf32, #tpu.memory_space<vmem>>, vector<1x16x256xf32>
    %21 = vector.shape_cast %20 : vector<1x16x256xf32> to vector<16x256xf32>
    %22 = vector.shape_cast %19 : vector<16x256xf32> to vector<1x16x256xf32>
    tpu.vector_store %arg3[%c0_12, %c0_13, %c0_14], %22 {strides = array<i32>} : memref<1x16x256xf32, #tpu.memory_space<vmem>>, vector<1x16x256xf32>,
    return
  }
  func.func @transform_0(%arg0: i32) -> (i32, i32, i32) {
    %c0_i32 = arith.constant 0 : i32
    %c0_i32_0 = arith.constant 0 : i32
    %c0_i32_1 = arith.constant 0 : i32
    return %arg0, %c0_i32, %c0_i32_0 : i32, i32, i32
  }
  func.func @transform_1(%arg0: i32) -> (i32, i32) {
    %c0_i32 = arith.constant 0 : i32
    %c0_i32_0 = arith.constant 0 : i32
    %c0_i32_1 = arith.constant 0 : i32
    return %c0_i32, %c0_i32_0 : i32, i32
  }
  func.func @transform_2(%arg0: i32) -> (i32, i32, i32) {
    %c0_i32 = arith.constant 0 : i32
    %c0_i32_0 = arith.constant 0 : i32
    %c0_i32_1 = arith.constant 0 : i32
    return %arg0, %c0_i32, %c0_i32_0 : i32, i32, i32
  }
}

module attributes {stable_mosaic.version = 11 : i64} {
  func.func @kernel(%arg0: i32, %arg1: memref<64x128xf32, #tpu.memory_space<vmem>>, %arg2: memref<128x128xf32, #tpu.memory_space<vmem>>, %arg3: memref<1x128xf32, #tpu.memory_space<vmem>>, %arg4: memref<1x128xf32, #tpu.memory_space<vmem>>, %arg5: memref<64x128xf32, #tpu.memory_space<vmem>>) attributes {dimension_semantics = [#tpu.dimension_semantics<parallel>], iteration_bounds = array<i64: 1>, scalar_prefetch = 0 : i64, scratch_operands = 0 : i64, tpu.core_type = #tpu.core_type<tc>, window_params = [{transform_indices = @transform_0, window_bounds = array<i64: 64, 128>}, {pipeline_mode = #tpu.pipeline_mode<synchronous>, transform_indices = @transform_1, window_bounds = array<i64: 128, 128>}, {pipeline_mode = #tpu.pipeline_mode<synchronous>, transform_indices = @transform_2, window_bounds = array<i64: 1, 128>}, {pipeline_mode = #tpu.pipeline_mode<synchronous>, transform_indices = @transform_3, window_bounds = array<i64: 1, 128>}, {transform_indices = @transform_4, window_bounds = array<i64: 64, 128>}]} {
    %c0 = arith.constant 0 : index
    %c0_0 = arith.constant 0 : index
    %0 = vector.load %arg1[%c0, %c0_0] : memref<64x128xf32, #tpu.memory_space<vmem>>, vector<64x128xf32>
    %c0_1 = arith.constant 0 : index
    %c0_2 = arith.constant 0 : index
    %1 = vector.load %arg2[%c0_1, %c0_2] : memref<128x128xf32, #tpu.memory_space<vmem>>, vector<128x128xf32>
    %cst = arith.constant dense<0.000000e+00> : vector<64x128xf32>
    %2 = tpu.matmul %0, %1, %cst {dimension_numbers = #tpu.dot_dimension_numbers<[1], [0], [0], [1], [0, 0, 1, 1], [], []>, precision = #tpu.contract_precision<fp32>} : vector<64x128xf32>, vector<128x128xf32>, vector<64x128xf32> -> vector<64x128xf32>
    %cst_3 = arith.constant 6.250000e-02 : f32
    %3 = vector.broadcast %cst_3 : f32 to vector<64x128xf32>
    %4 = arith.mulf %2, %3 : vector<64x128xf32>
    %5 = arith.subf %0, %4 : vector<64x128xf32>
    %6 = arith.mulf %5, %5 : vector<64x128xf32>
    %cst_4 = arith.constant dense<0.000000e+00> : vector<64x128xf32>
    %7 = tpu.matmul %6, %1, %cst_4 {dimension_numbers = #tpu.dot_dimension_numbers<[1], [0], [0], [1], [0, 0, 1, 1], [], []>, precision = #tpu.contract_precision<fp32>} : vector<64x128xf32>, vector<128x128xf32>, vector<64x128xf32> -> vector<64x128xf32>
    %cst_5 = arith.constant 6.250000e-02 : f32
    %8 = vector.broadcast %cst_5 : f32 to vector<64x128xf32>
    %9 = arith.mulf %7, %8 : vector<64x128xf32>
    %cst_6 = arith.constant 9.99999974E-6 : f32
    %10 = vector.broadcast %cst_6 : f32 to vector<64x128xf32>
    %11 = arith.addf %9, %10 : vector<64x128xf32>
    %12 = math.rsqrt %11 : vector<64x128xf32>
    %13 = arith.mulf %5, %12 : vector<64x128xf32>
    %c0_7 = arith.constant 0 : index
    %c0_8 = arith.constant 0 : index
    %14 = vector.load %arg3[%c0_7, %c0_8] : memref<1x128xf32, #tpu.memory_space<vmem>>, vector<1x128xf32>
    %15 = vector.broadcast %14 : vector<1x128xf32> to vector<64x128xf32>
    %16 = arith.mulf %13, %15 : vector<64x128xf32>
    %c0_9 = arith.constant 0 : index
    %c0_10 = arith.constant 0 : index
    %17 = vector.load %arg4[%c0_9, %c0_10] : memref<1x128xf32, #tpu.memory_space<vmem>>, vector<1x128xf32>
    %18 = vector.broadcast %17 : vector<1x128xf32> to vector<64x128xf32>
    %19 = arith.addf %16, %18 : vector<64x128xf32>
    %c0_11 = arith.constant 0 : index
    %c0_12 = arith.constant 0 : index
    %20 = vector.load %arg5[%c0_11, %c0_12] : memref<64x128xf32, #tpu.memory_space<vmem>>, vector<64x128xf32>
    tpu.vector_store %arg5[%c0_11, %c0_12], %19 {strides = array<i32>} : memref<64x128xf32, #tpu.memory_space<vmem>>, vector<64x128xf32>,
    return
  }
  func.func @transform_0(%arg0: i32) -> (i32, i32) {
    %c0_i32 = arith.constant 0 : i32
    %c0_i32_0 = arith.constant 0 : i32
    return %arg0, %c0_i32 : i32, i32
  }
  func.func @transform_1(%arg0: i32) -> (i32, i32) {
    %c0_i32 = arith.constant 0 : i32
    %c0_i32_0 = arith.constant 0 : i32
    %c0_i32_1 = arith.constant 0 : i32
    return %c0_i32, %c0_i32_0 : i32, i32
  }
  func.func @transform_2(%arg0: i32) -> (i32, i32) {
    %c0_i32 = arith.constant 0 : i32
    %c0_i32_0 = arith.constant 0 : i32
    %c0_i32_1 = arith.constant 0 : i32
    return %c0_i32, %c0_i32_0 : i32, i32
  }
  func.func @transform_3(%arg0: i32) -> (i32, i32) {
    %c0_i32 = arith.constant 0 : i32
    %c0_i32_0 = arith.constant 0 : i32
    %c0_i32_1 = arith.constant 0 : i32
    return %c0_i32, %c0_i32_0 : i32, i32
  }
  func.func @transform_4(%arg0: i32) -> (i32, i32) {
    %c0_i32 = arith.constant 0 : i32
    %c0_i32_0 = arith.constant 0 : i32
    return %arg0, %c0_i32 : i32, i32
  }
}

</mosaic_0001>

<llo_original>
// kernel: sfca_forward.6
$region0: #{sfca_forward.6}
  #allocation0 [shape = 'u32[]', space=smem, size = 0x4, offset = 0x4, fixed_abs, tag = 'smem constant byte address 0x4 - core index']
  #allocation1 [shape = 'u32[144,128]{1,0:T(1,128)}', space=vmem, size = 0x12000, scoped, tag = 'internal scratch']
  %s0 = inlined_call_operand.vmem [shape: f32[2,16,256], index: 0, kind: input, shape index: {}]
  %s1 = inlined_call_operand.vmem [shape: bf16[32,16], index: 1, kind: input, shape index: {}]
  %s2 = inlined_call_operand.vmem [shape: f32[32,1], index: 2, kind: input, shape index: {}]
  %s3 = inlined_call_operand.vmem [shape: bf16[16,32], index: 3, kind: input, shape index: {}]
  %s4 = inlined_call_operand.vmem [shape: f32[16,1], index: 4, kind: input, shape index: {}]
  %s5 = inlined_call_operand.vmem [shape: f32[2,16,256], index: 5, kind: output, shape index: {}]
  %s6 = sld [smem:[#allocation0]]
  $region53: #{sfca_forward.6} parent=0
    _
  %s8 = ssub.s32 1, %s6
  %s9 = scalar_select 0, %s8, %s6
  loop: start=0, step=1, limit=4
  $region2: #{sfca_forward.6} parent=0 // loop_pre_header
    _
  $region3: #{sfca_forward.6} parent=0 // loop_header
    %s11 = sphi 0, %s15
    %p12 = scmp.ge.s32.totalorder %s11, 4
    %s18 = sphi 0, %s30
    %s19 = sphi 0, %s26
    %s20 = sphi 0, %s18
    %s21 = sphi 0, %s19
    %s22 = sphi 0, %s20
    %s23 = sphi 0, %s21
    %s35 = sphi 0, %s37
    %s38 = sphi 0, %s35
    %s39 = sphi 0, %s38
    %s55 = sphi 0, %s39
    %s59 = sphi 0, %s59
    %s61 = sphi 0, %s59
    %s62 = sphi 0, %s61
    %s76 = sphi 0, %s62
    %s80 = sphi 0, %s80
    %s82 = sphi 0, %s80
    %s83 = sphi 0, %s82
    %s97 = sphi 0, %s83
    %s101 = sphi 0, %s101
    %s103 = sphi 0, %s101
    %s104 = sphi 0, %s103
    %s118 = sphi 0, %s104
    %s122 = sphi 0, %s122
    %s124 = sphi 0, %s122
    %s125 = sphi 0, %s124
    %s139 = sphi 0, %s125
    %s147 = sphi 0, %s149
    %s150 = sphi 0, %s147
    %s151 = sphi 0, %s150
    %s167 = sphi 0, %s151
  $region4: #{sfca_forward.6} parent=0 // loop_header_branch
    %14 = sbr.rel (%p12) target = $region8
  $region5: #{sfca_forward.6} parent=0 // loop_body
    %s16 = ssub.s32 %s11, 1
    %s17 = ssub.s32 %s11, 2
    %s24 = sadd.s32 1, %s19
    %p25 = scmp.ge.s32.totalorder %s24, 1
    %s26 = scalar_select %p25, 0, %s24
    %s27 = sadd.s32 1, %s18
    %s28 = scalar_select %p25, %s27, %s18
    %p29 = scmp.ge.s32.totalorder %s28, 2
    %s30 = scalar_select %p29, 0, %s28
    %s31 = ssub.s32 %s18, %s30
    %s32 = ssub.s32 %s19, %s26
    %s33 = sor.u32 %s31, %s32
    %p34 = scmp.eq.s32.totalorder %s33, 0
    %s36 = sadd.s32 %s35, 1
    %s37 = scalar_select %p34, %s35, %s36
    %p40 = pneg %p34
    %p41 = scmp.eq.s32.totalorder %s11, 1
    %p42 = por %p40, %p41
    %p43 = scmp.ne.s32.totalorder %s35, %s38
    %p44 = scmp.eq.s32.totalorder %s11, 0
    %p45 = por %p43, %p44
    %p46 = scmp.ne.s32.totalorder %s35, %s38
    %p47 = scmp.eq.s32.totalorder %s16, 1
    %p48 = por %p46, %p47
    %p49 = scmp.ne.s32.totalorder %s38, %s39
    %p50 = scmp.eq.s32.totalorder %s16, 0
    %p51 = por %p49, %p50
    %p52 = scmp.ne.s32.totalorder %s38, %s39
    %p53 = scmp.eq.s32.totalorder %s17, 1
    %p54 = por %p52, %p53
    %p56 = scmp.ne.s32.totalorder %s39, %s55
    %p57 = scmp.eq.s32.totalorder %s17, 0
    %p58 = por %p56, %p57
    %s60 = sadd.s32 %s59, 1
    %p63 = scmp.eq.s32.totalorder %s11, 1
    %p64 = scmp.ne.s32.totalorder %s59, %s61
    %p65 = scmp.eq.s32.totalorder %s11, 0
    %p66 = por %p64, %p65
    %p67 = scmp.ne.s32.totalorder %s59, %s61
    %p68 = scmp.eq.s32.totalorder %s16, 1
    %p69 = por %p67, %p68
    %p70 = scmp.ne.s32.totalorder %s61, %s62
    %p71 = scmp.eq.s32.totalorder %s16, 0
    %p72 = por %p70, %p71
    %p73 = scmp.ne.s32.totalorder %s61, %s62
    %p74 = scmp.eq.s32.totalorder %s17, 1
    %p75 = por %p73, %p74
    %p77 = scmp.ne.s32.totalorder %s62, %s76
    %p78 = scmp.eq.s32.totalorder %s17, 0
    %p79 = por %p77, %p78
    %s81 = sadd.s32 %s80, 1
    %p84 = scmp.eq.s32.totalorder %s11, 1
    %p85 = scmp.ne.s32.totalorder %s80, %s82
    %p86 = scmp.eq.s32.totalorder %s11, 0
    %p87 = por %p85, %p86
    %p88 = scmp.ne.s32.totalorder %s80, %s82
    %p89 = scmp.eq.s32.totalorder %s16, 1
    %p90 = por %p88, %p89
    %p91 = scmp.ne.s32.totalorder %s82, %s83
    %p92 = scmp.eq.s32.totalorder %s16, 0
    %p93 = por %p91, %p92
    %p94 = scmp.ne.s32.totalorder %s82, %s83
    %p95 = scmp.eq.s32.totalorder %s17, 1
    %p96 = por %p94, %p95
    %p98 = scmp.ne.s32.totalorder %s83, %s97
    %p99 = scmp.eq.s32.totalorder %s17, 0
    %p100 = por %p98, %p99
    %s102 = sadd.s32 %s101, 1
    %p105 = scmp.eq.s32.totalorder %s11, 1
    %p106 = scmp.ne.s32.totalorder %s101, %s103
    %p107 = scmp.eq.s32.totalorder %s11, 0
    %p108 = por %p106, %p107
    %p109 = scmp.ne.s32.totalorder %s101, %s103
    %p110 = scmp.eq.s32.totalorder %s16, 1
    %p111 = por %p109, %p110
    %p112 = scmp.ne.s32.totalorder %s103, %s104
    %p113 = scmp.eq.s32.totalorder %s16, 0
    %p114 = por %p112, %p113
    %p115 = scmp.ne.s32.totalorder %s103, %s104
    %p116 = scmp.eq.s32.totalorder %s17, 1
    %p117 = por %p115, %p116
    %p119 = scmp.ne.s32.totalorder %s104, %s118
    %p120 = scmp.eq.s32.totalorder %s17, 0
    %p121 = por %p119, %p120
    %s123 = sadd.s32 %s122, 1
    %p126 = scmp.eq.s32.totalorder %s11, 1
    %p127 = scmp.ne.s32.totalorder %s122, %s124
    %p128 = scmp.eq.s32.totalorder %s11, 0
    %p129 = por %p127, %p128
    %p130 = scmp.ne.s32.totalorder %s122, %s124
    %p131 = scmp.eq.s32.totalorder %s16, 1
    %p132 = por %p130, %p131
    %p133 = scmp.ne.s32.totalorder %s124, %s125
    %p134 = scmp.eq.s32.totalorder %s16, 0
    %p135 = por %p133, %p134
    %p136 = scmp.ne.s32.totalorder %s124, %s125
    %p137 = scmp.eq.s32.totalorder %s17, 1
    %p138 = por %p136, %p137
    %p140 = scmp.ne.s32.totalorder %s125, %s139
    %p141 = scmp.eq.s32.totalorder %s17, 0
    %p142 = por %p140, %p141
    %s143 = ssub.s32 %s18, %s30
    %s144 = ssub.s32 %s19, %s26
    %s145 = sor.u32 %s143, %s144
    %p146 = scmp.eq.s32.totalorder %s145, 0
    %s148 = sadd.s32 %s147, 1
    %s149 = scalar_select %p146, %s147, %s148
    %p152 = pneg %p146
    %p153 = scmp.eq.s32.totalorder %s11, 1
    %p154 = por %p152, %p153
    %p155 = scmp.ne.s32.totalorder %s147, %s150
    %p156 = scmp.eq.s32.totalorder %s11, 0
    %p157 = por %p155, %p156
    %p158 = scmp.ne.s32.totalorder %s147, %s150
    %p159 = scmp.eq.s32.totalorder %s16, 1
    %p160 = por %p158, %p159
    %p161 = scmp.ne.s32.totalorder %s150, %s151
    %p162 = scmp.eq.s32.totalorder %s16, 0
    %p163 = por %p161, %p162
    %p164 = scmp.ne.s32.totalorder %s150, %s151
    %p165 = scmp.eq.s32.totalorder %s17, 1
    %p166 = por %p164, %p165
    %p168 = scmp.ne.s32.totalorder %s151, %s167
    %p169 = scmp.eq.s32.totalorder %s17, 0
    %p170 = por %p168, %p169
    %p171 = scmp.le.s32.totalorder 1, %s11
    %p172 = scmp.lt.s32.totalorder %s11, 3
    %p173 = pnand %p171, %p172
    %p174 = pneg %p173
    // Predicated region
    $region9: #{sfca_forward.6} parent=5 // pred_check
      _
    $region10: #{sfca_forward.6} parent=5 // pred_check_branch
      %176 = sbr.rel (%p173) target = $region12
    $region11: #{sfca_forward.6} parent=5 // pred_region
      %s177 = ssub.s32 %s11, 1
      // Predicated region
      $region13: #{sfca_forward.6} parent=11 // pred_check
        %p178 = pneg %p72
      $region14: #{sfca_forward.6} parent=11 // pred_check_branch
        %180 = sbr.rel (%p178) target = $region16
      $region15: #{sfca_forward.6} parent=11 // pred_region
        _
      $region16: #{sfca_forward.6} parent=11 // pred_fallthru
        _
      // Predicated region
      $region17: #{sfca_forward.6} parent=11 // pred_check
        %p181 = pneg %p93
      $region18: #{sfca_forward.6} parent=11 // pred_check_branch
        %183 = sbr.rel (%p181) target = $region20
      $region19: #{sfca_forward.6} parent=11 // pred_region
        _
      $region20: #{sfca_forward.6} parent=11 // pred_fallthru
        _
      // Predicated region
      $region21: #{sfca_forward.6} parent=11 // pred_check
        %p184 = pneg %p114
      $region22: #{sfca_forward.6} parent=11 // pred_check_branch
        %186 = sbr.rel (%p184) target = $region24
      $region23: #{sfca_forward.6} parent=11 // pred_region
        _
      $region24: #{sfca_forward.6} parent=11 // pred_fallthru
        _
      // Predicated region
      $region25: #{sfca_forward.6} parent=11 // pred_check
        %p187 = pneg %p135
      $region26: #{sfca_forward.6} parent=11 // pred_check_branch
        %189 = sbr.rel (%p187) target = $region28
      $region27: #{sfca_forward.6} parent=11 // pred_region
        _
      $region28: #{sfca_forward.6} parent=11 // pred_fallthru
        _
    $region12: #{sfca_forward.6} parent=5 // pred_fallthru
      _
    %p190 = scmp.lt.s32.totalorder %s11, 2
    // Predicated region
    $region29: #{sfca_forward.6} parent=5 // pred_check
      %p191 = pneg %p190
    $region30: #{sfca_forward.6} parent=5 // pred_check_branch
      %193 = sbr.rel (%p191) target = $region32
    $region31: #{sfca_forward.6} parent=5 // pred_region
      // Predicated region
      $region33: #{sfca_forward.6} parent=31 // pred_check
        %p194 = pneg %p45
      $region34: #{sfca_forward.6} parent=31 // pred_check_branch
        %196 = sbr.rel (%p194) target = $region36
      $region35: #{sfca_forward.6} parent=31 // pred_region
        %s197 = smul.u32 2, %s19
        %p198 = scmp.lt.s32.totalorder %s18, 1
        %s199 = scalar_select %p198, %s18, 1
        %p200 = scmp.lt.s32.totalorder %s197, 1
        %s201 = scalar_select %p200, %s197, 1
        %s202 = smul.addr %s199, 4
        %s203 = sadd.s32 %s201, %s202
        %s204 = smul.addr %s203, 8
        %s205 = scalar_lea.vmem %s0, %s204
        %s206 = smul.u32 2, %s19
      $region36: #{sfca_forward.6} parent=31 // pred_fallthru
        _
    $region32: #{sfca_forward.6} parent=5 // pred_fallthru
      _
    %p207 = scmp.le.s32.totalorder 1, %s11
    %p208 = scmp.lt.s32.totalorder %s11, 3
    %p209 = pnand %p207, %p208
    %p210 = pneg %p209
    // Predicated region
    $region37: #{sfca_forward.6} parent=5 // pred_check
      _
    $region38: #{sfca_forward.6} parent=5 // pred_check_branch
      %212 = sbr.rel (%p209) target = $region40
    $region39: #{sfca_forward.6} parent=5 // pred_region
      %s213 = ssub.s32 %s11, 1
      %s214 = smul.u32 2, %s21
      %p215 = scmp.lt.s32.totalorder %s20, 1
      %s216 = scalar_select %p215, %s20, 1
      %p217 = scmp.lt.s32.totalorder %s214, 1
      %s218 = scalar_select %p217, %s214, 1
      %s219 = smul.addr %s216, 4
      %s220 = sadd.s32 %s218, %s219
      %s221 = smul.addr %s220, 8
      %s222 = scalar_lea.vmem %s0, %s221
      %p223 = pneg %p51
      %p224 = pneg %p48
      %p225 = pneg %p72
      %p226 = pneg %p69
      %p227 = pneg %p93
      %p228 = pneg %p90
      %p229 = pneg %p114
      %p230 = pneg %p111
      %p231 = pneg %p135
      %p232 = pneg %p132
      %p233 = pneg %p163
      %p234 = pneg %p160
      %s235 = smul.u32 2, %s21
      %p236 = scmp.lt.s32.totalorder %s20, 1
      %s237 = scalar_select %p236, %s20, 1
      %p238 = scmp.lt.s32.totalorder %s235, 1
      %s239 = scalar_select %p238, %s235, 1
      %s240 = smul.addr %s237, 4
      %s241 = sadd.s32 %s239, %s240
      %s242 = smul.addr %s241, 8
      %s243 = scalar_lea.vmem %s5, %s242
      %s244 = smul.u32 2, %s21
      %p245 = scmp.lt.s32.totalorder %s20, 1
      %s246 = scalar_select %p245, %s20, 1
      %p247 = scmp.lt.s32.totalorder %s244, 1
      %s248 = scalar_select %p247, %s244, 1
      %s249 = smul.addr %s246, 4
      %s250 = sadd.s32 %s248, %s249
      %s251 = smul.addr %s250, 8
      %s252 = scalar_lea.vmem %s0, %s251
      %s253 = smul.u32 2, %s21
      %s254 = smul.u32 2, %s21
      %p255 = scmp.lt.s32.totalorder %s20, 1
      %s256 = scalar_select %p255, %s20, 1
      %p257 = scmp.lt.s32.totalorder %s254, 1
      %s258 = scalar_select %p257, %s254, 1
      %s259 = smul.addr %s256, 4
      %s260 = sadd.s32 %s258, %s259
      %s261 = smul.addr %s260, 8
      %s262 = scalar_lea.vmem %s5, %s261
      %s263 = smul.u32 2, %s21
      %v265 = vld [vmem:[%s252] sm:$0xff]
      %v266 = vld [vmem:[%s252 + $0x8] sm:$0xff]
      %v267 = vld [vmem:[%s252 + $0x10] sm:$0xff]
      %v268 = vld [vmem:[%s252 + $0x18] sm:$0xff]
      %v269 = vpack.c.bf16 %v267, %v265
      %v270 = vpack.c.bf16 %v268, %v266
      %v271 = vld [vmem:[%s1] sm:$0xf]
      %v272 = vld [vmem:[%s1 + $0x4] sm:$0xf]
      %v273 = vld [vmem:[%s1 + $0x8] sm:$0xf]
      %v274 = vld [vmem:[%s1 + $0xc] sm:$0xf]
      %v275 = vld [vmem:[%s2] sm:$0xff]
      %v276 = vld [vmem:[%s2 + $0x8] sm:$0xff]
      %v277 = vld [vmem:[%s2 + $0x10] sm:$0xff]
      %v278 = vld [vmem:[%s2 + $0x18] sm:$0xff]
      %280 = vset.pattern.permute.xlu0 0
      %281 = vperm.xlu0 %280, %v275
      %v282 = vpop.permute.xlu0 %281
      %285 = vset.pattern.permute.xlu0 0
      %286 = vperm.xlu0 %285, %v276
      %v287 = vpop.permute.xlu0 %286
      %290 = vset.pattern.permute.xlu0 0
      %291 = vperm.xlu0 %290, %v277
      %v292 = vpop.permute.xlu0 %291
      %295 = vset.pattern.permute.xlu0 0
      %296 = vperm.xlu0 %295, %v278
      %v297 = vpop.permute.xlu0 %296
      %v303 = vunpack.c.l.b16 %v271
      %v304 = vunpack.c.l.b16 %v272
      %v305 = vunpack.c.l.b16 %v273
      %v306 = vunpack.c.l.b16 %v274
      %v307 = vpack.c.b16 %v304, %v303
      %v308 = vpack.c.b16 %v306, %v305
      %vm309 = vcmask 130048
      %v311 = vsel %vm309, %v307, 0
      %v314 = vsel %vm309, %v308, 0
      %316 = vmatprep.subr.bf16.mxu0 %v270
      %317 = vmatpush1.bf16.msra.mxu0 %v269
      %318 = vmatprep.subr.bf16.mxu0 0
      %319 = vmatpush1.bf16.msra.mxu0 0
      %320 = vmatprep.subr.bf16.mxu0 0
      %321 = vmatpush1.bf16.msra.mxu0 0
      %322 = vmatprep.subr.bf16.mxu0 0
      %323 = vmatpush1.bf16.msra.mxu0 0
      %324 = vmatprep.subr.bf16.mxu0 0
      %325 = vmatpush1.bf16.msra.mxu0 0
      %326 = vmatprep.subr.bf16.mxu0 0
      %327 = vmatpush1.bf16.msra.mxu0 0
      %328 = vmatprep.subr.bf16.mxu0 0
      %329 = vmatpush1.bf16.msra.mxu0 0
      %330 = vmatprep.subr.bf16.mxu0 0
      %331 = vmatpush1.bf16.msra.mxu0 0
      %332 = vmatprep.subr.bf16.mxu0 0
      %333 = vmatpush1.bf16.msra.mxu0 0
      %334 = vmatprep.subr.bf16.mxu0 0
      %335 = vmatpush1.bf16.msra.mxu0 0
      %336 = vmatprep.subr.bf16.mxu0 0
      %337 = vmatpush1.bf16.msra.mxu0 0
      %338 = vmatprep.subr.bf16.mxu0 0
      %339 = vmatpush1.bf16.msra.mxu0 0
      %340 = vmatprep.subr.bf16.mxu0 0
      %341 = vmatpush1.bf16.msra.mxu0 0
      %342 = vmatprep.subr.bf16.mxu0 0
      %343 = vmatpush1.bf16.msra.mxu0 0
      %344 = vmatprep.subr.bf16.mxu0 0
      %345 = vmatpush1.bf16.msra.mxu0 0
      %346 = vmatprep.subr.bf16.mxu0 0
      %347 = vmatpush1.bf16.msra.mxu0 0
      %348 = vmatprep.mubr.bf16.mxu0 0
      %349 = vmatmul.mubr.bf16.gmra.mrb[0].mxu0 %v311
      %v350 = vpop.f32.mrb[0].mxu0
      %v351 = vadd.f32 %v282, %v350
      %v352 = vpop.f32.mrb[0].mxu0
      %v353 = vadd.f32 %v282, %v352
      %v354 = vpop.f32.mrb[0].mxu0
      %v355 = vadd.f32 %v287, %v354
      %v356 = vpop.f32.mrb[0].mxu0
      %v357 = vadd.f32 %v287, %v356
      %358 = vmatprep.mubr.bf16.mxu0 0
      %359 = vmatmul.mubr.bf16.gmra.mrb[0].mxu0 %v314
      %v360 = vpop.f32.mrb[0].mxu0
      %v361 = vadd.f32 %v292, %v360
      %v362 = vpop.f32.mrb[0].mxu0
      %v363 = vadd.f32 %v292, %v362
      %v364 = vpop.f32.mrb[0].mxu0
      %v365 = vadd.f32 %v297, %v364
      %v366 = vpop.f32.mrb[0].mxu0
      %v367 = vadd.f32 %v297, %v366
      %368 = vdwg.mxu0
      %v369 = vmul.f32 %v351, 0.5
      %v370 = vmul.f32 %v353, 0.5
      %v371 = vmul.f32 %v355, 0.5
      %v372 = vmul.f32 %v357, 0.5
      %v373 = vmul.f32 %v361, 0.5
      %v374 = vmul.f32 %v363, 0.5
      %v375 = vmul.f32 %v365, 0.5
      %v376 = vmul.f32 %v367, 0.5
      %v377 = vmul.f32 %v351, 0.70710677
      %v378 = vmul.f32 %v353, 0.70710677
      %v379 = vmul.f32 %v355, 0.70710677
      %v380 = vmul.f32 %v357, 0.70710677
      %v381 = vmul.f32 %v361, 0.70710677
      %v382 = vmul.f32 %v363, 0.70710677
      %v383 = vmul.f32 %v365, 0.70710677
      %v384 = vmul.f32 %v367, 0.70710677
      %v385 = verf.f32.pop %v377
      %v386 = verf.f32.pop %v378
      %v387 = verf.f32.pop %v379
      %v388 = verf.f32.pop %v380
      %v389 = verf.f32.pop %v381
      %v390 = verf.f32.pop %v382
      %v391 = verf.f32.pop %v383
      %v392 = verf.f32.pop %v384
      %v393 = vadd.f32 %v385, 1.0
      %v394 = vadd.f32 %v386, 1.0
      %v395 = vadd.f32 %v387, 1.0
      %v396 = vadd.f32 %v388, 1.0
      %v397 = vadd.f32 %v389, 1.0
      %v398 = vadd.f32 %v390, 1.0
      %v399 = vadd.f32 %v391, 1.0
      %v400 = vadd.f32 %v392, 1.0
      %v401 = vmul.f32 %v369, %v393
      %v402 = vmul.f32 %v370, %v394
      %v403 = vmul.f32 %v371, %v395
      %v404 = vmul.f32 %v372, %v396
      %v405 = vmul.f32 %v373, %v397
      %v406 = vmul.f32 %v374, %v398
      %v407 = vmul.f32 %v375, %v399
      %v408 = vmul.f32 %v376, %v400
      %v409 = vld [vmem:[%s3] sm:$0xf]
      %v410 = vld [vmem:[%s3 + $0x4] sm:$0xf]
      %v411 = vpack.c.bf16 %v403, %v401
      %v412 = vpack.c.bf16 %v404, %v402
      %v413 = vpack.c.bf16 %v407, %v405
      %v414 = vpack.c.bf16 %v408, %v406
      %v415 = vld [vmem:[%s4] sm:$0xff]
      %v416 = vld [vmem:[%s4 + $0x8] sm:$0xff]
      %418 = vset.pattern.permute.xlu0 0
      %419 = vperm.xlu0 %418, %v415
      %v420 = vpop.permute.xlu0 %419
      %423 = vset.pattern.permute.xlu0 0
      %424 = vperm.xlu0 %423, %v416
      %v425 = vpop.permute.xlu0 %424
      %v429 = vunpack.c.l.b16 %v409
      %v430 = vunpack.c.l.b16 %v410
      %v431 = vpack.c.b16 %v430, %v429
      %vm432 = vcmask 261120
      %v434 = vsel %vm432, %v431, 0
      %436 = vmatprep.subr.bf16.mxu0 %v412
      %437 = vmatpush1.bf16.msra.mxu0 %v411
      %438 = vmatprep.subr.bf16.mxu0 %v414
      %439 = vmatpush1.bf16.msra.mxu0 %v413
      %440 = vmatprep.subr.bf16.mxu0 0
      %441 = vmatpush1.bf16.msra.mxu0 0
      %442 = vmatprep.subr.bf16.mxu0 0
      %443 = vmatpush1.bf16.msra.mxu0 0
      %444 = vmatprep.subr.bf16.mxu0 0
      %445 = vmatpush1.bf16.msra.mxu0 0
      %446 = vmatprep.subr.bf16.mxu0 0
      %447 = vmatpush1.bf16.msra.mxu0 0
      %448 = vmatprep.subr.bf16.mxu0 0
      %449 = vmatpush1.bf16.msra.mxu0 0
      %450 = vmatprep.subr.bf16.mxu0 0
      %451 = vmatpush1.bf16.msra.mxu0 0
      %452 = vmatprep.subr.bf16.mxu0 0
      %453 = vmatpush1.bf16.msra.mxu0 0
      %454 = vmatprep.subr.bf16.mxu0 0
      %455 = vmatpush1.bf16.msra.mxu0 0
      %456 = vmatprep.subr.bf16.mxu0 0
      %457 = vmatpush1.bf16.msra.mxu0 0
      %458 = vmatprep.subr.bf16.mxu0 0
      %459 = vmatpush1.bf16.msra.mxu0 0
      %460 = vmatprep.subr.bf16.mxu0 0
      %461 = vmatpush1.bf16.msra.mxu0 0
      %462 = vmatprep.subr.bf16.mxu0 0
      %463 = vmatpush1.bf16.msra.mxu0 0
      %464 = vmatprep.subr.bf16.mxu0 0
      %465 = vmatpush1.bf16.msra.mxu0 0
      %466 = vmatprep.subr.bf16.mxu0 0
      %467 = vmatpush1.bf16.msra.mxu0 0
      %468 = vmatprep.mubr.bf16.mxu0 0
      %469 = vmatmul.mubr.bf16.gmra.mrb[0].mxu0 %v434
      %v470 = vpop.f32.mrb[0].mxu0
      %v471 = vadd.f32 %v420, %v470
      %v472 = vpop.f32.mrb[0].mxu0
      %v473 = vadd.f32 %v420, %v472
      %v474 = vpop.f32.mrb[0].mxu0
      %v475 = vadd.f32 %v425, %v474
      %v476 = vpop.f32.mrb[0].mxu0
      %v477 = vadd.f32 %v425, %v476
      %478 = vdwg.mxu0
      %479 = vst [vmem:[%s262] sm:$0xff] %v471
      %480 = vst [vmem:[%s262 + $0x8] sm:$0xff] %v473
      %481 = vst [vmem:[%s262 + $0x10] sm:$0xff] %v475
      %482 = vst [vmem:[%s262 + $0x18] sm:$0xff] %v477
      %s483 = smul.u32 2, %s21
      %p484 = scmp.lt.s32.totalorder %s20, 1
      %s485 = scalar_select %p484, %s20, 1
      %p486 = scmp.lt.s32.totalorder %s483, 1
      %s487 = scalar_select %p486, %s483, 1
      %s488 = smul.addr %s485, 4
      %s489 = sadd.s32 %s487, %s488
      %s490 = smul.addr %s489, 8
      %s491 = scalar_lea.vmem %s5, %s490
      // Predicated region
      $region41: #{sfca_forward.6} parent=39 // pred_check
        %p492 = pneg %p160
      $region42: #{sfca_forward.6} parent=39 // pred_check_branch
        %494 = sbr.rel (%p492) target = $region44
      $region43: #{sfca_forward.6} parent=39 // pred_region
        %s495 = smul.u32 2, %s21
      $region44: #{sfca_forward.6} parent=39 // pred_fallthru
        _
    $region40: #{sfca_forward.6} parent=5 // pred_fallthru
      _
    %p496 = scmp.le.s32.totalorder 2, %s11
    // Predicated region
    $region45: #{sfca_forward.6} parent=5 // pred_check
      %p497 = pneg %p496
    $region46: #{sfca_forward.6} parent=5 // pred_check_branch
      %499 = sbr.rel (%p497) target = $region48
    $region47: #{sfca_forward.6} parent=5 // pred_region
      %s500 = ssub.s32 %s11, 2
      // Predicated region
      $region49: #{sfca_forward.6} parent=47 // pred_check
        %p501 = pneg %p166
      $region50: #{sfca_forward.6} parent=47 // pred_check_branch
        %503 = sbr.rel (%p501) target = $region52
      $region51: #{sfca_forward.6} parent=47 // pred_region
        %s504 = smul.u32 2, %s23
        %p505 = scmp.lt.s32.totalorder %s22, 1
        %s506 = scalar_select %p505, %s22, 1
        %p507 = scmp.lt.s32.totalorder %s504, 1
        %s508 = scalar_select %p507, %s504, 1
        %s509 = smul.addr %s506, 4
        %s510 = sadd.s32 %s508, %s509
        %s511 = smul.addr %s510, 8
        %s512 = scalar_lea.vmem %s5, %s511
      $region52: #{sfca_forward.6} parent=47 // pred_fallthru
        _
    $region48: #{sfca_forward.6} parent=5 // pred_fallthru
      _
  $region6: #{sfca_forward.6} parent=0 // loop_footer
    %s15 = sadd.s32 1, %s11
  $region7: #{sfca_forward.6} parent=0 // loop_footer_branch
    %10 = sbr.rel target = $region3
  $region8: #{sfca_forward.6} parent=0 // loop_exit
    _

// kernel: sfca_forward.7
$region0: #{sfca_forward.7}
  #allocation0 [shape = 'u32[]', space=smem, size = 0x4, offset = 0x4, fixed_abs, tag = 'smem constant byte address 0x4 - core index']
  #allocation1 [shape = 'u32[144,128]{1,0:T(1,128)}', space=vmem, size = 0x12000, scoped, tag = 'internal scratch']
  %s0 = inlined_call_operand.vmem [shape: f32[2,16,256], index: 0, kind: input, shape index: {}]
  %s1 = inlined_call_operand.vmem [shape: f32[2,16,256], index: 1, kind: input, shape index: {}]
  %s2 = inlined_call_operand.vmem [shape: f32[2,16,256], index: 2, kind: input, shape index: {}]
  %s3 = inlined_call_operand.vmem [shape: bf16[16,16], index: 3, kind: input, shape index: {}]
  %s4 = inlined_call_operand.vmem [shape: f32[16,1], index: 4, kind: input, shape index: {}]
  %s5 = inlined_call_operand.vmem [shape: bf16[16,32], index: 5, kind: input, shape index: {}]
  %s6 = inlined_call_operand.vmem [shape: f32[16,1], index: 6, kind: input, shape index: {}]
  %s7 = inlined_call_operand.vmem [shape: f32[2,16,256], index: 7, kind: output, shape index: {}]
  %s8 = sld [smem:[#allocation0]]
  $region61: #{sfca_forward.7} parent=0
    _
  %s10 = ssub.s32 1, %s8
  %s11 = scalar_select 0, %s10, %s8
  loop: start=0, step=1, limit=4
  $region2: #{sfca_forward.7} parent=0 // loop_pre_header
    _
  $region3: #{sfca_forward.7} parent=0 // loop_header
    %s13 = sphi 0, %s17
    %p14 = scmp.ge.s32.totalorder %s13, 4
    %s20 = sphi 0, %s32
    %s21 = sphi 0, %s28
    %s22 = sphi 0, %s20
    %s23 = sphi 0, %s21
    %s24 = sphi 0, %s22
    %s25 = sphi 0, %s23
    %s37 = sphi 0, %s39
    %s40 = sphi 0, %s37
    %s41 = sphi 0, %s40
    %s57 = sphi 0, %s41
    %s65 = sphi 0, %s67
    %s68 = sphi 0, %s65
    %s69 = sphi 0, %s68
    %s85 = sphi 0, %s69
    %s93 = sphi 0, %s95
    %s96 = sphi 0, %s93
    %s97 = sphi 0, %s96
    %s113 = sphi 0, %s97
    %s117 = sphi 0, %s117
    %s119 = sphi 0, %s117
    %s120 = sphi 0, %s119
    %s134 = sphi 0, %s120
    %s138 = sphi 0, %s138
    %s140 = sphi 0, %s138
    %s141 = sphi 0, %s140
    %s155 = sphi 0, %s141
    %s159 = sphi 0, %s159
    %s161 = sphi 0, %s159
    %s162 = sphi 0, %s161
    %s176 = sphi 0, %s162
    %s180 = sphi 0, %s180
    %s182 = sphi 0, %s180
    %s183 = sphi 0, %s182
    %s197 = sphi 0, %s183
    %s205 = sphi 0, %s207
    %s208 = sphi 0, %s205
    %s209 = sphi 0, %s208
    %s225 = sphi 0, %s209
  $region4: #{sfca_forward.7} parent=0 // loop_header_branch
    %16 = sbr.rel (%p14) target = $region8
  $region5: #{sfca_forward.7} parent=0 // loop_body
    %s18 = ssub.s32 %s13, 1
    %s19 = ssub.s32 %s13, 2
    %s26 = sadd.s32 1, %s21
    %p27 = scmp.ge.s32.totalorder %s26, 1
    %s28 = scalar_select %p27, 0, %s26
    %s29 = sadd.s32 1, %s20
    %s30 = scalar_select %p27, %s29, %s20
    %p31 = scmp.ge.s32.totalorder %s30, 2
    %s32 = scalar_select %p31, 0, %s30
    %s33 = ssub.s32 %s20, %s32
    %s34 = ssub.s32 %s21, %s28
    %s35 = sor.u32 %s33, %s34
    %p36 = scmp.eq.s32.totalorder %s35, 0
    %s38 = sadd.s32 %s37, 1
    %s39 = scalar_select %p36, %s37, %s38
    %p42 = pneg %p36
    %p43 = scmp.eq.s32.totalorder %s13, 1
    %p44 = por %p42, %p43
    %p45 = scmp.ne.s32.totalorder %s37, %s40
    %p46 = scmp.eq.s32.totalorder %s13, 0
    %p47 = por %p45, %p46
    %p48 = scmp.ne.s32.totalorder %s37, %s40
    %p49 = scmp.eq.s32.totalorder %s18, 1
    %p50 = por %p48, %p49
    %p51 = scmp.ne.s32.totalorder %s40, %s41
    %p52 = scmp.eq.s32.totalorder %s18, 0
    %p53 = por %p51, %p52
    %p54 = scmp.ne.s32.totalorder %s40, %s41
    %p55 = scmp.eq.s32.totalorder %s19, 1
    %p56 = por %p54, %p55
    %p58 = scmp.ne.s32.totalorder %s41, %s57
    %p59 = scmp.eq.s32.totalorder %s19, 0
    %p60 = por %p58, %p59
    %s61 = ssub.s32 %s20, %s32
    %s62 = ssub.s32 %s21, %s28
    %s63 = sor.u32 %s61, %s62
    %p64 = scmp.eq.s32.totalorder %s63, 0
    %s66 = sadd.s32 %s65, 1
    %s67 = scalar_select %p64, %s65, %s66
    %p70 = pneg %p64
    %p71 = scmp.eq.s32.totalorder %s13, 1
    %p72 = por %p70, %p71
    %p73 = scmp.ne.s32.totalorder %s65, %s68
    %p74 = scmp.eq.s32.totalorder %s13, 0
    %p75 = por %p73, %p74
    %p76 = scmp.ne.s32.totalorder %s65, %s68
    %p77 = scmp.eq.s32.totalorder %s18, 1
    %p78 = por %p76, %p77
    %p79 = scmp.ne.s32.totalorder %s68, %s69
    %p80 = scmp.eq.s32.totalorder %s18, 0
    %p81 = por %p79, %p80
    %p82 = scmp.ne.s32.totalorder %s68, %s69
    %p83 = scmp.eq.s32.totalorder %s19, 1
    %p84 = por %p82, %p83
    %p86 = scmp.ne.s32.totalorder %s69, %s85
    %p87 = scmp.eq.s32.totalorder %s19, 0
    %p88 = por %p86, %p87
    %s89 = ssub.s32 %s20, %s32
    %s90 = ssub.s32 %s21, %s28
    %s91 = sor.u32 %s89, %s90
    %p92 = scmp.eq.s32.totalorder %s91, 0
    %s94 = sadd.s32 %s93, 1
    %s95 = scalar_select %p92, %s93, %s94
    %p98 = pneg %p92
    %p99 = scmp.eq.s32.totalorder %s13, 1
    %p100 = por %p98, %p99
    %p101 = scmp.ne.s32.totalorder %s93, %s96
    %p102 = scmp.eq.s32.totalorder %s13, 0
    %p103 = por %p101, %p102
    %p104 = scmp.ne.s32.totalorder %s93, %s96
    %p105 = scmp.eq.s32.totalorder %s18, 1
    %p106 = por %p104, %p105
    %p107 = scmp.ne.s32.totalorder %s96, %s97
    %p108 = scmp.eq.s32.totalorder %s18, 0
    %p109 = por %p107, %p108
    %p110 = scmp.ne.s32.totalorder %s96, %s97
    %p111 = scmp.eq.s32.totalorder %s19, 1
    %p112 = por %p110, %p111
    %p114 = scmp.ne.s32.totalorder %s97, %s113
    %p115 = scmp.eq.s32.totalorder %s19, 0
    %p116 = por %p114, %p115
    %s118 = sadd.s32 %s117, 1
    %p121 = scmp.eq.s32.totalorder %s13, 1
    %p122 = scmp.ne.s32.totalorder %s117, %s119
    %p123 = scmp.eq.s32.totalorder %s13, 0
    %p124 = por %p122, %p123
    %p125 = scmp.ne.s32.totalorder %s117, %s119
    %p126 = scmp.eq.s32.totalorder %s18, 1
    %p127 = por %p125, %p126
    %p128 = scmp.ne.s32.totalorder %s119, %s120
    %p129 = scmp.eq.s32.totalorder %s18, 0
    %p130 = por %p128, %p129
    %p131 = scmp.ne.s32.totalorder %s119, %s120
    %p132 = scmp.eq.s32.totalorder %s19, 1
    %p133 = por %p131, %p132
    %p135 = scmp.ne.s32.totalorder %s120, %s134
    %p136 = scmp.eq.s32.totalorder %s19, 0
    %p137 = por %p135, %p136
    %s139 = sadd.s32 %s138, 1
    %p142 = scmp.eq.s32.totalorder %s13, 1
    %p143 = scmp.ne.s32.totalorder %s138, %s140
    %p144 = scmp.eq.s32.totalorder %s13, 0
    %p145 = por %p143, %p144
    %p146 = scmp.ne.s32.totalorder %s138, %s140
    %p147 = scmp.eq.s32.totalorder %s18, 1
    %p148 = por %p146, %p147
    %p149 = scmp.ne.s32.totalorder %s140, %s141
    %p150 = scmp.eq.s32.totalorder %s18, 0
    %p151 = por %p149, %p150
    %p152 = scmp.ne.s32.totalorder %s140, %s141
    %p153 = scmp.eq.s32.totalorder %s19, 1
    %p154 = por %p152, %p153
    %p156 = scmp.ne.s32.totalorder %s141, %s155
    %p157 = scmp.eq.s32.totalorder %s19, 0
    %p158 = por %p156, %p157
    %s160 = sadd.s32 %s159, 1
    %p163 = scmp.eq.s32.totalorder %s13, 1
    %p164 = scmp.ne.s32.totalorder %s159, %s161
    %p165 = scmp.eq.s32.totalorder %s13, 0
    %p166 = por %p164, %p165
    %p167 = scmp.ne.s32.totalorder %s159, %s161
    %p168 = scmp.eq.s32.totalorder %s18, 1
    %p169 = por %p167, %p168
    %p170 = scmp.ne.s32.totalorder %s161, %s162
    %p171 = scmp.eq.s32.totalorder %s18, 0
    %p172 = por %p170, %p171
    %p173 = scmp.ne.s32.totalorder %s161, %s162
    %p174 = scmp.eq.s32.totalorder %s19, 1
    %p175 = por %p173, %p174
    %p177 = scmp.ne.s32.totalorder %s162, %s176
    %p178 = scmp.eq.s32.totalorder %s19, 0
    %p179 = por %p177, %p178
    %s181 = sadd.s32 %s180, 1
    %p184 = scmp.eq.s32.totalorder %s13, 1
    %p185 = scmp.ne.s32.totalorder %s180, %s182
    %p186 = scmp.eq.s32.totalorder %s13, 0
    %p187 = por %p185, %p186
    %p188 = scmp.ne.s32.totalorder %s180, %s182
    %p189 = scmp.eq.s32.totalorder %s18, 1
    %p190 = por %p188, %p189
    %p191 = scmp.ne.s32.totalorder %s182, %s183
    %p192 = scmp.eq.s32.totalorder %s18, 0
    %p193 = por %p191, %p192
    %p194 = scmp.ne.s32.totalorder %s182, %s183
    %p195 = scmp.eq.s32.totalorder %s19, 1
    %p196 = por %p194, %p195
    %p198 = scmp.ne.s32.totalorder %s183, %s197
    %p199 = scmp.eq.s32.totalorder %s19, 0
    %p200 = por %p198, %p199
    %s201 = ssub.s32 %s20, %s32
    %s202 = ssub.s32 %s21, %s28
    %s203 = sor.u32 %s201, %s202
    %p204 = scmp.eq.s32.totalorder %s203, 0
    %s206 = sadd.s32 %s205, 1
    %s207 = scalar_select %p204, %s205, %s206
    %p210 = pneg %p204
    %p211 = scmp.eq.s32.totalorder %s13, 1
    %p212 = por %p210, %p211
    %p213 = scmp.ne.s32.totalorder %s205, %s208
    %p214 = scmp.eq.s32.totalorder %s13, 0
    %p215 = por %p213, %p214
    %p216 = scmp.ne.s32.totalorder %s205, %s208
    %p217 = scmp.eq.s32.totalorder %s18, 1
    %p218 = por %p216, %p217
    %p219 = scmp.ne.s32.totalorder %s208, %s209
    %p220 = scmp.eq.s32.totalorder %s18, 0
    %p221 = por %p219, %p220
    %p222 = scmp.ne.s32.totalorder %s208, %s209
    %p223 = scmp.eq.s32.totalorder %s19, 1
    %p224 = por %p222, %p223
    %p226 = scmp.ne.s32.totalorder %s209, %s225
    %p227 = scmp.eq.s32.totalorder %s19, 0
    %p228 = por %p226, %p227
    %p229 = scmp.le.s32.totalorder 1, %s13
    %p230 = scmp.lt.s32.totalorder %s13, 3
    %p231 = pnand %p229, %p230
    %p232 = pneg %p231
    // Predicated region
    $region9: #{sfca_forward.7} parent=5 // pred_check
      _
    $region10: #{sfca_forward.7} parent=5 // pred_check_branch
      %234 = sbr.rel (%p231) target = $region12
    $region11: #{sfca_forward.7} parent=5 // pred_region
      %s235 = ssub.s32 %s13, 1
      // Predicated region
      $region13: #{sfca_forward.7} parent=11 // pred_check
        %p236 = pneg %p130
      $region14: #{sfca_forward.7} parent=11 // pred_check_branch
        %238 = sbr.rel (%p236) target = $region16
      $region15: #{sfca_forward.7} parent=11 // pred_region
        _
      $region16: #{sfca_forward.7} parent=11 // pred_fallthru
        _
      // Predicated region
      $region17: #{sfca_forward.7} parent=11 // pred_check
        %p239 = pneg %p151
      $region18: #{sfca_forward.7} parent=11 // pred_check_branch
        %241 = sbr.rel (%p239) target = $region20
      $region19: #{sfca_forward.7} parent=11 // pred_region
        _
      $region20: #{sfca_forward.7} parent=11 // pred_fallthru
        _
      // Predicated region
      $region21: #{sfca_forward.7} parent=11 // pred_check
        %p242 = pneg %p172
      $region22: #{sfca_forward.7} parent=11 // pred_check_branch
        %244 = sbr.rel (%p242) target = $region24
      $region23: #{sfca_forward.7} parent=11 // pred_region
        _
      $region24: #{sfca_forward.7} parent=11 // pred_fallthru
        _
      // Predicated region
      $region25: #{sfca_forward.7} parent=11 // pred_check
        %p245 = pneg %p193
      $region26: #{sfca_forward.7} parent=11 // pred_check_branch
        %247 = sbr.rel (%p245) target = $region28
      $region27: #{sfca_forward.7} parent=11 // pred_region
        _
      $region28: #{sfca_forward.7} parent=11 // pred_fallthru
        _
    $region12: #{sfca_forward.7} parent=5 // pred_fallthru
      _
    %p248 = scmp.lt.s32.totalorder %s13, 2
    // Predicated region
    $region29: #{sfca_forward.7} parent=5 // pred_check
      %p249 = pneg %p248
    $region30: #{sfca_forward.7} parent=5 // pred_check_branch
      %251 = sbr.rel (%p249) target = $region32
    $region31: #{sfca_forward.7} parent=5 // pred_region
      // Predicated region
      $region33: #{sfca_forward.7} parent=31 // pred_check
        %p252 = pneg %p47
      $region34: #{sfca_forward.7} parent=31 // pred_check_branch
        %254 = sbr.rel (%p252) target = $region36
      $region35: #{sfca_forward.7} parent=31 // pred_region
        %s255 = smul.u32 2, %s21
        %p256 = scmp.lt.s32.totalorder %s20, 1
        %s257 = scalar_select %p256, %s20, 1
        %p258 = scmp.lt.s32.totalorder %s255, 1
        %s259 = scalar_select %p258, %s255, 1
        %s260 = smul.addr %s257, 4
        %s261 = sadd.s32 %s259, %s260
        %s262 = smul.addr %s261, 8
        %s263 = scalar_lea.vmem %s0, %s262
        %s264 = smul.u32 2, %s21
      $region36: #{sfca_forward.7} parent=31 // pred_fallthru
        _
      // Predicated region
      $region37: #{sfca_forward.7} parent=31 // pred_check
        %p265 = pneg %p75
      $region38: #{sfca_forward.7} parent=31 // pred_check_branch
        %267 = sbr.rel (%p265) target = $region40
      $region39: #{sfca_forward.7} parent=31 // pred_region
        %s268 = smul.u32 2, %s21
        %p269 = scmp.lt.s32.totalorder %s20, 1
        %s270 = scalar_select %p269, %s20, 1
        %p271 = scmp.lt.s32.totalorder %s268, 1
        %s272 = scalar_select %p271, %s268, 1
        %s273 = smul.addr %s270, 4
        %s274 = sadd.s32 %s272, %s273
        %s275 = smul.addr %s274, 8
        %s276 = scalar_lea.vmem %s1, %s275
        %s277 = smul.u32 2, %s21
      $region40: #{sfca_forward.7} parent=31 // pred_fallthru
        _
      // Predicated region
      $region41: #{sfca_forward.7} parent=31 // pred_check
        %p278 = pneg %p103
      $region42: #{sfca_forward.7} parent=31 // pred_check_branch
        %280 = sbr.rel (%p278) target = $region44
      $region43: #{sfca_forward.7} parent=31 // pred_region
        %s281 = smul.u32 2, %s21
        %p282 = scmp.lt.s32.totalorder %s20, 1
        %s283 = scalar_select %p282, %s20, 1
        %p284 = scmp.lt.s32.totalorder %s281, 1
        %s285 = scalar_select %p284, %s281, 1
        %s286 = smul.addr %s283, 4
        %s287 = sadd.s32 %s285, %s286
        %s288 = smul.addr %s287, 8
        %s289 = scalar_lea.vmem %s2, %s288
        %s290 = smul.u32 2, %s21
      $region44: #{sfca_forward.7} parent=31 // pred_fallthru
        _
    $region32: #{sfca_forward.7} parent=5 // pred_fallthru
      _
    %p291 = scmp.le.s32.totalorder 1, %s13
    %p292 = scmp.lt.s32.totalorder %s13, 3
    %p293 = pnand %p291, %p292
    %p294 = pneg %p293
    // Predicated region
    $region45: #{sfca_forward.7} parent=5 // pred_check
      _
    $region46: #{sfca_forward.7} parent=5 // pred_check_branch
      %296 = sbr.rel (%p293) target = $region48
    $region47: #{sfca_forward.7} parent=5 // pred_region
      %s297 = ssub.s32 %s13, 1
      %s298 = smul.u32 2, %s23
      %p299 = scmp.lt.s32.totalorder %s22, 1
      %s300 = scalar_select %p299, %s22, 1
      %p301 = scmp.lt.s32.totalorder %s298, 1
      %s302 = scalar_select %p301, %s298, 1
      %s303 = smul.addr %s300, 4
      %s304 = sadd.s32 %s302, %s303
      %s305 = smul.addr %s304, 8
      %s306 = scalar_lea.vmem %s0, %s305
      %p307 = pneg %p53
      %p308 = pneg %p50
      %s309 = smul.u32 2, %s23
      %p310 = scmp.lt.s32.totalorder %s22, 1
      %s311 = scalar_select %p310, %s22, 1
      %p312 = scmp.lt.s32.totalorder %s309, 1
      %s313 = scalar_select %p312, %s309, 1
      %s314 = smul.addr %s311, 4
      %s315 = sadd.s32 %s313, %s314
      %s316 = smul.addr %s315, 8
      %s317 = scalar_lea.vmem %s1, %s316
      %p318 = pneg %p81
      %p319 = pneg %p78
      %s320 = smul.u32 2, %s23
      %p321 = scmp.lt.s32.totalorder %s22, 1
      %s322 = scalar_select %p321, %s22, 1
      %p323 = scmp.lt.s32.totalorder %s320, 1
      %s324 = scalar_select %p323, %s320, 1
      %s325 = smul.addr %s322, 4
      %s326 = sadd.s32 %s324, %s325
      %s327 = smul.addr %s326, 8
      %s328 = scalar_lea.vmem %s2, %s327
      %p329 = pneg %p109
      %p330 = pneg %p106
      %p331 = pneg %p130
      %p332 = pneg %p127
      %p333 = pneg %p151
      %p334 = pneg %p148
      %p335 = pneg %p172
      %p336 = pneg %p169
      %p337 = pneg %p193
      %p338 = pneg %p190
      %p339 = pneg %p221
      %p340 = pneg %p218
      %s341 = smul.u32 2, %s23
      %p342 = scmp.lt.s32.totalorder %s22, 1
      %s343 = scalar_select %p342, %s22, 1
      %p344 = scmp.lt.s32.totalorder %s341, 1
      %s345 = scalar_select %p344, %s341, 1
      %s346 = smul.addr %s343, 4
      %s347 = sadd.s32 %s345, %s346
      %s348 = smul.addr %s347, 8
      %s349 = scalar_lea.vmem %s7, %s348
      %s350 = smul.u32 2, %s23
      %p351 = scmp.lt.s32.totalorder %s22, 1
      %s352 = scalar_select %p351, %s22, 1
      %p353 = scmp.lt.s32.totalorder %s350, 1
      %s354 = scalar_select %p353, %s350, 1
      %s355 = smul.addr %s352, 4
      %s356 = sadd.s32 %s354, %s355
      %s357 = smul.addr %s356, 8
      %s358 = scalar_lea.vmem %s0, %s357
      %s359 = smul.u32 2, %s23
      %s360 = smul.u32 2, %s23
      %p361 = scmp.lt.s32.totalorder %s22, 1
      %s362 = scalar_select %p361, %s22, 1
      %p363 = scmp.lt.s32.totalorder %s360, 1
      %s364 = scalar_select %p363, %s360, 1
      %s365 = smul.addr %s362, 4
      %s366 = sadd.s32 %s364, %s365
      %s367 = smul.addr %s366, 8
      %s368 = scalar_lea.vmem %s1, %s367
      %s369 = smul.u32 2, %s23
      %s370 = smul.u32 2, %s23
      %p371 = scmp.lt.s32.totalorder %s22, 1
      %s372 = scalar_select %p371, %s22, 1
      %p373 = scmp.lt.s32.totalorder %s370, 1
      %s374 = scalar_select %p373, %s370, 1
      %s375 = smul.addr %s372, 4
      %s376 = sadd.s32 %s374, %s375
      %s377 = smul.addr %s376, 8
      %s378 = scalar_lea.vmem %s2, %s377
      %s379 = smul.u32 2, %s23
      %s380 = smul.u32 2, %s23
      %p381 = scmp.lt.s32.totalorder %s22, 1
      %s382 = scalar_select %p381, %s22, 1
      %p383 = scmp.lt.s32.totalorder %s380, 1
      %s384 = scalar_select %p383, %s380, 1
      %s385 = smul.addr %s382, 4
      %s386 = sadd.s32 %s384, %s385
      %s387 = smul.addr %s386, 8
      %s388 = scalar_lea.vmem %s7, %s387
      %s389 = smul.u32 2, %s23
      %v391 = vld [vmem:[%s378] sm:$0xff]
      %v392 = vld [vmem:[%s378 + $0x8] sm:$0xff]
      %v393 = vld [vmem:[%s378 + $0x10] sm:$0xff]
      %v394 = vld [vmem:[%s378 + $0x18] sm:$0xff]
      %v395 = vpack.c.bf16 %v393, %v391
      %v396 = vpack.c.bf16 %v394, %v392
      %v397 = vld [vmem:[%s368] sm:$0xff]
      %v398 = vld [vmem:[%s368 + $0x8] sm:$0xff]
      %v399 = vld [vmem:[%s368 + $0x10] sm:$0xff]
      %v400 = vld [vmem:[%s368 + $0x18] sm:$0xff]
      %v401 = vld [vmem:[%s3] sm:$0xf]
      %v402 = vld [vmem:[%s3 + $0x4] sm:$0xf]
      %v405 = vunpack.c.l.b16 %v401
      %v406 = vunpack.c.l.b16 %v402
      %v407 = vpack.c.b16 %v406, %v405
      %vm408 = vcmask 130048
      %v410 = vsel %vm408, %v407, 0
      %412 = vmatprep.subr.bf16.mxu0 %v396
      %413 = vmatpush1.bf16.msra.mxu0 %v395
      %414 = vmatprep.subr.bf16.mxu0 0
      %415 = vmatpush1.bf16.msra.mxu0 0
      %416 = vmatprep.subr.bf16.mxu0 0
      %417 = vmatpush1.bf16.msra.mxu0 0
      %418 = vmatprep.subr.bf16.mxu0 0
      %419 = vmatpush1.bf16.msra.mxu0 0
      %420 = vmatprep.subr.bf16.mxu0 0
      %421 = vmatpush1.bf16.msra.mxu0 0
      %422 = vmatprep.subr.bf16.mxu0 0
      %423 = vmatpush1.bf16.msra.mxu0 0
      %424 = vmatprep.subr.bf16.mxu0 0
      %425 = vmatpush1.bf16.msra.mxu0 0
      %426 = vmatprep.subr.bf16.mxu0 0
      %427 = vmatpush1.bf16.msra.mxu0 0
      %428 = vmatprep.subr.bf16.mxu0 0
      %429 = vmatpush1.bf16.msra.mxu0 0
      %430 = vmatprep.subr.bf16.mxu0 0
      %431 = vmatpush1.bf16.msra.mxu0 0
      %432 = vmatprep.subr.bf16.mxu0 0
      %433 = vmatpush1.bf16.msra.mxu0 0
      %434 = vmatprep.subr.bf16.mxu0 0
      %435 = vmatpush1.bf16.msra.mxu0 0
      %436 = vmatprep.subr.bf16.mxu0 0
      %437 = vmatpush1.bf16.msra.mxu0 0
      %438 = vmatprep.subr.bf16.mxu0 0
      %439 = vmatpush1.bf16.msra.mxu0 0
      %440 = vmatprep.subr.bf16.mxu0 0
      %441 = vmatpush1.bf16.msra.mxu0 0
      %442 = vmatprep.subr.bf16.mxu0 0
      %443 = vmatpush1.bf16.msra.mxu0 0
      %444 = vmatprep.mubr.bf16.mxu0 0
      %445 = vmatmul.mubr.bf16.gmra.mrb[0].mxu0 %v410
      %v446 = vpop.f32.mrb[0].mxu0
      %v447 = vadd.f32 0.0, %v446
      %v448 = vpop.f32.mrb[0].mxu0
      %v449 = vadd.f32 0.0, %v448
      %v450 = vpop.f32.mrb[0].mxu0
      %v451 = vadd.f32 0.0, %v450
      %v452 = vpop.f32.mrb[0].mxu0
      %v453 = vadd.f32 0.0, %v452
      %454 = vdwg.mxu0
      %v455 = vadd.f32 %v397, %v447
      %v456 = vadd.f32 %v398, %v449
      %v457 = vadd.f32 %v399, %v451
      %v458 = vadd.f32 %v400, %v453
      %v459 = vld [vmem:[%s4] sm:$0xff]
      %v460 = vld [vmem:[%s4 + $0x8] sm:$0xff]
      %462 = vset.pattern.permute.xlu0 0
      %463 = vperm.xlu0 %462, %v459
      %v464 = vpop.permute.xlu0 %463
      %467 = vset.pattern.permute.xlu0 0
      %468 = vperm.xlu0 %467, %v460
      %v469 = vpop.permute.xlu0 %468
      %v471 = vadd.f32 %v455, %v464
      %v472 = vadd.f32 %v456, %v464
      %v473 = vadd.f32 %v457, %v469
      %v474 = vadd.f32 %v458, %v469
      %v475 = vld [vmem:[%s358] sm:$0xff]
      %v476 = vld [vmem:[%s358 + $0x8] sm:$0xff]
      %v477 = vld [vmem:[%s358 + $0x10] sm:$0xff]
      %v478 = vld [vmem:[%s358 + $0x18] sm:$0xff]
      %v479 = vpack.c.bf16 %v477, %v475
      %v480 = vpack.c.bf16 %v478, %v476
      %v481 = vpack.c.bf16 %v473, %v471
      %v482 = vpack.c.bf16 %v474, %v472
      %v483 = vld [vmem:[%s5] sm:$0xf]
      %v484 = vld [vmem:[%s5 + $0x4] sm:$0xf]
      %v485 = vld [vmem:[%s6] sm:$0xff]
      %v486 = vld [vmem:[%s6 + $0x8] sm:$0xff]
      %488 = vset.pattern.permute.xlu0 0
      %489 = vperm.xlu0 %488, %v485
      %v490 = vpop.permute.xlu0 %489
      %493 = vset.pattern.permute.xlu0 0
      %494 = vperm.xlu0 %493, %v486
      %v495 = vpop.permute.xlu0 %494
      %v499 = vunpack.c.l.b16 %v483
      %v500 = vunpack.c.l.b16 %v484
      %v501 = vpack.c.b16 %v500, %v499
      %vm502 = vcmask 261120
      %v504 = vsel %vm502, %v501, 0
      %506 = vmatprep.subr.bf16.mxu0 %v480
      %507 = vmatpush1.bf16.msra.mxu0 %v479
      %508 = vmatprep.subr.bf16.mxu0 %v482
      %509 = vmatpush1.bf16.msra.mxu0 %v481
      %510 = vmatprep.subr.bf16.mxu0 0
      %511 = vmatpush1.bf16.msra.mxu0 0
      %512 = vmatprep.subr.bf16.mxu0 0
      %513 = vmatpush1.bf16.msra.mxu0 0
      %514 = vmatprep.subr.bf16.mxu0 0
      %515 = vmatpush1.bf16.msra.mxu0 0
      %516 = vmatprep.subr.bf16.mxu0 0
      %517 = vmatpush1.bf16.msra.mxu0 0
      %518 = vmatprep.subr.bf16.mxu0 0
      %519 = vmatpush1.bf16.msra.mxu0 0
      %520 = vmatprep.subr.bf16.mxu0 0
      %521 = vmatpush1.bf16.msra.mxu0 0
      %522 = vmatprep.subr.bf16.mxu0 0
      %523 = vmatpush1.bf16.msra.mxu0 0
      %524 = vmatprep.subr.bf16.mxu0 0
      %525 = vmatpush1.bf16.msra.mxu0 0
      %526 = vmatprep.subr.bf16.mxu0 0
      %527 = vmatpush1.bf16.msra.mxu0 0
      %528 = vmatprep.subr.bf16.mxu0 0
      %529 = vmatpush1.bf16.msra.mxu0 0
      %530 = vmatprep.subr.bf16.mxu0 0
      %531 = vmatpush1.bf16.msra.mxu0 0
      %532 = vmatprep.subr.bf16.mxu0 0
      %533 = vmatpush1.bf16.msra.mxu0 0
      %534 = vmatprep.subr.bf16.mxu0 0
      %535 = vmatpush1.bf16.msra.mxu0 0
      %536 = vmatprep.subr.bf16.mxu0 0
      %537 = vmatpush1.bf16.msra.mxu0 0
      %538 = vmatprep.mubr.bf16.mxu0 0
      %539 = vmatmul.mubr.bf16.gmra.mrb[0].mxu0 %v504
      %v540 = vpop.f32.mrb[0].mxu0
      %v541 = vadd.f32 %v490, %v540
      %v542 = vpop.f32.mrb[0].mxu0
      %v543 = vadd.f32 %v490, %v542
      %v544 = vpop.f32.mrb[0].mxu0
      %v545 = vadd.f32 %v495, %v544
      %v546 = vpop.f32.mrb[0].mxu0
      %v547 = vadd.f32 %v495, %v546
      %548 = vdwg.mxu0
      %549 = vst [vmem:[%s388] sm:$0xff] %v541
      %550 = vst [vmem:[%s388 + $0x8] sm:$0xff] %v543
      %551 = vst [vmem:[%s388 + $0x10] sm:$0xff] %v545
      %552 = vst [vmem:[%s388 + $0x18] sm:$0xff] %v547
      %s553 = smul.u32 2, %s23
      %p554 = scmp.lt.s32.totalorder %s22, 1
      %s555 = scalar_select %p554, %s22, 1
      %p556 = scmp.lt.s32.totalorder %s553, 1
      %s557 = scalar_select %p556, %s553, 1
      %s558 = smul.addr %s555, 4
      %s559 = sadd.s32 %s557, %s558
      %s560 = smul.addr %s559, 8
      %s561 = scalar_lea.vmem %s7, %s560
      // Predicated region
      $region49: #{sfca_forward.7} parent=47 // pred_check
        %p562 = pneg %p218
      $region50: #{sfca_forward.7} parent=47 // pred_check_branch
        %564 = sbr.rel (%p562) target = $region52
      $region51: #{sfca_forward.7} parent=47 // pred_region
        %s565 = smul.u32 2, %s23
      $region52: #{sfca_forward.7} parent=47 // pred_fallthru
        _
    $region48: #{sfca_forward.7} parent=5 // pred_fallthru
      _
    %p566 = scmp.le.s32.totalorder 2, %s13
    // Predicated region
    $region53: #{sfca_forward.7} parent=5 // pred_check
      %p567 = pneg %p566
    $region54: #{sfca_forward.7} parent=5 // pred_check_branch
      %569 = sbr.rel (%p567) target = $region56
    $region55: #{sfca_forward.7} parent=5 // pred_region
      %s570 = ssub.s32 %s13, 2
      // Predicated region
      $region57: #{sfca_forward.7} parent=55 // pred_check
        %p571 = pneg %p224
      $region58: #{sfca_forward.7} parent=55 // pred_check_branch
        %573 = sbr.rel (%p571) target = $region60
      $region59: #{sfca_forward.7} parent=55 // pred_region
        %s574 = smul.u32 2, %s25
        %p575 = scmp.lt.s32.totalorder %s24, 1
        %s576 = scalar_select %p575, %s24, 1
        %p577 = scmp.lt.s32.totalorder %s574, 1
        %s578 = scalar_select %p577, %s574, 1
        %s579 = smul.addr %s576, 4
        %s580 = sadd.s32 %s578, %s579
        %s581 = smul.addr %s580, 8
        %s582 = scalar_lea.vmem %s7, %s581
      $region60: #{sfca_forward.7} parent=55 // pred_fallthru
        _
    $region56: #{sfca_forward.7} parent=5 // pred_fallthru
      _
  $region6: #{sfca_forward.7} parent=0 // loop_footer
    %s17 = sadd.s32 1, %s13
  $region7: #{sfca_forward.7} parent=0 // loop_footer_branch
    %12 = sbr.rel target = $region3
  $region8: #{sfca_forward.7} parent=0 // loop_exit
    _

// kernel: sfca_forward.8
$region0: #{sfca_forward.8}
  #allocation0 [shape = 'u32[]', space=smem, size = 0x4, offset = 0x4, fixed_abs, tag = 'smem constant byte address 0x4 - core index']
  #allocation1 [shape = 'u32[144,128]{1,0:T(1,128)}', space=vmem, size = 0x12000, scoped, tag = 'internal scratch']
  %s0 = inlined_call_operand.vmem [shape: f32[2,16,256], index: 0, kind: input, shape index: {}]
  %s1 = inlined_call_operand.vmem [shape: f32[16,16], index: 1, kind: input, shape index: {}]
  %s2 = inlined_call_operand.vmem [shape: f32[2,16,256], index: 2, kind: output, shape index: {}]
  %s3 = sld [smem:[#allocation0]]
  $region41: #{sfca_forward.8} parent=0
    _
  %s5 = ssub.s32 1, %s3
  %s6 = scalar_select 0, %s5, %s3
  loop: start=0, step=1, limit=4
  $region2: #{sfca_forward.8} parent=0 // loop_pre_header
    _
  $region3: #{sfca_forward.8} parent=0 // loop_header
    %s8 = sphi 0, %s12
    %p9 = scmp.ge.s32.totalorder %s8, 4
    %s18 = sphi 0, %s20
    %s21 = sphi 0, %s18
    %s22 = sphi 0, %s21
    %s38 = sphi 0, %s22
    %s42 = sphi 0, %s42
    %s44 = sphi 0, %s42
    %s45 = sphi 0, %s44
    %s59 = sphi 0, %s45
    %s65 = sphi 0, %s67
    %s68 = sphi 0, %s65
    %s69 = sphi 0, %s68
    %s85 = sphi 0, %s69
  $region4: #{sfca_forward.8} parent=0 // loop_header_branch
    %11 = sbr.rel (%p9) target = $region8
  $region5: #{sfca_forward.8} parent=0 // loop_body
    %s13 = ssub.s32 %s8, 1
    %s14 = ssub.s32 %s8, 2
    %s15 = sadd.s32 %s8, 1
    %s16 = ssub.s32 %s8, %s15
    %p17 = scmp.eq.s32.totalorder %s16, 0
    %s19 = sadd.s32 %s18, 1
    %s20 = scalar_select %p17, %s18, %s19
    %p23 = pneg %p17
    %p24 = scmp.eq.s32.totalorder %s8, 1
    %p25 = por %p23, %p24
    %p26 = scmp.ne.s32.totalorder %s18, %s21
    %p27 = scmp.eq.s32.totalorder %s8, 0
    %p28 = por %p26, %p27
    %p29 = scmp.ne.s32.totalorder %s18, %s21
    %p30 = scmp.eq.s32.totalorder %s13, 1
    %p31 = por %p29, %p30
    %p32 = scmp.ne.s32.totalorder %s21, %s22
    %p33 = scmp.eq.s32.totalorder %s13, 0
    %p34 = por %p32, %p33
    %p35 = scmp.ne.s32.totalorder %s21, %s22
    %p36 = scmp.eq.s32.totalorder %s14, 1
    %p37 = por %p35, %p36
    %p39 = scmp.ne.s32.totalorder %s22, %s38
    %p40 = scmp.eq.s32.totalorder %s14, 0
    %p41 = por %p39, %p40
    %s43 = sadd.s32 %s42, 1
    %p46 = scmp.eq.s32.totalorder %s8, 1
    %p47 = scmp.ne.s32.totalorder %s42, %s44
    %p48 = scmp.eq.s32.totalorder %s8, 0
    %p49 = por %p47, %p48
    %p50 = scmp.ne.s32.totalorder %s42, %s44
    %p51 = scmp.eq.s32.totalorder %s13, 1
    %p52 = por %p50, %p51
    %p53 = scmp.ne.s32.totalorder %s44, %s45
    %p54 = scmp.eq.s32.totalorder %s13, 0
    %p55 = por %p53, %p54
    %p56 = scmp.ne.s32.totalorder %s44, %s45
    %p57 = scmp.eq.s32.totalorder %s14, 1
    %p58 = por %p56, %p57
    %p60 = scmp.ne.s32.totalorder %s45, %s59
    %p61 = scmp.eq.s32.totalorder %s14, 0
    %p62 = por %p60, %p61
    %s63 = ssub.s32 %s8, %s15
    %p64 = scmp.eq.s32.totalorder %s63, 0
    %s66 = sadd.s32 %s65, 1
    %s67 = scalar_select %p64, %s65, %s66
    %p70 = pneg %p64
    %p71 = scmp.eq.s32.totalorder %s8, 1
    %p72 = por %p70, %p71
    %p73 = scmp.ne.s32.totalorder %s65, %s68
    %p74 = scmp.eq.s32.totalorder %s8, 0
    %p75 = por %p73, %p74
    %p76 = scmp.ne.s32.totalorder %s65, %s68
    %p77 = scmp.eq.s32.totalorder %s13, 1
    %p78 = por %p76, %p77
    %p79 = scmp.ne.s32.totalorder %s68, %s69
    %p80 = scmp.eq.s32.totalorder %s13, 0
    %p81 = por %p79, %p80
    %p82 = scmp.ne.s32.totalorder %s68, %s69
    %p83 = scmp.eq.s32.totalorder %s14, 1
    %p84 = por %p82, %p83
    %p86 = scmp.ne.s32.totalorder %s69, %s85
    %p87 = scmp.eq.s32.totalorder %s14, 0
    %p88 = por %p86, %p87
    %p89 = scmp.le.s32.totalorder 1, %s8
    %p90 = scmp.lt.s32.totalorder %s8, 3
    %p91 = pnand %p89, %p90
    %p92 = pneg %p91
    // Predicated region
    $region9: #{sfca_forward.8} parent=5 // pred_check
      _
    $region10: #{sfca_forward.8} parent=5 // pred_check_branch
      %94 = sbr.rel (%p91) target = $region12
    $region11: #{sfca_forward.8} parent=5 // pred_region
      %s95 = ssub.s32 %s8, 1
      // Predicated region
      $region13: #{sfca_forward.8} parent=11 // pred_check
        %p96 = pneg %p55
      $region14: #{sfca_forward.8} parent=11 // pred_check_branch
        %98 = sbr.rel (%p96) target = $region16
      $region15: #{sfca_forward.8} parent=11 // pred_region
        _
      $region16: #{sfca_forward.8} parent=11 // pred_fallthru
        _
    $region12: #{sfca_forward.8} parent=5 // pred_fallthru
      _
    %p99 = scmp.lt.s32.totalorder %s8, 2
    // Predicated region
    $region17: #{sfca_forward.8} parent=5 // pred_check
      %p100 = pneg %p99
    $region18: #{sfca_forward.8} parent=5 // pred_check_branch
      %102 = sbr.rel (%p100) target = $region20
    $region19: #{sfca_forward.8} parent=5 // pred_region
      // Predicated region
      $region21: #{sfca_forward.8} parent=19 // pred_check
        %p103 = pneg %p28
      $region22: #{sfca_forward.8} parent=19 // pred_check_branch
        %105 = sbr.rel (%p103) target = $region24
      $region23: #{sfca_forward.8} parent=19 // pred_region
        %p106 = scmp.lt.s32.totalorder %s8, 1
        %s107 = scalar_select %p106, %s8, 1
        %s108 = smul.addr %s107, 4
        %s109 = smul.addr %s108, 8
        %s110 = scalar_lea.vmem %s0, %s109
      $region24: #{sfca_forward.8} parent=19 // pred_fallthru
        _
    $region20: #{sfca_forward.8} parent=5 // pred_fallthru
      _
    %p111 = scmp.le.s32.totalorder 1, %s8
    %p112 = scmp.lt.s32.totalorder %s8, 3
    %p113 = pnand %p111, %p112
    %p114 = pneg %p113
    // Predicated region
    $region25: #{sfca_forward.8} parent=5 // pred_check
      _
    $region26: #{sfca_forward.8} parent=5 // pred_check_branch
      %116 = sbr.rel (%p113) target = $region28
    $region27: #{sfca_forward.8} parent=5 // pred_region
      %s117 = ssub.s32 %s8, 1
      %p118 = scmp.lt.s32.totalorder %s13, 1
      %s119 = scalar_select %p118, %s13, 1
      %s120 = smul.addr %s119, 4
      %s121 = smul.addr %s120, 8
      %s122 = scalar_lea.vmem %s0, %s121
      %p123 = pneg %p34
      %p124 = pneg %p31
      %p125 = pneg %p55
      %p126 = pneg %p52
      %p127 = pneg %p81
      %p128 = pneg %p78
      %p129 = scmp.lt.s32.totalorder %s13, 1
      %s130 = scalar_select %p129, %s13, 1
      %s131 = smul.addr %s130, 4
      %s132 = smul.addr %s131, 8
      %s133 = scalar_lea.vmem %s2, %s132
      %p134 = scmp.lt.s32.totalorder %s13, 1
      %s135 = scalar_select %p134, %s13, 1
      %s136 = smul.addr %s135, 4
      %s137 = smul.addr %s136, 8
      %s138 = scalar_lea.vmem %s0, %s137
      %p139 = scmp.lt.s32.totalorder %s13, 1
      %s140 = scalar_select %p139, %s13, 1
      %s141 = smul.addr %s140, 4
      %s142 = smul.addr %s141, 8
      %s143 = scalar_lea.vmem %s2, %s142
      %v144 = vld [vmem:[%s138] sm:$0xff]
      %v145 = vld [vmem:[%s138 + $0x8] sm:$0xff]
      %v146 = vld [vmem:[%s138 + $0x10] sm:$0xff]
      %v147 = vld [vmem:[%s138 + $0x18] sm:$0xff]
      %v148 = vadd.f32 %v144, %v145
      %149 = vadd.xlane.f32.xlu0 %v148
      %v150 = vpop.xlane.xlu0 %149
      %v151 = vadd.f32 %v146, %v147
      %152 = vadd.xlane.f32.xlu0 %v151
      %v153 = vpop.xlane.xlu0 %152
      %vm154 = vcmp.lt.f32.partialorder %v150, 0.0
      %vm155 = vcmp.lt.f32.partialorder %v153, 0.0
      %v156 = vsel %vm154, -0.00390625, 0.00390625
      %v157 = vsel %vm155, -0.00390625, 0.00390625
      %v158 = vld [vmem:[%s1] sm:$0xff]
      %v159 = vld [vmem:[%s1 + $0x8] sm:$0xff]
      %vm160 = vcmask 130048
      %v162 = vsel %vm160, %v158, 0
      %v165 = vsel %vm160, %v159, 0
      %167 = vmatprep.subr.mxu0 0.0
      %168 = vmatpush1.msra.mxu0 %v156
      %169 = vmatprep.subr.mxu0 0.0
      %170 = vmatpush1.msra.mxu0 %v157
      %171 = vmatprep.subr.mxu0 0.0
      %172 = vmatpush1.msra.mxu0 0.0
      %173 = vmatprep.subr.mxu0 0.0
      %174 = vmatpush1.msra.mxu0 0.0
      %175 = vmatprep.subr.mxu0 0.0
      %176 = vmatpush1.msra.mxu0 0.0
      %177 = vmatprep.subr.mxu0 0.0
      %178 = vmatpush1.msra.mxu0 0.0
      %179 = vmatprep.subr.mxu0 0.0
      %180 = vmatpush1.msra.mxu0 0.0
      %181 = vmatprep.subr.mxu0 0.0
      %182 = vmatpush1.msra.mxu0 0.0
      %183 = vmatprep.subr.mxu0 0.0
      %184 = vmatpush1.msra.mxu0 0.0
      %185 = vmatprep.subr.mxu0 0.0
      %186 = vmatpush1.msra.mxu0 0.0
      %187 = vmatprep.subr.mxu0 0.0
      %188 = vmatpush1.msra.mxu0 0.0
      %189 = vmatprep.subr.mxu0 0.0
      %190 = vmatpush1.msra.mxu0 0.0
      %191 = vmatprep.subr.mxu0 0.0
      %192 = vmatpush1.msra.mxu0 0.0
      %193 = vmatprep.subr.mxu0 0.0
      %194 = vmatpush1.msra.mxu0 0.0
      %195 = vmatprep.subr.mxu0 0.0
      %196 = vmatpush1.msra.mxu0 0.0
      %197 = vmatprep.subr.mxu0 0.0
      %198 = vmatpush1.msra.mxu0 0.0
      %199 = vmatprep.subr.mxu0 0.0
      %200 = vmatpush1.msra.mxu0 0.0
      %201 = vmatprep.subr.mxu0 0.0
      %202 = vmatpush1.msra.mxu0 0.0
      %203 = vmatprep.subr.mxu0 0.0
      %204 = vmatpush1.msra.mxu0 0.0
      %205 = vmatprep.subr.mxu0 0.0
      %206 = vmatpush1.msra.mxu0 0.0
      %207 = vmatprep.subr.mxu0 0.0
      %208 = vmatpush1.msra.mxu0 0.0
      %209 = vmatprep.subr.mxu0 0.0
      %210 = vmatpush1.msra.mxu0 0.0
      %211 = vmatprep.subr.mxu0 0.0
      %212 = vmatpush1.msra.mxu0 0.0
      %213 = vmatprep.subr.mxu0 0.0
      %214 = vmatpush1.msra.mxu0 0.0
      %215 = vmatprep.subr.mxu0 0.0
      %216 = vmatpush1.msra.mxu0 0.0
      %217 = vmatprep.subr.mxu0 0.0
      %218 = vmatpush1.msra.mxu0 0.0
      %219 = vmatprep.subr.mxu0 0.0
      %220 = vmatpush1.msra.mxu0 0.0
      %221 = vmatprep.subr.mxu0 0.0
      %222 = vmatpush1.msra.mxu0 0.0
      %223 = vmatprep.subr.mxu0 0.0
      %224 = vmatpush1.msra.mxu0 0.0
      %225 = vmatprep.subr.mxu0 0.0
      %226 = vmatpush1.msra.mxu0 0.0
      %227 = vmatprep.subr.mxu0 0.0
      %228 = vmatpush1.msra.mxu0 0.0
      %229 = vmatprep.subr.mxu0 0.0
      %230 = vmatpush1.msra.mxu0 0.0
      %231 = vmatprep.mubr.f32.mxu0 0.0
      %232 = vmatmul.mubr.f32.gmra.mrb[0].mxu0 %v162
      %v233 = vpop.f32.mrb[0].mxu0
      %v234 = vadd.f32 0.0, %v233
      %v235 = vpop.f32.mrb[0].mxu0
      %236 = vmatprep.mubr.f32.mxu0 0.0
      %237 = vmatmul.mubr.f32.gmra.mrb[0].mxu0 %v165
      %v238 = vpop.f32.mrb[0].mxu0
      %v239 = vadd.f32 0.0, %v238
      %v240 = vpop.f32.mrb[0].mxu0
      %241 = vdwg.mxu0
      %v242 = vxor.u32 %v234, 2147483648
      %v243 = vxor.u32 %v239, 2147483648
      %v244 = vmul.f32 %v242, 1.442695
      %v245 = vpow.pop %v244
      %v246 = vmul.f32 %v243, 1.442695
      %v247 = vpow.pop %v246
      %v248 = vadd.f32 %v245, 1.0
      %v249 = vadd.f32 %v247, 1.0
      %v250 = vrcp.pop %v248
      %v251 = vmul.f32 1.0, %v250
      %v252 = vrcp.pop %v249
      %v253 = vmul.f32 1.0, %v252
      %255 = vset.pattern.permute.xlu0 0
      %256 = vperm.xlu0 %255, %v251
      %v257 = vpop.permute.xlu0 %256
      %260 = vset.pattern.permute.xlu0 0
      %261 = vperm.xlu0 %260, %v253
      %v262 = vpop.permute.xlu0 %261
      %v264 = vmul.f32 %v144, %v257
      %v265 = vmul.f32 %v145, %v257
      %v266 = vmul.f32 %v146, %v262
      %v267 = vmul.f32 %v147, %v262
      %268 = vst [vmem:[%s143] sm:$0xff] %v264
      %269 = vst [vmem:[%s143 + $0x8] sm:$0xff] %v265
      %270 = vst [vmem:[%s143 + $0x10] sm:$0xff] %v266
      %271 = vst [vmem:[%s143 + $0x18] sm:$0xff] %v267
      %p272 = scmp.lt.s32.totalorder %s13, 1
      %s273 = scalar_select %p272, %s13, 1
      %s274 = smul.addr %s273, 4
      %s275 = smul.addr %s274, 8
      %s276 = scalar_lea.vmem %s2, %s275
      // Predicated region
      $region29: #{sfca_forward.8} parent=27 // pred_check
        %p277 = pneg %p78
      $region30: #{sfca_forward.8} parent=27 // pred_check_branch
        %279 = sbr.rel (%p277) target = $region32
      $region31: #{sfca_forward.8} parent=27 // pred_region
        _
      $region32: #{sfca_forward.8} parent=27 // pred_fallthru
        _
    $region28: #{sfca_forward.8} parent=5 // pred_fallthru
      _
    %p280 = scmp.le.s32.totalorder 2, %s8
    // Predicated region
    $region33: #{sfca_forward.8} parent=5 // pred_check
      %p281 = pneg %p280
    $region34: #{sfca_forward.8} parent=5 // pred_check_branch
      %283 = sbr.rel (%p281) target = $region36
    $region35: #{sfca_forward.8} parent=5 // pred_region
      %s284 = ssub.s32 %s8, 2
      // Predicated region
      $region37: #{sfca_forward.8} parent=35 // pred_check
        %p285 = pneg %p84
      $region38: #{sfca_forward.8} parent=35 // pred_check_branch
        %287 = sbr.rel (%p285) target = $region40
      $region39: #{sfca_forward.8} parent=35 // pred_region
        %p288 = scmp.lt.s32.totalorder %s14, 1
        %s289 = scalar_select %p288, %s14, 1
        %s290 = smul.addr %s289, 4
        %s291 = smul.addr %s290, 8
        %s292 = scalar_lea.vmem %s2, %s291
      $region40: #{sfca_forward.8} parent=35 // pred_fallthru
        _
    $region36: #{sfca_forward.8} parent=5 // pred_fallthru
      _
  $region6: #{sfca_forward.8} parent=0 // loop_footer
    %s12 = sadd.s32 1, %s8
  $region7: #{sfca_forward.8} parent=0 // loop_footer_branch
    %7 = sbr.rel target = $region3
  $region8: #{sfca_forward.8} parent=0 // loop_exit
    _

// kernel: sfca_forward.5
$region0: #{sfca_forward.5}
  #allocation0 [shape = 'u32[]', space=smem, size = 0x4, offset = 0x4, fixed_abs, tag = 'smem constant byte address 0x4 - core index']
  #allocation1 [shape = 'u32[144,128]{1,0:T(1,128)}', space=vmem, size = 0x12000, scoped, tag = 'internal scratch']
  %s0 = inlined_call_operand.vmem [shape: f32[2,16,256], index: 0, kind: input, shape index: {}]
  %s1 = inlined_call_operand.vmem [shape: bf16[48,16], index: 1, kind: input, shape index: {}]
  %s2 = inlined_call_operand.vmem [shape: f32[48,1], index: 2, kind: input, shape index: {}]
  %s3 = inlined_call_operand.vmem [shape: f32[9,32,1], index: 3, kind: input, shape index: {}]
  %s4 = inlined_call_operand.vmem [shape: f32[9,1,256], index: 4, kind: input, shape index: {}]
  %s5 = inlined_call_operand.vmem [shape: f32[16,1], index: 5, kind: input, shape index: {}]
  %s6 = inlined_call_operand.vmem [shape: f32[2,16,256], index: 6, kind: output, shape index: {}]
  %s7 = sld [smem:[#allocation0]]
  $region57: #{sfca_forward.5} parent=0
    _
  %s9 = ssub.s32 1, %s7
  %s10 = scalar_select 0, %s9, %s7
  loop: start=0, step=1, limit=4
  $region2: #{sfca_forward.5} parent=0 // loop_pre_header
    _
  $region3: #{sfca_forward.5} parent=0 // loop_header
    %s12 = sphi 0, %s16
    %p13 = scmp.ge.s32.totalorder %s12, 4
    %s22 = sphi 0, %s24
    %s25 = sphi 0, %s22
    %s26 = sphi 0, %s25
    %s42 = sphi 0, %s26
    %s46 = sphi 0, %s46
    %s48 = sphi 0, %s46
    %s49 = sphi 0, %s48
    %s63 = sphi 0, %s49
    %s67 = sphi 0, %s67
    %s69 = sphi 0, %s67
    %s70 = sphi 0, %s69
    %s84 = sphi 0, %s70
    %s88 = sphi 0, %s88
    %s90 = sphi 0, %s88
    %s91 = sphi 0, %s90
    %s105 = sphi 0, %s91
    %s109 = sphi 0, %s109
    %s111 = sphi 0, %s109
    %s112 = sphi 0, %s111
    %s126 = sphi 0, %s112
    %s130 = sphi 0, %s130
    %s132 = sphi 0, %s130
    %s133 = sphi 0, %s132
    %s147 = sphi 0, %s133
    %s153 = sphi 0, %s155
    %s156 = sphi 0, %s153
    %s157 = sphi 0, %s156
    %s173 = sphi 0, %s157
  $region4: #{sfca_forward.5} parent=0 // loop_header_branch
    %15 = sbr.rel (%p13) target = $region8
  $region5: #{sfca_forward.5} parent=0 // loop_body
    %s17 = ssub.s32 %s12, 1
    %s18 = ssub.s32 %s12, 2
    %s19 = sadd.s32 %s12, 1
    %s20 = ssub.s32 %s12, %s19
    %p21 = scmp.eq.s32.totalorder %s20, 0
    %s23 = sadd.s32 %s22, 1
    %s24 = scalar_select %p21, %s22, %s23
    %p27 = pneg %p21
    %p28 = scmp.eq.s32.totalorder %s12, 1
    %p29 = por %p27, %p28
    %p30 = scmp.ne.s32.totalorder %s22, %s25
    %p31 = scmp.eq.s32.totalorder %s12, 0
    %p32 = por %p30, %p31
    %p33 = scmp.ne.s32.totalorder %s22, %s25
    %p34 = scmp.eq.s32.totalorder %s17, 1
    %p35 = por %p33, %p34
    %p36 = scmp.ne.s32.totalorder %s25, %s26
    %p37 = scmp.eq.s32.totalorder %s17, 0
    %p38 = por %p36, %p37
    %p39 = scmp.ne.s32.totalorder %s25, %s26
    %p40 = scmp.eq.s32.totalorder %s18, 1
    %p41 = por %p39, %p40
    %p43 = scmp.ne.s32.totalorder %s26, %s42
    %p44 = scmp.eq.s32.totalorder %s18, 0
    %p45 = por %p43, %p44
    %s47 = sadd.s32 %s46, 1
    %p50 = scmp.eq.s32.totalorder %s12, 1
    %p51 = scmp.ne.s32.totalorder %s46, %s48
    %p52 = scmp.eq.s32.totalorder %s12, 0
    %p53 = por %p51, %p52
    %p54 = scmp.ne.s32.totalorder %s46, %s48
    %p55 = scmp.eq.s32.totalorder %s17, 1
    %p56 = por %p54, %p55
    %p57 = scmp.ne.s32.totalorder %s48, %s49
    %p58 = scmp.eq.s32.totalorder %s17, 0
    %p59 = por %p57, %p58
    %p60 = scmp.ne.s32.totalorder %s48, %s49
    %p61 = scmp.eq.s32.totalorder %s18, 1
    %p62 = por %p60, %p61
    %p64 = scmp.ne.s32.totalorder %s49, %s63
    %p65 = scmp.eq.s32.totalorder %s18, 0
    %p66 = por %p64, %p65
    %s68 = sadd.s32 %s67, 1
    %p71 = scmp.eq.s32.totalorder %s12, 1
    %p72 = scmp.ne.s32.totalorder %s67, %s69
    %p73 = scmp.eq.s32.totalorder %s12, 0
    %p74 = por %p72, %p73
    %p75 = scmp.ne.s32.totalorder %s67, %s69
    %p76 = scmp.eq.s32.totalorder %s17, 1
    %p77 = por %p75, %p76
    %p78 = scmp.ne.s32.totalorder %s69, %s70
    %p79 = scmp.eq.s32.totalorder %s17, 0
    %p80 = por %p78, %p79
    %p81 = scmp.ne.s32.totalorder %s69, %s70
    %p82 = scmp.eq.s32.totalorder %s18, 1
    %p83 = por %p81, %p82
    %p85 = scmp.ne.s32.totalorder %s70, %s84
    %p86 = scmp.eq.s32.totalorder %s18, 0
    %p87 = por %p85, %p86
    %s89 = sadd.s32 %s88, 1
    %p92 = scmp.eq.s32.totalorder %s12, 1
    %p93 = scmp.ne.s32.totalorder %s88, %s90
    %p94 = scmp.eq.s32.totalorder %s12, 0
    %p95 = por %p93, %p94
    %p96 = scmp.ne.s32.totalorder %s88, %s90
    %p97 = scmp.eq.s32.totalorder %s17, 1
    %p98 = por %p96, %p97
    %p99 = scmp.ne.s32.totalorder %s90, %s91
    %p100 = scmp.eq.s32.totalorder %s17, 0
    %p101 = por %p99, %p100
    %p102 = scmp.ne.s32.totalorder %s90, %s91
    %p103 = scmp.eq.s32.totalorder %s18, 1
    %p104 = por %p102, %p103
    %p106 = scmp.ne.s32.totalorder %s91, %s105
    %p107 = scmp.eq.s32.totalorder %s18, 0
    %p108 = por %p106, %p107
    %s110 = sadd.s32 %s109, 1
    %p113 = scmp.eq.s32.totalorder %s12, 1
    %p114 = scmp.ne.s32.totalorder %s109, %s111
    %p115 = scmp.eq.s32.totalorder %s12, 0
    %p116 = por %p114, %p115
    %p117 = scmp.ne.s32.totalorder %s109, %s111
    %p118 = scmp.eq.s32.totalorder %s17, 1
    %p119 = por %p117, %p118
    %p120 = scmp.ne.s32.totalorder %s111, %s112
    %p121 = scmp.eq.s32.totalorder %s17, 0
    %p122 = por %p120, %p121
    %p123 = scmp.ne.s32.totalorder %s111, %s112
    %p124 = scmp.eq.s32.totalorder %s18, 1
    %p125 = por %p123, %p124
    %p127 = scmp.ne.s32.totalorder %s112, %s126
    %p128 = scmp.eq.s32.totalorder %s18, 0
    %p129 = por %p127, %p128
    %s131 = sadd.s32 %s130, 1
    %p134 = scmp.eq.s32.totalorder %s12, 1
    %p135 = scmp.ne.s32.totalorder %s130, %s132
    %p136 = scmp.eq.s32.totalorder %s12, 0
    %p137 = por %p135, %p136
    %p138 = scmp.ne.s32.totalorder %s130, %s132
    %p139 = scmp.eq.s32.totalorder %s17, 1
    %p140 = por %p138, %p139
    %p141 = scmp.ne.s32.totalorder %s132, %s133
    %p142 = scmp.eq.s32.totalorder %s17, 0
    %p143 = por %p141, %p142
    %p144 = scmp.ne.s32.totalorder %s132, %s133
    %p145 = scmp.eq.s32.totalorder %s18, 1
    %p146 = por %p144, %p145
    %p148 = scmp.ne.s32.totalorder %s133, %s147
    %p149 = scmp.eq.s32.totalorder %s18, 0
    %p150 = por %p148, %p149
    %s151 = ssub.s32 %s12, %s19
    %p152 = scmp.eq.s32.totalorder %s151, 0
    %s154 = sadd.s32 %s153, 1
    %s155 = scalar_select %p152, %s153, %s154
    %p158 = pneg %p152
    %p159 = scmp.eq.s32.totalorder %s12, 1
    %p160 = por %p158, %p159
    %p161 = scmp.ne.s32.totalorder %s153, %s156
    %p162 = scmp.eq.s32.totalorder %s12, 0
    %p163 = por %p161, %p162
    %p164 = scmp.ne.s32.totalorder %s153, %s156
    %p165 = scmp.eq.s32.totalorder %s17, 1
    %p166 = por %p164, %p165
    %p167 = scmp.ne.s32.totalorder %s156, %s157
    %p168 = scmp.eq.s32.totalorder %s17, 0
    %p169 = por %p167, %p168
    %p170 = scmp.ne.s32.totalorder %s156, %s157
    %p171 = scmp.eq.s32.totalorder %s18, 1
    %p172 = por %p170, %p171
    %p174 = scmp.ne.s32.totalorder %s157, %s173
    %p175 = scmp.eq.s32.totalorder %s18, 0
    %p176 = por %p174, %p175
    %p177 = scmp.le.s32.totalorder 1, %s12
    %p178 = scmp.lt.s32.totalorder %s12, 3
    %p179 = pnand %p177, %p178
    %p180 = pneg %p179
    // Predicated region
    $region9: #{sfca_forward.5} parent=5 // pred_check
      _
    $region10: #{sfca_forward.5} parent=5 // pred_check_branch
      %182 = sbr.rel (%p179) target = $region12
    $region11: #{sfca_forward.5} parent=5 // pred_region
      %s183 = ssub.s32 %s12, 1
      // Predicated region
      $region13: #{sfca_forward.5} parent=11 // pred_check
        %p184 = pneg %p59
      $region14: #{sfca_forward.5} parent=11 // pred_check_branch
        %186 = sbr.rel (%p184) target = $region16
      $region15: #{sfca_forward.5} parent=11 // pred_region
        _
      $region16: #{sfca_forward.5} parent=11 // pred_fallthru
        _
      // Predicated region
      $region17: #{sfca_forward.5} parent=11 // pred_check
        %p187 = pneg %p80
      $region18: #{sfca_forward.5} parent=11 // pred_check_branch
        %189 = sbr.rel (%p187) target = $region20
      $region19: #{sfca_forward.5} parent=11 // pred_region
        _
      $region20: #{sfca_forward.5} parent=11 // pred_fallthru
        _
      // Predicated region
      $region21: #{sfca_forward.5} parent=11 // pred_check
        %p190 = pneg %p101
      $region22: #{sfca_forward.5} parent=11 // pred_check_branch
        %192 = sbr.rel (%p190) target = $region24
      $region23: #{sfca_forward.5} parent=11 // pred_region
        _
      $region24: #{sfca_forward.5} parent=11 // pred_fallthru
        _
      // Predicated region
      $region25: #{sfca_forward.5} parent=11 // pred_check
        %p193 = pneg %p122
      $region26: #{sfca_forward.5} parent=11 // pred_check_branch
        %195 = sbr.rel (%p193) target = $region28
      $region27: #{sfca_forward.5} parent=11 // pred_region
        _
      $region28: #{sfca_forward.5} parent=11 // pred_fallthru
        _
      // Predicated region
      $region29: #{sfca_forward.5} parent=11 // pred_check
        %p196 = pneg %p143
      $region30: #{sfca_forward.5} parent=11 // pred_check_branch
        %198 = sbr.rel (%p196) target = $region32
      $region31: #{sfca_forward.5} parent=11 // pred_region
        _
      $region32: #{sfca_forward.5} parent=11 // pred_fallthru
        _
    $region12: #{sfca_forward.5} parent=5 // pred_fallthru
      _
    %p199 = scmp.lt.s32.totalorder %s12, 2
    // Predicated region
    $region33: #{sfca_forward.5} parent=5 // pred_check
      %p200 = pneg %p199
    $region34: #{sfca_forward.5} parent=5 // pred_check_branch
      %202 = sbr.rel (%p200) target = $region36
    $region35: #{sfca_forward.5} parent=5 // pred_region
      // Predicated region
      $region37: #{sfca_forward.5} parent=35 // pred_check
        %p203 = pneg %p32
      $region38: #{sfca_forward.5} parent=35 // pred_check_branch
        %205 = sbr.rel (%p203) target = $region40
      $region39: #{sfca_forward.5} parent=35 // pred_region
        %p206 = scmp.lt.s32.totalorder %s12, 1
        %s207 = scalar_select %p206, %s12, 1
        %s208 = smul.addr %s207, 4
        %s209 = smul.addr %s208, 8
        %s210 = scalar_lea.vmem %s0, %s209
      $region40: #{sfca_forward.5} parent=35 // pred_fallthru
        _
    $region36: #{sfca_forward.5} parent=5 // pred_fallthru
      _
    %p211 = scmp.le.s32.totalorder 1, %s12
    %p212 = scmp.lt.s32.totalorder %s12, 3
    %p213 = pnand %p211, %p212
    %p214 = pneg %p213
    // Predicated region
    $region41: #{sfca_forward.5} parent=5 // pred_check
      _
    $region42: #{sfca_forward.5} parent=5 // pred_check_branch
      %216 = sbr.rel (%p213) target = $region44
    $region43: #{sfca_forward.5} parent=5 // pred_region
      %s217 = ssub.s32 %s12, 1
      %p218 = scmp.lt.s32.totalorder %s17, 1
      %s219 = scalar_select %p218, %s17, 1
      %s220 = smul.addr %s219, 4
      %s221 = smul.addr %s220, 8
      %s222 = scalar_lea.vmem %s0, %s221
      %p223 = pneg %p38
      %p224 = pneg %p35
      %p225 = pneg %p59
      %p226 = pneg %p56
      %p227 = pneg %p80
      %p228 = pneg %p77
      %p229 = pneg %p101
      %p230 = pneg %p98
      %p231 = pneg %p122
      %p232 = pneg %p119
      %p233 = pneg %p143
      %p234 = pneg %p140
      %p235 = pneg %p169
      %p236 = pneg %p166
      %p237 = scmp.lt.s32.totalorder %s17, 1
      %s238 = scalar_select %p237, %s17, 1
      %s239 = smul.addr %s238, 4
      %s240 = smul.addr %s239, 8
      %s241 = scalar_lea.vmem %s6, %s240
      %p242 = scmp.lt.s32.totalorder %s17, 1
      %s243 = scalar_select %p242, %s17, 1
      %s244 = smul.addr %s243, 4
      %s245 = smul.addr %s244, 8
      %s246 = scalar_lea.vmem %s0, %s245
      %p247 = scmp.lt.s32.totalorder %s17, 1
      %s248 = scalar_select %p247, %s17, 1
      %s249 = smul.addr %s248, 4
      %s250 = smul.addr %s249, 8
      %s251 = scalar_lea.vmem %s6, %s250
      %v253 = vld [vmem:[%s246] sm:$0xff]
      %v254 = vld [vmem:[%s246 + $0x8] sm:$0xff]
      %v255 = vld [vmem:[%s246 + $0x10] sm:$0xff]
      %v256 = vld [vmem:[%s246 + $0x18] sm:$0xff]
      %v257 = vpack.c.bf16 %v255, %v253
      %v258 = vpack.c.bf16 %v256, %v254
      %v259 = vld [vmem:[%s1] sm:$0xf]
      %v260 = vld [vmem:[%s1 + $0x4] sm:$0xf]
      %v261 = vld [vmem:[%s1 + $0x8] sm:$0xf]
      %v262 = vld [vmem:[%s1 + $0xc] sm:$0xf]
      %v263 = vld [vmem:[%s1 + $0x10] sm:$0xf]
      %v264 = vld [vmem:[%s1 + $0x14] sm:$0xf]
      %v265 = vld [vmem:[%s2] sm:$0xff]
      %v266 = vld [vmem:[%s2 + $0x8] sm:$0xff]
      %v267 = vld [vmem:[%s2 + $0x10] sm:$0xff]
      %v268 = vld [vmem:[%s2 + $0x18] sm:$0xff]
      %v269 = vld [vmem:[%s2 + $0x20] sm:$0xff]
      %v270 = vld [vmem:[%s2 + $0x28] sm:$0xff]
      %272 = vset.pattern.permute.xlu0 0
      %273 = vperm.xlu0 %272, %v265
      %v274 = vpop.permute.xlu0 %273
      %277 = vset.pattern.permute.xlu0 0
      %278 = vperm.xlu0 %277, %v266
      %v279 = vpop.permute.xlu0 %278
      %282 = vset.pattern.permute.xlu0 0
      %283 = vperm.xlu0 %282, %v267
      %v284 = vpop.permute.xlu0 %283
      %287 = vset.pattern.permute.xlu0 0
      %288 = vperm.xlu0 %287, %v268
      %v289 = vpop.permute.xlu0 %288
      %292 = vset.pattern.permute.xlu0 0
      %293 = vperm.xlu0 %292, %v269
      %v294 = vpop.permute.xlu0 %293
      %297 = vset.pattern.permute.xlu0 0
      %298 = vperm.xlu0 %297, %v270
      %v299 = vpop.permute.xlu0 %298
      %v307 = vunpack.c.l.b16 %v259
      %v308 = vunpack.c.l.b16 %v260
      %v309 = vunpack.c.l.b16 %v261
      %v310 = vunpack.c.l.b16 %v262
      %v311 = vunpack.c.l.b16 %v263
      %v312 = vunpack.c.l.b16 %v264
      %v313 = vpack.c.b16 %v308, %v307
      %v314 = vpack.c.b16 %v310, %v309
      %v315 = vpack.c.b16 %v312, %v311
      %vm316 = vcmask 130048
      %v318 = vsel %vm316, %v313, 0
      %v321 = vsel %vm316, %v314, 0
      %v324 = vsel %vm316, %v315, 0
      %326 = vmatprep.subr.bf16.mxu0 %v258
      %327 = vmatpush1.bf16.msra.mxu0 %v257
      %328 = vmatprep.subr.bf16.mxu0 0
      %329 = vmatpush1.bf16.msra.mxu0 0
      %330 = vmatprep.subr.bf16.mxu0 0
      %331 = vmatpush1.bf16.msra.mxu0 0
      %332 = vmatprep.subr.bf16.mxu0 0
      %333 = vmatpush1.bf16.msra.mxu0 0
      %334 = vmatprep.subr.bf16.mxu0 0
      %335 = vmatpush1.bf16.msra.mxu0 0
      %336 = vmatprep.subr.bf16.mxu0 0
      %337 = vmatpush1.bf16.msra.mxu0 0
      %338 = vmatprep.subr.bf16.mxu0 0
      %339 = vmatpush1.bf16.msra.mxu0 0
      %340 = vmatprep.subr.bf16.mxu0 0
      %341 = vmatpush1.bf16.msra.mxu0 0
      %342 = vmatprep.subr.bf16.mxu0 0
      %343 = vmatpush1.bf16.msra.mxu0 0
      %344 = vmatprep.subr.bf16.mxu0 0
      %345 = vmatpush1.bf16.msra.mxu0 0
      %346 = vmatprep.subr.bf16.mxu0 0
      %347 = vmatpush1.bf16.msra.mxu0 0
      %348 = vmatprep.subr.bf16.mxu0 0
      %349 = vmatpush1.bf16.msra.mxu0 0
      %350 = vmatprep.subr.bf16.mxu0 0
      %351 = vmatpush1.bf16.msra.mxu0 0
      %352 = vmatprep.subr.bf16.mxu0 0
      %353 = vmatpush1.bf16.msra.mxu0 0
      %354 = vmatprep.subr.bf16.mxu0 0
      %355 = vmatpush1.bf16.msra.mxu0 0
      %356 = vmatprep.subr.bf16.mxu0 0
      %357 = vmatpush1.bf16.msra.mxu0 0
      %358 = vmatprep.mubr.bf16.mxu0 0
      %359 = vmatmul.mubr.bf16.gmra.mrb[0].mxu0 %v318
      %v360 = vpop.f32.mrb[0].mxu0
      %v361 = vadd.f32 %v274, %v360
      %v362 = vpop.f32.mrb[0].mxu0
      %v363 = vadd.f32 %v274, %v362
      %v364 = vpop.f32.mrb[0].mxu0
      %v365 = vadd.f32 %v279, %v364
      %v366 = vpop.f32.mrb[0].mxu0
      %v367 = vadd.f32 %v279, %v366
      %368 = vmatprep.mubr.bf16.mxu0 0
      %369 = vmatmul.mubr.bf16.gmra.mrb[0].mxu0 %v321
      %v370 = vpop.f32.mrb[0].mxu0
      %v371 = vadd.f32 %v284, %v370
      %v372 = vpop.f32.mrb[0].mxu0
      %v373 = vadd.f32 %v284, %v372
      %v374 = vpop.f32.mrb[0].mxu0
      %v375 = vadd.f32 %v289, %v374
      %v376 = vpop.f32.mrb[0].mxu0
      %v377 = vadd.f32 %v289, %v376
      %378 = vmatprep.mubr.bf16.mxu0 0
      %379 = vmatmul.mubr.bf16.gmra.mrb[0].mxu0 %v324
      %v380 = vpop.f32.mrb[0].mxu0
      %v381 = vadd.f32 %v294, %v380
      %v382 = vpop.f32.mrb[0].mxu0
      %v383 = vadd.f32 %v294, %v382
      %v384 = vpop.f32.mrb[0].mxu0
      %v385 = vadd.f32 %v299, %v384
      %v386 = vpop.f32.mrb[0].mxu0
      %v387 = vadd.f32 %v299, %v386
      %388 = vdwg.mxu0
      %vm389 = vcmp.gt.f32.partialorder %v361, 0.0
      %vm390 = vcmp.gt.f32.partialorder %v363, 0.0
      %vm391 = vcmp.gt.f32.partialorder %v365, 0.0
      %vm392 = vcmp.gt.f32.partialorder %v367, 0.0
      %vm393 = vcmp.gt.f32.partialorder %v371, 0.0
      %vm394 = vcmp.gt.f32.partialorder %v373, 0.0
      %vm395 = vcmp.gt.f32.partialorder %v375, 0.0
      %vm396 = vcmp.gt.f32.partialorder %v377, 0.0
      %v397 = vmul.f32 %v361, 0.2
      %v398 = vmul.f32 %v363, 0.2
      %v399 = vmul.f32 %v365, 0.2
      %v400 = vmul.f32 %v367, 0.2
      %v401 = vmul.f32 %v371, 0.2
      %v402 = vmul.f32 %v373, 0.2
      %v403 = vmul.f32 %v375, 0.2
      %v404 = vmul.f32 %v377, 0.2
      %v405 = vsel %vm389, %v361, %v397
      %v406 = vsel %vm390, %v363, %v398
      %v407 = vsel %vm391, %v365, %v399
      %v408 = vsel %vm392, %v367, %v400
      %v409 = vsel %vm393, %v371, %v401
      %v410 = vsel %vm394, %v373, %v402
      %v411 = vsel %vm395, %v375, %v403
      %v412 = vsel %vm396, %v377, %v404
      %413 = vrot.lane.b32.xlu0 %v405, 17
      %v414 = vpop.permute.xlu0 %413
      %415 = vrot.lane.b32.xlu0 %v407, 17
      %v416 = vpop.permute.xlu0 %415
      %417 = vrot.lane.b32.xlu0 %v409, 17
      %v418 = vpop.permute.xlu0 %417
      %419 = vrot.lane.b32.xlu0 %v411, 17
      %v420 = vpop.permute.xlu0 %419
      %421 = vrot.lane.b32.xlu0 %v406, 17
      %v422 = vpop.permute.xlu0 %421
      %423 = vrot.lane.b32.xlu0 %v408, 17
      %v424 = vpop.permute.xlu0 %423
      %425 = vrot.lane.b32.xlu0 %v410, 17
      %v426 = vpop.permute.xlu0 %425
      %427 = vrot.lane.b32.xlu0 %v412, 17
      %v428 = vpop.permute.xlu0 %427
      %v429 = vlaneseq
      %v430 = vand.u32 %v429, 127
      %vm431 = vcmp.lt.s32.totalorder %v430, 17
      %v432 = vsel %vm431, %v414, %v422
      %v433 = vsel %vm431, %v416, %v424
      %v434 = vsel %vm431, %v418, %v426
      %v435 = vsel %vm431, %v420, %v428
      %v436 = vsel %vm431, %v422, %v414
      %v437 = vsel %vm431, %v424, %v416
      %v438 = vsel %vm431, %v426, %v418
      %v439 = vsel %vm431, %v428, %v420
      %v440 = vld [vmem:[%s4] sm:$0x3]
      %v442 = vlaneseq
      %v443 = vshrl.u32 %v442, 7
      %v444 = vsub.s32 0, %v443
      %v445 = vrot.slane %v440, %v444
      %v446 = vlaneseq
      %v447 = vshrl.u32 %v446, 7
      %v448 = vsub.s32 1, %v447
      %v449 = vrot.slane %v440, %v448
      %v452 = vmul.f32 %v436, %v445
      %v453 = vmul.f32 %v432, %v449
      %v454 = vmul.f32 %v437, %v445
      %v455 = vmul.f32 %v433, %v449
      %v456 = vmul.f32 %v438, %v445
      %v457 = vmul.f32 %v434, %v449
      %v458 = vmul.f32 %v439, %v445
      %v459 = vmul.f32 %v435, %v449
      %v460 = vld [vmem:[%s3] sm:$0xff]
      %v461 = vld [vmem:[%s3 + $0x8] sm:$0xff]
      %v462 = vld [vmem:[%s3 + $0x10] sm:$0xff]
      %v463 = vld [vmem:[%s3 + $0x18] sm:$0xff]
      %465 = vset.pattern.permute.xlu0 0
      %466 = vperm.xlu0 %465, %v460
      %v467 = vpop.permute.xlu0 %466
      %470 = vset.pattern.permute.xlu0 0
      %471 = vperm.xlu0 %470, %v461
      %v472 = vpop.permute.xlu0 %471
      %475 = vset.pattern.permute.xlu0 0
      %476 = vperm.xlu0 %475, %v462
      %v477 = vpop.permute.xlu0 %476
      %480 = vset.pattern.permute.xlu0 0
      %481 = vperm.xlu0 %480, %v463
      %v482 = vpop.permute.xlu0 %481
      %v484 = vmul.f32 %v452, %v467
      %v485 = vmul.f32 %v453, %v467
      %v486 = vmul.f32 %v454, %v472
      %v487 = vmul.f32 %v455, %v472
      %v488 = vmul.f32 %v456, %v477
      %v489 = vmul.f32 %v457, %v477
      %v490 = vmul.f32 %v458, %v482
      %v491 = vmul.f32 %v459, %v482
      %v492 = vadd.f32 %v484, 0.0
      %v493 = vadd.f32 %v485, 0.0
      %v494 = vadd.f32 %v486, 0.0
      %v495 = vadd.f32 %v487, 0.0
      %v496 = vadd.f32 %v488, 0.0
      %v497 = vadd.f32 %v489, 0.0
      %v498 = vadd.f32 %v490, 0.0
      %v499 = vadd.f32 %v491, 0.0
      %500 = vrot.lane.b32.xlu0 %v405, 16
      %v501 = vpop.permute.xlu0 %500
      %502 = vrot.lane.b32.xlu0 %v407, 16
      %v503 = vpop.permute.xlu0 %502
      %504 = vrot.lane.b32.xlu0 %v409, 16
      %v505 = vpop.permute.xlu0 %504
      %506 = vrot.lane.b32.xlu0 %v411, 16
      %v507 = vpop.permute.xlu0 %506
      %508 = vrot.lane.b32.xlu0 %v406, 16
      %v509 = vpop.permute.xlu0 %508
      %510 = vrot.lane.b32.xlu0 %v408, 16
      %v511 = vpop.permute.xlu0 %510
      %512 = vrot.lane.b32.xlu0 %v410, 16
      %v513 = vpop.permute.xlu0 %512
      %514 = vrot.lane.b32.xlu0 %v412, 16
      %v515 = vpop.permute.xlu0 %514
      %vm516 = vcmp.lt.s32.totalorder %v430, 16
      %v517 = vsel %vm516, %v501, %v509
      %v518 = vsel %vm516, %v503, %v511
      %v519 = vsel %vm516, %v505, %v513
      %v520 = vsel %vm516, %v507, %v515
      %v521 = vsel %vm516, %v509, %v501
      %v522 = vsel %vm516, %v511, %v503
      %v523 = vsel %vm516, %v513, %v505
      %v524 = vsel %vm516, %v515, %v507
      %s525 = scalar_lea.vmem %s4, 2
      %v526 = vld [vmem:[%s525] sm:$0x3]
      %v528 = vlaneseq
      %v529 = vshrl.u32 %v528, 7
      %v530 = vsub.s32 0, %v529
      %v531 = vrot.slane %v526, %v530
      %v532 = vlaneseq
      %v533 = vshrl.u32 %v532, 7
      %v534 = vsub.s32 1, %v533
      %v535 = vrot.slane %v526, %v534
      %v538 = vmul.f32 %v521, %v531
      %v539 = vmul.f32 %v517, %v535
      %v540 = vmul.f32 %v522, %v531
      %v541 = vmul.f32 %v518, %v535
      %v542 = vmul.f32 %v523, %v531
      %v543 = vmul.f32 %v519, %v535
      %v544 = vmul.f32 %v524, %v531
      %v545 = vmul.f32 %v520, %v535
      %s546 = scalar_lea.vmem %s3, 32
      %v547 = vld [vmem:[%s546] sm:$0xff]
      %v548 = vld [vmem:[%s546 + $0x8] sm:$0xff]
      %v549 = vld [vmem:[%s546 + $0x10] sm:$0xff]
      %v550 = vld [vmem:[%s546 + $0x18] sm:$0xff]
      %552 = vset.pattern.permute.xlu0 0
      %553 = vperm.xlu0 %552, %v547
      %v554 = vpop.permute.xlu0 %553
      %557 = vset.pattern.permute.xlu0 0
      %558 = vperm.xlu0 %557, %v548
      %v559 = vpop.permute.xlu0 %558
      %562 = vset.pattern.permute.xlu0 0
      %563 = vperm.xlu0 %562, %v549
      %v564 = vpop.permute.xlu0 %563
      %567 = vset.pattern.permute.xlu0 0
      %568 = vperm.xlu0 %567, %v550
      %v569 = vpop.permute.xlu0 %568
      %v571 = vmul.f32 %v538, %v554
      %v572 = vmul.f32 %v539, %v554
      %v573 = vmul.f32 %v540, %v559
      %v574 = vmul.f32 %v541, %v559
      %v575 = vmul.f32 %v542, %v564
      %v576 = vmul.f32 %v543, %v564
      %v577 = vmul.f32 %v544, %v569
      %v578 = vmul.f32 %v545, %v569
      %v579 = vadd.f32 %v492, %v571
      %v580 = vadd.f32 %v493, %v572
      %v581 = vadd.f32 %v494, %v573
      %v582 = vadd.f32 %v495, %v574
      %v583 = vadd.f32 %v496, %v575
      %v584 = vadd.f32 %v497, %v576
      %v585 = vadd.f32 %v498, %v577
      %v586 = vadd.f32 %v499, %v578
      %587 = vrot.lane.b32.xlu0 %v405, 15
      %v588 = vpop.permute.xlu0 %587
      %589 = vrot.lane.b32.xlu0 %v407, 15
      %v590 = vpop.permute.xlu0 %589
      %591 = vrot.lane.b32.xlu0 %v409, 15
      %v592 = vpop.permute.xlu0 %591
      %593 = vrot.lane.b32.xlu0 %v411, 15
      %v594 = vpop.permute.xlu0 %593
      %595 = vrot.lane.b32.xlu0 %v406, 15
      %v596 = vpop.permute.xlu0 %595
      %597 = vrot.lane.b32.xlu0 %v408, 15
      %v598 = vpop.permute.xlu0 %597
      %599 = vrot.lane.b32.xlu0 %v410, 15
      %v600 = vpop.permute.xlu0 %599
      %601 = vrot.lane.b32.xlu0 %v412, 15
      %v602 = vpop.permute.xlu0 %601
      %vm603 = vcmp.lt.s32.totalorder %v430, 15
      %v604 = vsel %vm603, %v588, %v596
      %v605 = vsel %vm603, %v590, %v598
      %v606 = vsel %vm603, %v592, %v600
      %v607 = vsel %vm603, %v594, %v602
      %v608 = vsel %vm603, %v596, %v588
      %v609 = vsel %vm603, %v598, %v590
      %v610 = vsel %vm603, %v600, %v592
      %v611 = vsel %vm603, %v602, %v594
      %s612 = scalar_lea.vmem %s4, 4
      %v613 = vld [vmem:[%s612] sm:$0x3]
      %v615 = vlaneseq
      %v616 = vshrl.u32 %v615, 7
      %v617 = vsub.s32 0, %v616
      %v618 = vrot.slane %v613, %v617
      %v619 = vlaneseq
      %v620 = vshrl.u32 %v619, 7
      %v621 = vsub.s32 1, %v620
      %v622 = vrot.slane %v613, %v621
      %v625 = vmul.f32 %v608, %v618
      %v626 = vmul.f32 %v604, %v622
      %v627 = vmul.f32 %v609, %v618
      %v628 = vmul.f32 %v605, %v622
      %v629 = vmul.f32 %v610, %v618
      %v630 = vmul.f32 %v606, %v622
      %v631 = vmul.f32 %v611, %v618
      %v632 = vmul.f32 %v607, %v622
      %s633 = scalar_lea.vmem %s3, 64
      %v634 = vld [vmem:[%s633] sm:$0xff]
      %v635 = vld [vmem:[%s633 + $0x8] sm:$0xff]
      %v636 = vld [vmem:[%s633 + $0x10] sm:$0xff]
      %v637 = vld [vmem:[%s633 + $0x18] sm:$0xff]
      %639 = vset.pattern.permute.xlu0 0
      %640 = vperm.xlu0 %639, %v634
      %v641 = vpop.permute.xlu0 %640
      %644 = vset.pattern.permute.xlu0 0
      %645 = vperm.xlu0 %644, %v635
      %v646 = vpop.permute.xlu0 %645
      %649 = vset.pattern.permute.xlu0 0
      %650 = vperm.xlu0 %649, %v636
      %v651 = vpop.permute.xlu0 %650
      %654 = vset.pattern.permute.xlu0 0
      %655 = vperm.xlu0 %654, %v637
      %v656 = vpop.permute.xlu0 %655
      %v658 = vmul.f32 %v625, %v641
      %v659 = vmul.f32 %v626, %v641
      %v660 = vmul.f32 %v627, %v646
      %v661 = vmul.f32 %v628, %v646
      %v662 = vmul.f32 %v629, %v651
      %v663 = vmul.f32 %v630, %v651
      %v664 = vmul.f32 %v631, %v656
      %v665 = vmul.f32 %v632, %v656
      %v666 = vadd.f32 %v579, %v658
      %v667 = vadd.f32 %v580, %v659
      %v668 = vadd.f32 %v581, %v660
      %v669 = vadd.f32 %v582, %v661
      %v670 = vadd.f32 %v583, %v662
      %v671 = vadd.f32 %v584, %v663
      %v672 = vadd.f32 %v585, %v664
      %v673 = vadd.f32 %v586, %v665
      %674 = vrot.lane.b32.xlu0 %v405, 1
      %v675 = vpop.permute.xlu0 %674
      %676 = vrot.lane.b32.xlu0 %v407, 1
      %v677 = vpop.permute.xlu0 %676
      %678 = vrot.lane.b32.xlu0 %v409, 1
      %v679 = vpop.permute.xlu0 %678
      %680 = vrot.lane.b32.xlu0 %v411, 1
      %v681 = vpop.permute.xlu0 %680
      %682 = vrot.lane.b32.xlu0 %v406, 1
      %v683 = vpop.permute.xlu0 %682
      %684 = vrot.lane.b32.xlu0 %v408, 1
      %v685 = vpop.permute.xlu0 %684
      %686 = vrot.lane.b32.xlu0 %v410, 1
      %v687 = vpop.permute.xlu0 %686
      %688 = vrot.lane.b32.xlu0 %v412, 1
      %v689 = vpop.permute.xlu0 %688
      %vm690 = vcmp.lt.s32.totalorder %v430, 1
      %v691 = vsel %vm690, %v675, %v683
      %v692 = vsel %vm690, %v677, %v685
      %v693 = vsel %vm690, %v679, %v687
      %v694 = vsel %vm690, %v681, %v689
      %v695 = vsel %vm690, %v683, %v675
      %v696 = vsel %vm690, %v685, %v677
      %v697 = vsel %vm690, %v687, %v679
      %v698 = vsel %vm690, %v689, %v681
      %s699 = scalar_lea.vmem %s4, 6
      %v700 = vld [vmem:[%s699] sm:$0x3]
      %v702 = vlaneseq
      %v703 = vshrl.u32 %v702, 7
      %v704 = vsub.s32 0, %v703
      %v705 = vrot.slane %v700, %v704
      %v706 = vlaneseq
      %v707 = vshrl.u32 %v706, 7
      %v708 = vsub.s32 1, %v707
      %v709 = vrot.slane %v700, %v708
      %v712 = vmul.f32 %v695, %v705
      %v713 = vmul.f32 %v691, %v709
      %v714 = vmul.f32 %v696, %v705
      %v715 = vmul.f32 %v692, %v709
      %v716 = vmul.f32 %v697, %v705
      %v717 = vmul.f32 %v693, %v709
      %v718 = vmul.f32 %v698, %v705
      %v719 = vmul.f32 %v694, %v709
      %s720 = scalar_lea.vmem %s3, 96
      %v721 = vld [vmem:[%s720] sm:$0xff]
      %v722 = vld [vmem:[%s720 + $0x8] sm:$0xff]
      %v723 = vld [vmem:[%s720 + $0x10] sm:$0xff]
      %v724 = vld [vmem:[%s720 + $0x18] sm:$0xff]
      %726 = vset.pattern.permute.xlu0 0
      %727 = vperm.xlu0 %726, %v721
      %v728 = vpop.permute.xlu0 %727
      %731 = vset.pattern.permute.xlu0 0
      %732 = vperm.xlu0 %731, %v722
      %v733 = vpop.permute.xlu0 %732
      %736 = vset.pattern.permute.xlu0 0
      %737 = vperm.xlu0 %736, %v723
      %v738 = vpop.permute.xlu0 %737
      %741 = vset.pattern.permute.xlu0 0
      %742 = vperm.xlu0 %741, %v724
      %v743 = vpop.permute.xlu0 %742
      %v745 = vmul.f32 %v712, %v728
      %v746 = vmul.f32 %v713, %v728
      %v747 = vmul.f32 %v714, %v733
      %v748 = vmul.f32 %v715, %v733
      %v749 = vmul.f32 %v716, %v738
      %v750 = vmul.f32 %v717, %v738
      %v751 = vmul.f32 %v718, %v743
      %v752 = vmul.f32 %v719, %v743
      %v753 = vadd.f32 %v666, %v745
      %v754 = vadd.f32 %v667, %v746
      %v755 = vadd.f32 %v668, %v747
      %v756 = vadd.f32 %v669, %v748
      %v757 = vadd.f32 %v670, %v749
      %v758 = vadd.f32 %v671, %v750
      %v759 = vadd.f32 %v672, %v751
      %v760 = vadd.f32 %v673, %v752
      %s761 = scalar_lea.vmem %s3, 128
      %v762 = vld [vmem:[%s761] sm:$0xff]
      %v763 = vld [vmem:[%s761 + $0x8] sm:$0xff]
      %v764 = vld [vmem:[%s761 + $0x10] sm:$0xff]
      %v765 = vld [vmem:[%s761 + $0x18] sm:$0xff]
      %767 = vset.pattern.permute.xlu0 0
      %768 = vperm.xlu0 %767, %v762
      %v769 = vpop.permute.xlu0 %768
      %772 = vset.pattern.permute.xlu0 0
      %773 = vperm.xlu0 %772, %v763
      %v774 = vpop.permute.xlu0 %773
      %777 = vset.pattern.permute.xlu0 0
      %778 = vperm.xlu0 %777, %v764
      %v779 = vpop.permute.xlu0 %778
      %782 = vset.pattern.permute.xlu0 0
      %783 = vperm.xlu0 %782, %v765
      %v784 = vpop.permute.xlu0 %783
      %v786 = vmul.f32 %v405, %v769
      %v787 = vmul.f32 %v406, %v769
      %v788 = vmul.f32 %v407, %v774
      %v789 = vmul.f32 %v408, %v774
      %v790 = vmul.f32 %v409, %v779
      %v791 = vmul.f32 %v410, %v779
      %v792 = vmul.f32 %v411, %v784
      %v793 = vmul.f32 %v412, %v784
      %v794 = vadd.f32 %v753, %v786
      %v795 = vadd.f32 %v754, %v787
      %v796 = vadd.f32 %v755, %v788
      %v797 = vadd.f32 %v756, %v789
      %v798 = vadd.f32 %v757, %v790
      %v799 = vadd.f32 %v758, %v791
      %v800 = vadd.f32 %v759, %v792
      %v801 = vadd.f32 %v760, %v793
      %802 = vrot.lane.b32.xlu0 %v405, 127
      %v803 = vpop.permute.xlu0 %802
      %804 = vrot.lane.b32.xlu0 %v407, 127
      %v805 = vpop.permute.xlu0 %804
      %806 = vrot.lane.b32.xlu0 %v409, 127
      %v807 = vpop.permute.xlu0 %806
      %808 = vrot.lane.b32.xlu0 %v411, 127
      %v809 = vpop.permute.xlu0 %808
      %810 = vrot.lane.b32.xlu0 %v406, 127
      %v811 = vpop.permute.xlu0 %810
      %812 = vrot.lane.b32.xlu0 %v408, 127
      %v813 = vpop.permute.xlu0 %812
      %814 = vrot.lane.b32.xlu0 %v410, 127
      %v815 = vpop.permute.xlu0 %814
      %816 = vrot.lane.b32.xlu0 %v412, 127
      %v817 = vpop.permute.xlu0 %816
      %vm818 = vcmp.lt.s32.totalorder %v430, 127
      %v819 = vsel %vm818, %v803, %v811
      %v820 = vsel %vm818, %v805, %v813
      %v821 = vsel %vm818, %v807, %v815
      %v822 = vsel %vm818, %v809, %v817
      %v823 = vsel %vm818, %v811, %v803
      %v824 = vsel %vm818, %v813, %v805
      %v825 = vsel %vm818, %v815, %v807
      %v826 = vsel %vm818, %v817, %v809
      %s827 = scalar_lea.vmem %s4, 10
      %v828 = vld [vmem:[%s827] sm:$0x3]
      %v830 = vlaneseq
      %v831 = vshrl.u32 %v830, 7
      %v832 = vsub.s32 0, %v831
      %v833 = vrot.slane %v828, %v832
      %v834 = vlaneseq
      %v835 = vshrl.u32 %v834, 7
      %v836 = vsub.s32 1, %v835
      %v837 = vrot.slane %v828, %v836
      %v840 = vmul.f32 %v819, %v833
      %v841 = vmul.f32 %v823, %v837
      %v842 = vmul.f32 %v820, %v833
      %v843 = vmul.f32 %v824, %v837
      %v844 = vmul.f32 %v821, %v833
      %v845 = vmul.f32 %v825, %v837
      %v846 = vmul.f32 %v822, %v833
      %v847 = vmul.f32 %v826, %v837
      %s848 = scalar_lea.vmem %s3, 160
      %v849 = vld [vmem:[%s848] sm:$0xff]
      %v850 = vld [vmem:[%s848 + $0x8] sm:$0xff]
      %v851 = vld [vmem:[%s848 + $0x10] sm:$0xff]
      %v852 = vld [vmem:[%s848 + $0x18] sm:$0xff]
      %854 = vset.pattern.permute.xlu0 0
      %855 = vperm.xlu0 %854, %v849
      %v856 = vpop.permute.xlu0 %855
      %859 = vset.pattern.permute.xlu0 0
      %860 = vperm.xlu0 %859, %v850
      %v861 = vpop.permute.xlu0 %860
      %864 = vset.pattern.permute.xlu0 0
      %865 = vperm.xlu0 %864, %v851
      %v866 = vpop.permute.xlu0 %865
      %869 = vset.pattern.permute.xlu0 0
      %870 = vperm.xlu0 %869, %v852
      %v871 = vpop.permute.xlu0 %870
      %v873 = vmul.f32 %v840, %v856
      %v874 = vmul.f32 %v841, %v856
      %v875 = vmul.f32 %v842, %v861
      %v876 = vmul.f32 %v843, %v861
      %v877 = vmul.f32 %v844, %v866
      %v878 = vmul.f32 %v845, %v866
      %v879 = vmul.f32 %v846, %v871
      %v880 = vmul.f32 %v847, %v871
      %v881 = vadd.f32 %v794, %v873
      %v882 = vadd.f32 %v795, %v874
      %v883 = vadd.f32 %v796, %v875
      %v884 = vadd.f32 %v797, %v876
      %v885 = vadd.f32 %v798, %v877
      %v886 = vadd.f32 %v799, %v878
      %v887 = vadd.f32 %v800, %v879
      %v888 = vadd.f32 %v801, %v880
      %889 = vrot.lane.b32.xlu0 %v405, 113
      %v890 = vpop.permute.xlu0 %889
      %891 = vrot.lane.b32.xlu0 %v407, 113
      %v892 = vpop.permute.xlu0 %891
      %893 = vrot.lane.b32.xlu0 %v409, 113
      %v894 = vpop.permute.xlu0 %893
      %895 = vrot.lane.b32.xlu0 %v411, 113
      %v896 = vpop.permute.xlu0 %895
      %897 = vrot.lane.b32.xlu0 %v406, 113
      %v898 = vpop.permute.xlu0 %897
      %899 = vrot.lane.b32.xlu0 %v408, 113
      %v900 = vpop.permute.xlu0 %899
      %901 = vrot.lane.b32.xlu0 %v410, 113
      %v902 = vpop.permute.xlu0 %901
      %903 = vrot.lane.b32.xlu0 %v412, 113
      %v904 = vpop.permute.xlu0 %903
      %vm905 = vcmp.lt.s32.totalorder %v430, 113
      %v906 = vsel %vm905, %v890, %v898
      %v907 = vsel %vm905, %v892, %v900
      %v908 = vsel %vm905, %v894, %v902
      %v909 = vsel %vm905, %v896, %v904
      %v910 = vsel %vm905, %v898, %v890
      %v911 = vsel %vm905, %v900, %v892
      %v912 = vsel %vm905, %v902, %v894
      %v913 = vsel %vm905, %v904, %v896
      %s914 = scalar_lea.vmem %s4, 12
      %v915 = vld [vmem:[%s914] sm:$0x3]
      %v917 = vlaneseq
      %v918 = vshrl.u32 %v917, 7
      %v919 = vsub.s32 0, %v918
      %v920 = vrot.slane %v915, %v919
      %v921 = vlaneseq
      %v922 = vshrl.u32 %v921, 7
      %v923 = vsub.s32 1, %v922
      %v924 = vrot.slane %v915, %v923
      %v927 = vmul.f32 %v906, %v920
      %v928 = vmul.f32 %v910, %v924
      %v929 = vmul.f32 %v907, %v920
      %v930 = vmul.f32 %v911, %v924
      %v931 = vmul.f32 %v908, %v920
      %v932 = vmul.f32 %v912, %v924
      %v933 = vmul.f32 %v909, %v920
      %v934 = vmul.f32 %v913, %v924
      %s935 = scalar_lea.vmem %s3, 192
      %v936 = vld [vmem:[%s935] sm:$0xff]
      %v937 = vld [vmem:[%s935 + $0x8] sm:$0xff]
      %v938 = vld [vmem:[%s935 + $0x10] sm:$0xff]
      %v939 = vld [vmem:[%s935 + $0x18] sm:$0xff]
      %941 = vset.pattern.permute.xlu0 0
      %942 = vperm.xlu0 %941, %v936
      %v943 = vpop.permute.xlu0 %942
      %946 = vset.pattern.permute.xlu0 0
      %947 = vperm.xlu0 %946, %v937
      %v948 = vpop.permute.xlu0 %947
      %951 = vset.pattern.permute.xlu0 0
      %952 = vperm.xlu0 %951, %v938
      %v953 = vpop.permute.xlu0 %952
      %956 = vset.pattern.permute.xlu0 0
      %957 = vperm.xlu0 %956, %v939
      %v958 = vpop.permute.xlu0 %957
      %v960 = vmul.f32 %v927, %v943
      %v961 = vmul.f32 %v928, %v943
      %v962 = vmul.f32 %v929, %v948
      %v963 = vmul.f32 %v930, %v948
      %v964 = vmul.f32 %v931, %v953
      %v965 = vmul.f32 %v932, %v953
      %v966 = vmul.f32 %v933, %v958
      %v967 = vmul.f32 %v934, %v958
      %v968 = vadd.f32 %v881, %v960
      %v969 = vadd.f32 %v882, %v961
      %v970 = vadd.f32 %v883, %v962
      %v971 = vadd.f32 %v884, %v963
      %v972 = vadd.f32 %v885, %v964
      %v973 = vadd.f32 %v886, %v965
      %v974 = vadd.f32 %v887, %v966
      %v975 = vadd.f32 %v888, %v967
      %976 = vrot.lane.b32.xlu0 %v405, 112
      %v977 = vpop.permute.xlu0 %976
      %978 = vrot.lane.b32.xlu0 %v407, 112
      %v979 = vpop.permute.xlu0 %978
      %980 = vrot.lane.b32.xlu0 %v409, 112
      %v981 = vpop.permute.xlu0 %980
      %982 = vrot.lane.b32.xlu0 %v411, 112
      %v983 = vpop.permute.xlu0 %982
      %984 = vrot.lane.b32.xlu0 %v406, 112
      %v985 = vpop.permute.xlu0 %984
      %986 = vrot.lane.b32.xlu0 %v408, 112
      %v987 = vpop.permute.xlu0 %986
      %988 = vrot.lane.b32.xlu0 %v410, 112
      %v989 = vpop.permute.xlu0 %988
      %990 = vrot.lane.b32.xlu0 %v412, 112
      %v991 = vpop.permute.xlu0 %990
      %vm992 = vcmp.lt.s32.totalorder %v430, 112
      %v993 = vsel %vm992, %v977, %v985
      %v994 = vsel %vm992, %v979, %v987
      %v995 = vsel %vm992, %v981, %v989
      %v996 = vsel %vm992, %v983, %v991
      %v997 = vsel %vm992, %v985, %v977
      %v998 = vsel %vm992, %v987, %v979
      %v999 = vsel %vm992, %v989, %v981
      %v1000 = vsel %vm992, %v991, %v983
      %s1001 = scalar_lea.vmem %s4, 14
      %v1002 = vld [vmem:[%s1001] sm:$0x3]
      %v1004 = vlaneseq
      %v1005 = vshrl.u32 %v1004, 7
      %v1006 = vsub.s32 0, %v1005
      %v1007 = vrot.slane %v1002, %v1006
      %v1008 = vlaneseq
      %v1009 = vshrl.u32 %v1008, 7
      %v1010 = vsub.s32 1, %v1009
      %v1011 = vrot.slane %v1002, %v1010
      %v1014 = vmul.f32 %v993, %v1007
      %v1015 = vmul.f32 %v997, %v1011
      %v1016 = vmul.f32 %v994, %v1007
      %v1017 = vmul.f32 %v998, %v1011
      %v1018 = vmul.f32 %v995, %v1007
      %v1019 = vmul.f32 %v999, %v1011
      %v1020 = vmul.f32 %v996, %v1007
      %v1021 = vmul.f32 %v1000, %v1011
      %s1022 = scalar_lea.vmem %s3, 224
      %v1023 = vld [vmem:[%s1022] sm:$0xff]
      %v1024 = vld [vmem:[%s1022 + $0x8] sm:$0xff]
      %v1025 = vld [vmem:[%s1022 + $0x10] sm:$0xff]
      %v1026 = vld [vmem:[%s1022 + $0x18] sm:$0xff]
      %1028 = vset.pattern.permute.xlu0 0
      %1029 = vperm.xlu0 %1028, %v1023
      %v1030 = vpop.permute.xlu0 %1029
      %1033 = vset.pattern.permute.xlu0 0
      %1034 = vperm.xlu0 %1033, %v1024
      %v1035 = vpop.permute.xlu0 %1034
      %1038 = vset.pattern.permute.xlu0 0
      %1039 = vperm.xlu0 %1038, %v1025
      %v1040 = vpop.permute.xlu0 %1039
      %1043 = vset.pattern.permute.xlu0 0
      %1044 = vperm.xlu0 %1043, %v1026
      %v1045 = vpop.permute.xlu0 %1044
      %v1047 = vmul.f32 %v1014, %v1030
      %v1048 = vmul.f32 %v1015, %v1030
      %v1049 = vmul.f32 %v1016, %v1035
      %v1050 = vmul.f32 %v1017, %v1035
      %v1051 = vmul.f32 %v1018, %v1040
      %v1052 = vmul.f32 %v1019, %v1040
      %v1053 = vmul.f32 %v1020, %v1045
      %v1054 = vmul.f32 %v1021, %v1045
      %v1055 = vadd.f32 %v968, %v1047
      %v1056 = vadd.f32 %v969, %v1048
      %v1057 = vadd.f32 %v970, %v1049
      %v1058 = vadd.f32 %v971, %v1050
      %v1059 = vadd.f32 %v972, %v1051
      %v1060 = vadd.f32 %v973, %v1052
      %v1061 = vadd.f32 %v974, %v1053
      %v1062 = vadd.f32 %v975, %v1054
      %1063 = vrot.lane.b32.xlu0 %v405, 111
      %v1064 = vpop.permute.xlu0 %1063
      %1065 = vrot.lane.b32.xlu0 %v407, 111
      %v1066 = vpop.permute.xlu0 %1065
      %1067 = vrot.lane.b32.xlu0 %v409, 111
      %v1068 = vpop.permute.xlu0 %1067
      %1069 = vrot.lane.b32.xlu0 %v411, 111
      %v1070 = vpop.permute.xlu0 %1069
      %1071 = vrot.lane.b32.xlu0 %v406, 111
      %v1072 = vpop.permute.xlu0 %1071
      %1073 = vrot.lane.b32.xlu0 %v408, 111
      %v1074 = vpop.permute.xlu0 %1073
      %1075 = vrot.lane.b32.xlu0 %v410, 111
      %v1076 = vpop.permute.xlu0 %1075
      %1077 = vrot.lane.b32.xlu0 %v412, 111
      %v1078 = vpop.permute.xlu0 %1077
      %vm1079 = vcmp.lt.s32.totalorder %v430, 111
      %v1080 = vsel %vm1079, %v1064, %v1072
      %v1081 = vsel %vm1079, %v1066, %v1074
      %v1082 = vsel %vm1079, %v1068, %v1076
      %v1083 = vsel %vm1079, %v1070, %v1078
      %v1084 = vsel %vm1079, %v1072, %v1064
      %v1085 = vsel %vm1079, %v1074, %v1066
      %v1086 = vsel %vm1079, %v1076, %v1068
      %v1087 = vsel %vm1079, %v1078, %v1070
      %s1088 = scalar_lea.vmem %s4, 16
      %v1089 = vld [vmem:[%s1088] sm:$0x3]
      %v1091 = vlaneseq
      %v1092 = vshrl.u32 %v1091, 7
      %v1093 = vsub.s32 0, %v1092
      %v1094 = vrot.slane %v1089, %v1093
      %v1095 = vlaneseq
      %v1096 = vshrl.u32 %v1095, 7
      %v1097 = vsub.s32 1, %v1096
      %v1098 = vrot.slane %v1089, %v1097
      %v1101 = vmul.f32 %v1080, %v1094
      %v1102 = vmul.f32 %v1084, %v1098
      %v1103 = vmul.f32 %v1081, %v1094
      %v1104 = vmul.f32 %v1085, %v1098
      %v1105 = vmul.f32 %v1082, %v1094
      %v1106 = vmul.f32 %v1086, %v1098
      %v1107 = vmul.f32 %v1083, %v1094
      %v1108 = vmul.f32 %v1087, %v1098
      %s1109 = scalar_lea.vmem %s3, 256
      %v1110 = vld [vmem:[%s1109] sm:$0xff]
      %v1111 = vld [vmem:[%s1109 + $0x8] sm:$0xff]
      %v1112 = vld [vmem:[%s1109 + $0x10] sm:$0xff]
      %v1113 = vld [vmem:[%s1109 + $0x18] sm:$0xff]
      %1115 = vset.pattern.permute.xlu0 0
      %1116 = vperm.xlu0 %1115, %v1110
      %v1117 = vpop.permute.xlu0 %1116
      %1120 = vset.pattern.permute.xlu0 0
      %1121 = vperm.xlu0 %1120, %v1111
      %v1122 = vpop.permute.xlu0 %1121
      %1125 = vset.pattern.permute.xlu0 0
      %1126 = vperm.xlu0 %1125, %v1112
      %v1127 = vpop.permute.xlu0 %1126
      %1130 = vset.pattern.permute.xlu0 0
      %1131 = vperm.xlu0 %1130, %v1113
      %v1132 = vpop.permute.xlu0 %1131
      %v1134 = vmul.f32 %v1101, %v1117
      %v1135 = vmul.f32 %v1102, %v1117
      %v1136 = vmul.f32 %v1103, %v1122
      %v1137 = vmul.f32 %v1104, %v1122
      %v1138 = vmul.f32 %v1105, %v1127
      %v1139 = vmul.f32 %v1106, %v1127
      %v1140 = vmul.f32 %v1107, %v1132
      %v1141 = vmul.f32 %v1108, %v1132
      %v1142 = vadd.f32 %v1055, %v1134
      %v1143 = vadd.f32 %v1056, %v1135
      %v1144 = vadd.f32 %v1057, %v1136
      %v1145 = vadd.f32 %v1058, %v1137
      %v1146 = vadd.f32 %v1059, %v1138
      %v1147 = vadd.f32 %v1060, %v1139
      %v1148 = vadd.f32 %v1061, %v1140
      %v1149 = vadd.f32 %v1062, %v1141
      %v1150 = vadd.f32 %v1142, %v1146
      %v1151 = vadd.f32 %v1143, %v1147
      %v1152 = vadd.f32 %v1144, %v1148
      %v1153 = vadd.f32 %v1145, %v1149
      %v1154 = vld [vmem:[%s5] sm:$0xff]
      %v1155 = vld [vmem:[%s5 + $0x8] sm:$0xff]
      %1157 = vset.pattern.permute.xlu0 0
      %1158 = vperm.xlu0 %1157, %v1154
      %v1159 = vpop.permute.xlu0 %1158
      %1162 = vset.pattern.permute.xlu0 0
      %1163 = vperm.xlu0 %1162, %v1155
      %v1164 = vpop.permute.xlu0 %1163
      %v1166 = vadd.f32 %v1150, %v1159
      %v1167 = vadd.f32 %v1151, %v1159
      %v1168 = vadd.f32 %v1152, %v1164
      %v1169 = vadd.f32 %v1153, %v1164
      %vm1170 = vcmp.gt.f32.partialorder %v1166, 0.0
      %vm1171 = vcmp.gt.f32.partialorder %v1167, 0.0
      %vm1172 = vcmp.gt.f32.partialorder %v1168, 0.0
      %vm1173 = vcmp.gt.f32.partialorder %v1169, 0.0
      %v1174 = vmul.f32 %v1166, 0.2
      %v1175 = vmul.f32 %v1167, 0.2
      %v1176 = vmul.f32 %v1168, 0.2
      %v1177 = vmul.f32 %v1169, 0.2
      %v1178 = vsel %vm1170, %v1166, %v1174
      %v1179 = vsel %vm1171, %v1167, %v1175
      %v1180 = vsel %vm1172, %v1168, %v1176
      %v1181 = vsel %vm1173, %v1169, %v1177
      %v1182 = vadd.f32 %v1178, %v381
      %v1183 = vadd.f32 %v1179, %v383
      %v1184 = vadd.f32 %v1180, %v385
      %v1185 = vadd.f32 %v1181, %v387
      %1186 = vst [vmem:[%s251] sm:$0xff] %v1182
      %1187 = vst [vmem:[%s251 + $0x8] sm:$0xff] %v1183
      %1188 = vst [vmem:[%s251 + $0x10] sm:$0xff] %v1184
      %1189 = vst [vmem:[%s251 + $0x18] sm:$0xff] %v1185
      %p1190 = scmp.lt.s32.totalorder %s17, 1
      %s1191 = scalar_select %p1190, %s17, 1
      %s1192 = smul.addr %s1191, 4
      %s1193 = smul.addr %s1192, 8
      %s1194 = scalar_lea.vmem %s6, %s1193
      // Predicated region
      $region45: #{sfca_forward.5} parent=43 // pred_check
        %p1195 = pneg %p166
      $region46: #{sfca_forward.5} parent=43 // pred_check_branch
        %1197 = sbr.rel (%p1195) target = $region48
      $region47: #{sfca_forward.5} parent=43 // pred_region
        _
      $region48: #{sfca_forward.5} parent=43 // pred_fallthru
        _
    $region44: #{sfca_forward.5} parent=5 // pred_fallthru
      _
    %p1198 = scmp.le.s32.totalorder 2, %s12
    // Predicated region
    $region49: #{sfca_forward.5} parent=5 // pred_check
      %p1199 = pneg %p1198
    $region50: #{sfca_forward.5} parent=5 // pred_check_branch
      %1201 = sbr.rel (%p1199) target = $region52
    $region51: #{sfca_forward.5} parent=5 // pred_region
      %s1202 = ssub.s32 %s12, 2
      // Predicated region
      $region53: #{sfca_forward.5} parent=51 // pred_check
        %p1203 = pneg %p172
      $region54: #{sfca_forward.5} parent=51 // pred_check_branch
        %1205 = sbr.rel (%p1203) target = $region56
      $region55: #{sfca_forward.5} parent=51 // pred_region
        %p1206 = scmp.lt.s32.totalorder %s18, 1
        %s1207 = scalar_select %p1206, %s18, 1
        %s1208 = smul.addr %s1207, 4
        %s1209 = smul.addr %s1208, 8
        %s1210 = scalar_lea.vmem %s6, %s1209
      $region56: #{sfca_forward.5} parent=51 // pred_fallthru
        _
    $region52: #{sfca_forward.5} parent=5 // pred_fallthru
      _
  $region6: #{sfca_forward.5} parent=0 // loop_footer
    %s16 = sadd.s32 1, %s12
  $region7: #{sfca_forward.5} parent=0 // loop_footer_branch
    %11 = sbr.rel target = $region3
  $region8: #{sfca_forward.5} parent=0 // loop_exit
    _

// kernel: sfca_forward.9
$region0: #{sfca_forward.9}
  #allocation0 [shape = 'u32[]', space=smem, size = 0x4, offset = 0x4, fixed_abs, tag = 'smem constant byte address 0x4 - core index']
  #allocation1 [shape = 'u32[144,128]{1,0:T(1,128)}', space=vmem, size = 0x12000, scoped, tag = 'internal scratch']
  %s0 = inlined_call_operand.vmem [shape: f32[64,128], index: 0, kind: input, shape index: {}]
  %s1 = inlined_call_operand.vmem [shape: f32[128,128], index: 1, kind: input, shape index: {}]
  %s2 = inlined_call_operand.vmem [shape: f32[1,128], index: 2, kind: input, shape index: {}]
  %s3 = inlined_call_operand.vmem [shape: f32[1,128], index: 3, kind: input, shape index: {}]
  %s4 = inlined_call_operand.vmem [shape: f32[64,128], index: 4, kind: output, shape index: {}]
  %s5 = sld [smem:[#allocation0]]
  $region26: #{sfca_forward.9} parent=0
    _
  %s7 = ssub.s32 1, %s5
  %s8 = scalar_select 0, %s7, %s5
  // Predicated region
  $region2: #{sfca_forward.9} parent=0 // pred_check
    _
  $region3: #{sfca_forward.9} parent=0 // pred_check_branch
    %10 = sbr.rel (0) target = $region5
  $region4: #{sfca_forward.9} parent=0 // pred_region
    _
  $region5: #{sfca_forward.9} parent=0 // pred_fallthru
    _
  // Predicated region
  $region6: #{sfca_forward.9} parent=0 // pred_check
    _
  $region7: #{sfca_forward.9} parent=0 // pred_check_branch
    %12 = sbr.rel (0) target = $region9
  $region8: #{sfca_forward.9} parent=0 // pred_region
    _
  $region9: #{sfca_forward.9} parent=0 // pred_fallthru
    _
  // Predicated region
  $region10: #{sfca_forward.9} parent=0 // pred_check
    _
  $region11: #{sfca_forward.9} parent=0 // pred_check_branch
    %14 = sbr.rel (0) target = $region13
  $region12: #{sfca_forward.9} parent=0 // pred_region
    _
  $region13: #{sfca_forward.9} parent=0 // pred_fallthru
    _
  // Predicated region
  $region14: #{sfca_forward.9} parent=0 // pred_check
    _
  $region15: #{sfca_forward.9} parent=0 // pred_check_branch
    %16 = sbr.rel (0) target = $region17
  $region16: #{sfca_forward.9} parent=0 // pred_region
    _
  $region17: #{sfca_forward.9} parent=0 // pred_fallthru
    _
  %v17 = vld [vmem:[%s0] sm:$0xff]
  %v18 = vld [vmem:[%s0 + $0x8] sm:$0xff]
  %v19 = vld [vmem:[%s0 + $0x10] sm:$0xff]
  %v20 = vld [vmem:[%s0 + $0x18] sm:$0xff]
  %v21 = vld [vmem:[%s0 + $0x20] sm:$0xff]
  %v22 = vld [vmem:[%s0 + $0x28] sm:$0xff]
  %v23 = vld [vmem:[%s0 + $0x30] sm:$0xff]
  %v24 = vld [vmem:[%s0 + $0x38] sm:$0xff]
  %v25 = vld [vmem:[%s1] sm:$0xff]
  %v26 = vld [vmem:[%s1 + $0x8] sm:$0xff]
  %v27 = vld [vmem:[%s1 + $0x10] sm:$0xff]
  %v28 = vld [vmem:[%s1 + $0x18] sm:$0xff]
  %v29 = vld [vmem:[%s1 + $0x20] sm:$0xff]
  %v30 = vld [vmem:[%s1 + $0x28] sm:$0xff]
  %v31 = vld [vmem:[%s1 + $0x30] sm:$0xff]
  %v32 = vld [vmem:[%s1 + $0x38] sm:$0xff]
  %v33 = vld [vmem:[%s1 + $0x40] sm:$0xff]
  %v34 = vld [vmem:[%s1 + $0x48] sm:$0xff]
  %v35 = vld [vmem:[%s1 + $0x50] sm:$0xff]
  %v36 = vld [vmem:[%s1 + $0x58] sm:$0xff]
  %v37 = vld [vmem:[%s1 + $0x60] sm:$0xff]
  %v38 = vld [vmem:[%s1 + $0x68] sm:$0xff]
  %v39 = vld [vmem:[%s1 + $0x70] sm:$0xff]
  %v40 = vld [vmem:[%s1 + $0x78] sm:$0xff]
  %41 = vmatprep.subr.mxu0 0.0
  %v42 = vand.u32 %v25, 4294901760
  %43 = vmatpush1.msra.mxu0 %v42
  %44 = vmatprep.subr.mxu0 0.0
  %v45 = vand.u32 %v26, 4294901760
  %46 = vmatpush1.msra.mxu0 %v45
  %47 = vmatprep.subr.mxu0 0.0
  %v48 = vand.u32 %v27, 4294901760
  %49 = vmatpush1.msra.mxu0 %v48
  %50 = vmatprep.subr.mxu0 0.0
  %v51 = vand.u32 %v28, 4294901760
  %52 = vmatpush1.msra.mxu0 %v51
  %53 = vmatprep.subr.mxu0 0.0
  %v54 = vand.u32 %v29, 4294901760
  %55 = vmatpush1.msra.mxu0 %v54
  %56 = vmatprep.subr.mxu0 0.0
  %v57 = vand.u32 %v30, 4294901760
  %58 = vmatpush1.msra.mxu0 %v57
  %59 = vmatprep.subr.mxu0 0.0
  %v60 = vand.u32 %v31, 4294901760
  %61 = vmatpush1.msra.mxu0 %v60
  %62 = vmatprep.subr.mxu0 0.0
  %v63 = vand.u32 %v32, 4294901760
  %64 = vmatpush1.msra.mxu0 %v63
  %65 = vmatprep.subr.mxu0 0.0
  %v66 = vand.u32 %v33, 4294901760
  %67 = vmatpush1.msra.mxu0 %v66
  %68 = vmatprep.subr.mxu0 0.0
  %v69 = vand.u32 %v34, 4294901760
  %70 = vmatpush1.msra.mxu0 %v69
  %71 = vmatprep.subr.mxu0 0.0
  %v72 = vand.u32 %v35, 4294901760
  %73 = vmatpush1.msra.mxu0 %v72
  %74 = vmatprep.subr.mxu0 0.0
  %v75 = vand.u32 %v36, 4294901760
  %76 = vmatpush1.msra.mxu0 %v75
  %77 = vmatprep.subr.mxu0 0.0
  %v78 = vand.u32 %v37, 4294901760
  %79 = vmatpush1.msra.mxu0 %v78
  %80 = vmatprep.subr.mxu0 0.0
  %v81 = vand.u32 %v38, 4294901760
  %82 = vmatpush1.msra.mxu0 %v81
  %83 = vmatprep.subr.mxu0 0.0
  %v84 = vand.u32 %v39, 4294901760
  %85 = vmatpush1.msra.mxu0 %v84
  %86 = vmatprep.subr.mxu0 0.0
  %v87 = vand.u32 %v40, 4294901760
  %88 = vmatpush1.msra.mxu0 %v87
  %89 = vmatprep.subr.mxu0 0.0
  %90 = vmatpush1.msra.mxu0 0.0
  %91 = vmatprep.subr.mxu0 0.0
  %92 = vmatpush1.msra.mxu0 0.0
  %93 = vmatprep.subr.mxu0 0.0
  %94 = vmatpush1.msra.mxu0 0.0
  %95 = vmatprep.subr.mxu0 0.0
  %96 = vmatpush1.msra.mxu0 0.0
  %97 = vmatprep.subr.mxu0 0.0
  %98 = vmatpush1.msra.mxu0 0.0
  %99 = vmatprep.subr.mxu0 0.0
  %100 = vmatpush1.msra.mxu0 0.0
  %101 = vmatprep.subr.mxu0 0.0
  %102 = vmatpush1.msra.mxu0 0.0
  %103 = vmatprep.subr.mxu0 0.0
  %104 = vmatpush1.msra.mxu0 0.0
  %105 = vmatprep.subr.mxu0 0.0
  %106 = vmatpush1.msra.mxu0 0.0
  %107 = vmatprep.subr.mxu0 0.0
  %108 = vmatpush1.msra.mxu0 0.0
  %109 = vmatprep.subr.mxu0 0.0
  %110 = vmatpush1.msra.mxu0 0.0
  %111 = vmatprep.subr.mxu0 0.0
  %112 = vmatpush1.msra.mxu0 0.0
  %113 = vmatprep.subr.mxu0 0.0
  %114 = vmatpush1.msra.mxu0 0.0
  %115 = vmatprep.subr.mxu0 0.0
  %116 = vmatpush1.msra.mxu0 0.0
  %117 = vmatprep.subr.mxu0 0.0
  %118 = vmatpush1.msra.mxu0 0.0
  %119 = vmatprep.subr.mxu0 0.0
  %120 = vmatpush1.msra.mxu0 0.0
  %121 = vmatprep.mubr.f32.mxu0 0.0
  %v122 = vand.u32 %v17, 4294901760
  %v123 = vsub.f32 %v17, %v122
  %v124 = vand.u32 %v123, 4294901760
  %v125 = vsub.f32 %v123, %v124
  %v126 = vand.u32 %v125, 4294901760
  %127 = vmatmul.mubr.f32.gmra.mrb[0].mxu0 %v126
  %v128 = vpop.f32.mrb[0].mxu0
  %v129 = vadd.f32 0.0, %v128
  %v130 = vpop.f32.mrb[0].mxu0
  %131 = vmatprep.mubr.f32.mxu0 0.0
  %v132 = vand.u32 %v18, 4294901760
  %v133 = vsub.f32 %v18, %v132
  %v134 = vand.u32 %v133, 4294901760
  %v135 = vsub.f32 %v133, %v134
  %v136 = vand.u32 %v135, 4294901760
  %137 = vmatmul.mubr.f32.gmra.mrb[0].mxu0 %v136
  %v138 = vpop.f32.mrb[0].mxu0
  %v139 = vadd.f32 0.0, %v138
  %v140 = vpop.f32.mrb[0].mxu0
  %141 = vmatprep.mubr.f32.mxu0 0.0
  %v142 = vand.u32 %v19, 4294901760
  %v143 = vsub.f32 %v19, %v142
  %v144 = vand.u32 %v143, 4294901760
  %v145 = vsub.f32 %v143, %v144
  %v146 = vand.u32 %v145, 4294901760
  %147 = vmatmul.mubr.f32.gmra.mrb[0].mxu0 %v146
  %v148 = vpop.f32.mrb[0].mxu0
  %v149 = vadd.f32 0.0, %v148
  %v150 = vpop.f32.mrb[0].mxu0
  %151 = vmatprep.mubr.f32.mxu0 0.0
  %v152 = vand.u32 %v20, 4294901760
  %v153 = vsub.f32 %v20, %v152
  %v154 = vand.u32 %v153, 4294901760
  %v155 = vsub.f32 %v153, %v154
  %v156 = vand.u32 %v155, 4294901760
  %157 = vmatmul.mubr.f32.gmra.mrb[0].mxu0 %v156
  %v158 = vpop.f32.mrb[0].mxu0
  %v159 = vadd.f32 0.0, %v158
  %v160 = vpop.f32.mrb[0].mxu0
  %161 = vmatprep.mubr.f32.mxu0 0.0
  %v162 = vand.u32 %v21, 4294901760
  %v163 = vsub.f32 %v21, %v162
  %v164 = vand.u32 %v163, 4294901760
  %v165 = vsub.f32 %v163, %v164
  %v166 = vand.u32 %v165, 4294901760
  %167 = vmatmul.mubr.f32.gmra.mrb[0].mxu0 %v166
  %v168 = vpop.f32.mrb[0].mxu0
  %v169 = vadd.f32 0.0, %v168
  %v170 = vpop.f32.mrb[0].mxu0
  %171 = vmatprep.mubr.f32.mxu0 0.0
  %v172 = vand.u32 %v22, 4294901760
  %v173 = vsub.f32 %v22, %v172
  %v174 = vand.u32 %v173, 4294901760
  %v175 = vsub.f32 %v173, %v174
  %v176 = vand.u32 %v175, 4294901760
  %177 = vmatmul.mubr.f32.gmra.mrb[0].mxu0 %v176
  %v178 = vpop.f32.mrb[0].mxu0
  %v179 = vadd.f32 0.0, %v178
  %v180 = vpop.f32.mrb[0].mxu0
  %181 = vmatprep.mubr.f32.mxu0 0.0
  %v182 = vand.u32 %v23, 4294901760
  %v183 = vsub.f32 %v23, %v182
  %v184 = vand.u32 %v183, 4294901760
  %v185 = vsub.f32 %v183, %v184
  %v186 = vand.u32 %v185, 4294901760
  %187 = vmatmul.mubr.f32.gmra.mrb[0].mxu0 %v186
  %v188 = vpop.f32.mrb[0].mxu0
  %v189 = vadd.f32 0.0, %v188
  %v190 = vpop.f32.mrb[0].mxu0
  %191 = vmatprep.mubr.f32.mxu0 0.0
  %v192 = vand.u32 %v24, 4294901760
  %v193 = vsub.f32 %v24, %v192
  %v194 = vand.u32 %v193, 4294901760
  %v195 = vsub.f32 %v193, %v194
  %v196 = vand.u32 %v195, 4294901760
  %197 = vmatmul.mubr.f32.gmra.mrb[0].mxu0 %v196
  %v198 = vpop.f32.mrb[0].mxu0
  %v199 = vadd.f32 0.0, %v198
  %v200 = vpop.f32.mrb[0].mxu0
  %201 = vdwg.mxu0
  %202 = vmatprep.subr.mxu0 0.0
  %v203 = vand.u32 %v25, 4294901760
  %v204 = vsub.f32 %v25, %v203
  %v205 = vand.u32 %v204, 4294901760
  %v206 = vsub.f32 %v204, %v205
  %v207 = vand.u32 %v206, 4294901760
  %208 = vmatpush1.msra.mxu0 %v207
  %209 = vmatprep.subr.mxu0 0.0
  %v210 = vand.u32 %v26, 4294901760
  %v211 = vsub.f32 %v26, %v210
  %v212 = vand.u32 %v211, 4294901760
  %v213 = vsub.f32 %v211, %v212
  %v214 = vand.u32 %v213, 4294901760
  %215 = vmatpush1.msra.mxu0 %v214
  %216 = vmatprep.subr.mxu0 0.0
  %v217 = vand.u32 %v27, 4294901760
  %v218 = vsub.f32 %v27, %v217
  %v219 = vand.u32 %v218, 4294901760
  %v220 = vsub.f32 %v218, %v219
  %v221 = vand.u32 %v220, 4294901760
  %222 = vmatpush1.msra.mxu0 %v221
  %223 = vmatprep.subr.mxu0 0.0
  %v224 = vand.u32 %v28, 4294901760
  %v225 = vsub.f32 %v28, %v224
  %v226 = vand.u32 %v225, 4294901760
  %v227 = vsub.f32 %v225, %v226
  %v228 = vand.u32 %v227, 4294901760
  %229 = vmatpush1.msra.mxu0 %v228
  %230 = vmatprep.subr.mxu0 0.0
  %v231 = vand.u32 %v29, 4294901760
  %v232 = vsub.f32 %v29, %v231
  %v233 = vand.u32 %v232, 4294901760
  %v234 = vsub.f32 %v232, %v233
  %v235 = vand.u32 %v234, 4294901760
  %236 = vmatpush1.msra.mxu0 %v235
  %237 = vmatprep.subr.mxu0 0.0
  %v238 = vand.u32 %v30, 4294901760
  %v239 = vsub.f32 %v30, %v238
  %v240 = vand.u32 %v239, 4294901760
  %v241 = vsub.f32 %v239, %v240
  %v242 = vand.u32 %v241, 4294901760
  %243 = vmatpush1.msra.mxu0 %v242
  %244 = vmatprep.subr.mxu0 0.0
  %v245 = vand.u32 %v31, 4294901760
  %v246 = vsub.f32 %v31, %v245
  %v247 = vand.u32 %v246, 4294901760
  %v248 = vsub.f32 %v246, %v247
  %v249 = vand.u32 %v248, 4294901760
  %250 = vmatpush1.msra.mxu0 %v249
  %251 = vmatprep.subr.mxu0 0.0
  %v252 = vand.u32 %v32, 4294901760
  %v253 = vsub.f32 %v32, %v252
  %v254 = vand.u32 %v253, 4294901760
  %v255 = vsub.f32 %v253, %v254
  %v256 = vand.u32 %v255, 4294901760
  %257 = vmatpush1.msra.mxu0 %v256
  %258 = vmatprep.subr.mxu0 0.0
  %v259 = vand.u32 %v33, 4294901760
  %v260 = vsub.f32 %v33, %v259
  %v261 = vand.u32 %v260, 4294901760
  %v262 = vsub.f32 %v260, %v261
  %v263 = vand.u32 %v262, 4294901760
  %264 = vmatpush1.msra.mxu0 %v263
  %265 = vmatprep.subr.mxu0 0.0
  %v266 = vand.u32 %v34, 4294901760
  %v267 = vsub.f32 %v34, %v266
  %v268 = vand.u32 %v267, 4294901760
  %v269 = vsub.f32 %v267, %v268
  %v270 = vand.u32 %v269, 4294901760
  %271 = vmatpush1.msra.mxu0 %v270
  %272 = vmatprep.subr.mxu0 0.0
  %v273 = vand.u32 %v35, 4294901760
  %v274 = vsub.f32 %v35, %v273
  %v275 = vand.u32 %v274, 4294901760
  %v276 = vsub.f32 %v274, %v275
  %v277 = vand.u32 %v276, 4294901760
  %278 = vmatpush1.msra.mxu0 %v277
  %279 = vmatprep.subr.mxu0 0.0
  %v280 = vand.u32 %v36, 4294901760
  %v281 = vsub.f32 %v36, %v280
  %v282 = vand.u32 %v281, 4294901760
  %v283 = vsub.f32 %v281, %v282
  %v284 = vand.u32 %v283, 4294901760
  %285 = vmatpush1.msra.mxu0 %v284
  %286 = vmatprep.subr.mxu0 0.0
  %v287 = vand.u32 %v37, 4294901760
  %v288 = vsub.f32 %v37, %v287
  %v289 = vand.u32 %v288, 4294901760
  %v290 = vsub.f32 %v288, %v289
  %v291 = vand.u32 %v290, 4294901760
  %292 = vmatpush1.msra.mxu0 %v291
  %293 = vmatprep.subr.mxu0 0.0
  %v294 = vand.u32 %v38, 4294901760
  %v295 = vsub.f32 %v38, %v294
  %v296 = vand.u32 %v295, 4294901760
  %v297 = vsub.f32 %v295, %v296
  %v298 = vand.u32 %v297, 4294901760
  %299 = vmatpush1.msra.mxu0 %v298
  %300 = vmatprep.subr.mxu0 0.0
  %v301 = vand.u32 %v39, 4294901760
  %v302 = vsub.f32 %v39, %v301
  %v303 = vand.u32 %v302, 4294901760
  %v304 = vsub.f32 %v302, %v303
  %v305 = vand.u32 %v304, 4294901760
  %306 = vmatpush1.msra.mxu0 %v305
  %307 = vmatprep.subr.mxu0 0.0
  %v308 = vand.u32 %v40, 4294901760
  %v309 = vsub.f32 %v40, %v308
  %v310 = vand.u32 %v309, 4294901760
  %v311 = vsub.f32 %v309, %v310
  %v312 = vand.u32 %v311, 4294901760
  %313 = vmatpush1.msra.mxu0 %v312
  %314 = vmatprep.subr.mxu0 0.0
  %315 = vmatpush1.msra.mxu0 0.0
  %316 = vmatprep.subr.mxu0 0.0
  %317 = vmatpush1.msra.mxu0 0.0
  %318 = vmatprep.subr.mxu0 0.0
  %319 = vmatpush1.msra.mxu0 0.0
  %320 = vmatprep.subr.mxu0 0.0
  %321 = vmatpush1.msra.mxu0 0.0
  %322 = vmatprep.subr.mxu0 0.0
  %323 = vmatpush1.msra.mxu0 0.0
  %324 = vmatprep.subr.mxu0 0.0
  %325 = vmatpush1.msra.mxu0 0.0
  %326 = vmatprep.subr.mxu0 0.0
  %327 = vmatpush1.msra.mxu0 0.0
  %328 = vmatprep.subr.mxu0 0.0
  %329 = vmatpush1.msra.mxu0 0.0
  %330 = vmatprep.subr.mxu0 0.0
  %331 = vmatpush1.msra.mxu0 0.0
  %332 = vmatprep.subr.mxu0 0.0
  %333 = vmatpush1.msra.mxu0 0.0
  %334 = vmatprep.subr.mxu0 0.0
  %335 = vmatpush1.msra.mxu0 0.0
  %336 = vmatprep.subr.mxu0 0.0
  %337 = vmatpush1.msra.mxu0 0.0
  %338 = vmatprep.subr.mxu0 0.0
  %339 = vmatpush1.msra.mxu0 0.0
  %340 = vmatprep.subr.mxu0 0.0
  %341 = vmatpush1.msra.mxu0 0.0
  %342 = vmatprep.subr.mxu0 0.0
  %343 = vmatpush1.msra.mxu0 0.0
  %344 = vmatprep.subr.mxu0 0.0
  %345 = vmatpush1.msra.mxu0 0.0
  %346 = vmatprep.mubr.f32.mxu0 0.0
  %v347 = vand.u32 %v17, 4294901760
  %348 = vmatmul.mubr.f32.gmra.mrb[0].mxu0 %v347
  %v349 = vpop.f32.mrb[0].mxu0
  %v350 = vadd.f32 %v129, %v349
  %v351 = vpop.f32.mrb[0].mxu0
  %352 = vmatprep.mubr.f32.mxu0 0.0
  %v353 = vand.u32 %v18, 4294901760
  %354 = vmatmul.mubr.f32.gmra.mrb[0].mxu0 %v353
  %v355 = vpop.f32.mrb[0].mxu0
  %v356 = vadd.f32 %v139, %v355
  %v357 = vpop.f32.mrb[0].mxu0
  %358 = vmatprep.mubr.f32.mxu0 0.0
  %v359 = vand.u32 %v19, 4294901760
  %360 = vmatmul.mubr.f32.gmra.mrb[0].mxu0 %v359
  %v361 = vpop.f32.mrb[0].mxu0
  %v362 = vadd.f32 %v149, %v361
  %v363 = vpop.f32.mrb[0].mxu0
  %364 = vmatprep.mubr.f32.mxu0 0.0
  %v365 = vand.u32 %v20, 4294901760
  %366 = vmatmul.mubr.f32.gmra.mrb[0].mxu0 %v365
  %v367 = vpop.f32.mrb[0].mxu0
  %v368 = vadd.f32 %v159, %v367
  %v369 = vpop.f32.mrb[0].mxu0
  %370 = vmatprep.mubr.f32.mxu0 0.0
  %v371 = vand.u32 %v21, 4294901760
  %372 = vmatmul.mubr.f32.gmra.mrb[0].mxu0 %v371
  %v373 = vpop.f32.mrb[0].mxu0
  %v374 = vadd.f32 %v169, %v373
  %v375 = vpop.f32.mrb[0].mxu0
  %376 = vmatprep.mubr.f32.mxu0 0.0
  %v377 = vand.u32 %v22, 4294901760
  %378 = vmatmul.mubr.f32.gmra.mrb[0].mxu0 %v377
  %v379 = vpop.f32.mrb[0].mxu0
  %v380 = vadd.f32 %v179, %v379
  %v381 = vpop.f32.mrb[0].mxu0
  %382 = vmatprep.mubr.f32.mxu0 0.0
  %v383 = vand.u32 %v23, 4294901760
  %384 = vmatmul.mubr.f32.gmra.mrb[0].mxu0 %v383
  %v385 = vpop.f32.mrb[0].mxu0
  %v386 = vadd.f32 %v189, %v385
  %v387 = vpop.f32.mrb[0].mxu0
  %388 = vmatprep.mubr.f32.mxu0 0.0
  %v389 = vand.u32 %v24, 4294901760
  %390 = vmatmul.mubr.f32.gmra.mrb[0].mxu0 %v389
  %v391 = vpop.f32.mrb[0].mxu0
  %v392 = vadd.f32 %v199, %v391
  %v393 = vpop.f32.mrb[0].mxu0
  %394 = vdwg.mxu0
  %395 = vmatprep.subr.mxu0 0.0
  %v396 = vand.u32 %v25, 4294901760
  %v397 = vsub.f32 %v25, %v396
  %398 = vmatpush1.msra.mxu0 %v397
  %399 = vmatprep.subr.mxu0 0.0
  %v400 = vand.u32 %v26, 4294901760
  %v401 = vsub.f32 %v26, %v400
  %402 = vmatpush1.msra.mxu0 %v401
  %403 = vmatprep.subr.mxu0 0.0
  %v404 = vand.u32 %v27, 4294901760
  %v405 = vsub.f32 %v27, %v404
  %406 = vmatpush1.msra.mxu0 %v405
  %407 = vmatprep.subr.mxu0 0.0
  %v408 = vand.u32 %v28, 4294901760
  %v409 = vsub.f32 %v28, %v408
  %410 = vmatpush1.msra.mxu0 %v409
  %411 = vmatprep.subr.mxu0 0.0
  %v412 = vand.u32 %v29, 4294901760
  %v413 = vsub.f32 %v29, %v412
  %414 = vmatpush1.msra.mxu0 %v413
  %415 = vmatprep.subr.mxu0 0.0
  %v416 = vand.u32 %v30, 4294901760
  %v417 = vsub.f32 %v30, %v416
  %418 = vmatpush1.msra.mxu0 %v417
  %419 = vmatprep.subr.mxu0 0.0
  %v420 = vand.u32 %v31, 4294901760
  %v421 = vsub.f32 %v31, %v420
  %422 = vmatpush1.msra.mxu0 %v421
  %423 = vmatprep.subr.mxu0 0.0
  %v424 = vand.u32 %v32, 4294901760
  %v425 = vsub.f32 %v32, %v424
  %426 = vmatpush1.msra.mxu0 %v425
  %427 = vmatprep.subr.mxu0 0.0
  %v428 = vand.u32 %v33, 4294901760
  %v429 = vsub.f32 %v33, %v428
  %430 = vmatpush1.msra.mxu0 %v429
  %431 = vmatprep.subr.mxu0 0.0
  %v432 = vand.u32 %v34, 4294901760
  %v433 = vsub.f32 %v34, %v432
  %434 = vmatpush1.msra.mxu0 %v433
  %435 = vmatprep.subr.mxu0 0.0
  %v436 = vand.u32 %v35, 4294901760
  %v437 = vsub.f32 %v35, %v436
  %438 = vmatpush1.msra.mxu0 %v437
  %439 = vmatprep.subr.mxu0 0.0
  %v440 = vand.u32 %v36, 4294901760
  %v441 = vsub.f32 %v36, %v440
  %442 = vmatpush1.msra.mxu0 %v441
  %443 = vmatprep.subr.mxu0 0.0
  %v444 = vand.u32 %v37, 4294901760
  %v445 = vsub.f32 %v37, %v444
  %446 = vmatpush1.msra.mxu0 %v445
  %447 = vmatprep.subr.mxu0 0.0
  %v448 = vand.u32 %v38, 4294901760
  %v449 = vsub.f32 %v38, %v448
  %450 = vmatpush1.msra.mxu0 %v449
  %451 = vmatprep.subr.mxu0 0.0
  %v452 = vand.u32 %v39, 4294901760
  %v453 = vsub.f32 %v39, %v452
  %454 = vmatpush1.msra.mxu0 %v453
  %455 = vmatprep.subr.mxu0 0.0
  %v456 = vand.u32 %v40, 4294901760
  %v457 = vsub.f32 %v40, %v456
  %458 = vmatpush1.msra.mxu0 %v457
  %459 = vmatprep.subr.mxu0 0.0
  %460 = vmatpush1.msra.mxu0 0.0
  %461 = vmatprep.subr.mxu0 0.0
  %462 = vmatpush1.msra.mxu0 0.0
  %463 = vmatprep.subr.mxu0 0.0
  %464 = vmatpush1.msra.mxu0 0.0
  %465 = vmatprep.subr.mxu0 0.0
  %466 = vmatpush1.msra.mxu0 0.0
  %467 = vmatprep.subr.mxu0 0.0
  %468 = vmatpush1.msra.mxu0 0.0
  %469 = vmatprep.subr.mxu0 0.0
  %470 = vmatpush1.msra.mxu0 0.0
  %471 = vmatprep.subr.mxu0 0.0
  %472 = vmatpush1.msra.mxu0 0.0
  %473 = vmatprep.subr.mxu0 0.0
  %474 = vmatpush1.msra.mxu0 0.0
  %475 = vmatprep.subr.mxu0 0.0
  %476 = vmatpush1.msra.mxu0 0.0
  %477 = vmatprep.subr.mxu0 0.0
  %478 = vmatpush1.msra.mxu0 0.0
  %479 = vmatprep.subr.mxu0 0.0
  %480 = vmatpush1.msra.mxu0 0.0
  %481 = vmatprep.subr.mxu0 0.0
  %482 = vmatpush1.msra.mxu0 0.0
  %483 = vmatprep.subr.mxu0 0.0
  %484 = vmatpush1.msra.mxu0 0.0
  %485 = vmatprep.subr.mxu0 0.0
  %486 = vmatpush1.msra.mxu0 0.0
  %487 = vmatprep.subr.mxu0 0.0
  %488 = vmatpush1.msra.mxu0 0.0
  %489 = vmatprep.subr.mxu0 0.0
  %490 = vmatpush1.msra.mxu0 0.0
  %491 = vmatprep.mubr.f32.mxu0 0.0
  %v492 = vand.u32 %v17, 4294901760
  %v493 = vsub.f32 %v17, %v492
  %494 = vmatmul.mubr.f32.gmra.mrb[0].mxu0 %v493
  %v495 = vpop.f32.mrb[0].mxu0
  %v496 = vadd.f32 %v350, %v495
  %v497 = vpop.f32.mrb[0].mxu0
  %498 = vmatprep.mubr.f32.mxu0 0.0
  %v499 = vand.u32 %v18, 4294901760
  %v500 = vsub.f32 %v18, %v499
  %501 = vmatmul.mubr.f32.gmra.mrb[0].mxu0 %v500
  %v502 = vpop.f32.mrb[0].mxu0
  %v503 = vadd.f32 %v356, %v502
  %v504 = vpop.f32.mrb[0].mxu0
  %505 = vmatprep.mubr.f32.mxu0 0.0
  %v506 = vand.u32 %v19, 4294901760
  %v507 = vsub.f32 %v19, %v506
  %508 = vmatmul.mubr.f32.gmra.mrb[0].mxu0 %v507
  %v509 = vpop.f32.mrb[0].mxu0
  %v510 = vadd.f32 %v362, %v509
  %v511 = vpop.f32.mrb[0].mxu0
  %512 = vmatprep.mubr.f32.mxu0 0.0
  %v513 = vand.u32 %v20, 4294901760
  %v514 = vsub.f32 %v20, %v513
  %515 = vmatmul.mubr.f32.gmra.mrb[0].mxu0 %v514
  %v516 = vpop.f32.mrb[0].mxu0
  %v517 = vadd.f32 %v368, %v516
  %v518 = vpop.f32.mrb[0].mxu0
  %519 = vmatprep.mubr.f32.mxu0 0.0
  %v520 = vand.u32 %v21, 4294901760
  %v521 = vsub.f32 %v21, %v520
  %522 = vmatmul.mubr.f32.gmra.mrb[0].mxu0 %v521
  %v523 = vpop.f32.mrb[0].mxu0
  %v524 = vadd.f32 %v374, %v523
  %v525 = vpop.f32.mrb[0].mxu0
  %526 = vmatprep.mubr.f32.mxu0 0.0
  %v527 = vand.u32 %v22, 4294901760
  %v528 = vsub.f32 %v22, %v527
  %529 = vmatmul.mubr.f32.gmra.mrb[0].mxu0 %v528
  %v530 = vpop.f32.mrb[0].mxu0
  %v531 = vadd.f32 %v380, %v530
  %v532 = vpop.f32.mrb[0].mxu0
  %533 = vmatprep.mubr.f32.mxu0 0.0
  %v534 = vand.u32 %v23, 4294901760
  %v535 = vsub.f32 %v23, %v534
  %536 = vmatmul.mubr.f32.gmra.mrb[0].mxu0 %v535
  %v537 = vpop.f32.mrb[0].mxu0
  %v538 = vadd.f32 %v386, %v537
  %v539 = vpop.f32.mrb[0].mxu0
  %540 = vmatprep.mubr.f32.mxu0 0.0
  %v541 = vand.u32 %v24, 4294901760
  %v542 = vsub.f32 %v24, %v541
  %543 = vmatmul.mubr.f32.gmra.mrb[0].mxu0 %v542
  %v544 = vpop.f32.mrb[0].mxu0
  %v545 = vadd.f32 %v392, %v544
  %v546 = vpop.f32.mrb[0].mxu0
  %547 = vdwg.mxu0
  %548 = vmatprep.subr.mxu0 0.0
  %v549 = vand.u32 %v25, 4294901760
  %550 = vmatpush1.msra.mxu0 %v549
  %551 = vmatprep.subr.mxu0 0.0
  %v552 = vand.u32 %v26, 4294901760
  %553 = vmatpush1.msra.mxu0 %v552
  %554 = vmatprep.subr.mxu0 0.0
  %v555 = vand.u32 %v27, 4294901760
  %556 = vmatpush1.msra.mxu0 %v555
  %557 = vmatprep.subr.mxu0 0.0
  %v558 = vand.u32 %v28, 4294901760
  %559 = vmatpush1.msra.mxu0 %v558
  %560 = vmatprep.subr.mxu0 0.0
  %v561 = vand.u32 %v29, 4294901760
  %562 = vmatpush1.msra.mxu0 %v561
  %563 = vmatprep.subr.mxu0 0.0
  %v564 = vand.u32 %v30, 4294901760
  %565 = vmatpush1.msra.mxu0 %v564
  %566 = vmatprep.subr.mxu0 0.0
  %v567 = vand.u32 %v31, 4294901760
  %568 = vmatpush1.msra.mxu0 %v567
  %569 = vmatprep.subr.mxu0 0.0
  %v570 = vand.u32 %v32, 4294901760
  %571 = vmatpush1.msra.mxu0 %v570
  %572 = vmatprep.subr.mxu0 0.0
  %v573 = vand.u32 %v33, 4294901760
  %574 = vmatpush1.msra.mxu0 %v573
  %575 = vmatprep.subr.mxu0 0.0
  %v576 = vand.u32 %v34, 4294901760
  %577 = vmatpush1.msra.mxu0 %v576
  %578 = vmatprep.subr.mxu0 0.0
  %v579 = vand.u32 %v35, 4294901760
  %580 = vmatpush1.msra.mxu0 %v579
  %581 = vmatprep.subr.mxu0 0.0
  %v582 = vand.u32 %v36, 4294901760
  %583 = vmatpush1.msra.mxu0 %v582
  %584 = vmatprep.subr.mxu0 0.0
  %v585 = vand.u32 %v37, 4294901760
  %586 = vmatpush1.msra.mxu0 %v585
  %587 = vmatprep.subr.mxu0 0.0
  %v588 = vand.u32 %v38, 4294901760
  %589 = vmatpush1.msra.mxu0 %v588
  %590 = vmatprep.subr.mxu0 0.0
  %v591 = vand.u32 %v39, 4294901760
  %592 = vmatpush1.msra.mxu0 %v591
  %593 = vmatprep.subr.mxu0 0.0
  %v594 = vand.u32 %v40, 4294901760
  %595 = vmatpush1.msra.mxu0 %v594
  %596 = vmatprep.subr.mxu0 0.0
  %597 = vmatpush1.msra.mxu0 0.0
  %598 = vmatprep.subr.mxu0 0.0
  %599 = vmatpush1.msra.mxu0 0.0
  %600 = vmatprep.subr.mxu0 0.0
  %601 = vmatpush1.msra.mxu0 0.0
  %602 = vmatprep.subr.mxu0 0.0
  %603 = vmatpush1.msra.mxu0 0.0
  %604 = vmatprep.subr.mxu0 0.0
  %605 = vmatpush1.msra.mxu0 0.0
  %606 = vmatprep.subr.mxu0 0.0
  %607 = vmatpush1.msra.mxu0 0.0
  %608 = vmatprep.subr.mxu0 0.0
  %609 = vmatpush1.msra.mxu0 0.0
  %610 = vmatprep.subr.mxu0 0.0
  %611 = vmatpush1.msra.mxu0 0.0
  %612 = vmatprep.subr.mxu0 0.0
  %613 = vmatpush1.msra.mxu0 0.0
  %614 = vmatprep.subr.mxu0 0.0
  %615 = vmatpush1.msra.mxu0 0.0
  %616 = vmatprep.subr.mxu0 0.0
  %617 = vmatpush1.msra.mxu0 0.0
  %618 = vmatprep.subr.mxu0 0.0
  %619 = vmatpush1.msra.mxu0 0.0
  %620 = vmatprep.subr.mxu0 0.0
  %621 = vmatpush1.msra.mxu0 0.0
  %622 = vmatprep.subr.mxu0 0.0
  %623 = vmatpush1.msra.mxu0 0.0
  %624 = vmatprep.subr.mxu0 0.0
  %625 = vmatpush1.msra.mxu0 0.0
  %626 = vmatprep.subr.mxu0 0.0
  %627 = vmatpush1.msra.mxu0 0.0
  %628 = vmatprep.mubr.f32.mxu0 0.0
  %v629 = vand.u32 %v17, 4294901760
  %v630 = vsub.f32 %v17, %v629
  %v631 = vand.u32 %v630, 4294901760
  %632 = vmatmul.mubr.f32.gmra.mrb[0].mxu0 %v631
  %v633 = vpop.f32.mrb[0].mxu0
  %v634 = vadd.f32 %v496, %v633
  %v635 = vpop.f32.mrb[0].mxu0
  %636 = vmatprep.mubr.f32.mxu0 0.0
  %v637 = vand.u32 %v18, 4294901760
  %v638 = vsub.f32 %v18, %v637
  %v639 = vand.u32 %v638, 4294901760
  %640 = vmatmul.mubr.f32.gmra.mrb[0].mxu0 %v639
  %v641 = vpop.f32.mrb[0].mxu0
  %v642 = vadd.f32 %v503, %v641
  %v643 = vpop.f32.mrb[0].mxu0
  %644 = vmatprep.mubr.f32.mxu0 0.0
  %v645 = vand.u32 %v19, 4294901760
  %v646 = vsub.f32 %v19, %v645
  %v647 = vand.u32 %v646, 4294901760
  %648 = vmatmul.mubr.f32.gmra.mrb[0].mxu0 %v647
  %v649 = vpop.f32.mrb[0].mxu0
  %v650 = vadd.f32 %v510, %v649
  %v651 = vpop.f32.mrb[0].mxu0
  %652 = vmatprep.mubr.f32.mxu0 0.0
  %v653 = vand.u32 %v20, 4294901760
  %v654 = vsub.f32 %v20, %v653
  %v655 = vand.u32 %v654, 4294901760
  %656 = vmatmul.mubr.f32.gmra.mrb[0].mxu0 %v655
  %v657 = vpop.f32.mrb[0].mxu0
  %v658 = vadd.f32 %v517, %v657
  %v659 = vpop.f32.mrb[0].mxu0
  %660 = vmatprep.mubr.f32.mxu0 0.0
  %v661 = vand.u32 %v21, 4294901760
  %v662 = vsub.f32 %v21, %v661
  %v663 = vand.u32 %v662, 4294901760
  %664 = vmatmul.mubr.f32.gmra.mrb[0].mxu0 %v663
  %v665 = vpop.f32.mrb[0].mxu0
  %v666 = vadd.f32 %v524, %v665
  %v667 = vpop.f32.mrb[0].mxu0
  %668 = vmatprep.mubr.f32.mxu0 0.0
  %v669 = vand.u32 %v22, 4294901760
  %v670 = vsub.f32 %v22, %v669
  %v671 = vand.u32 %v670, 4294901760
  %672 = vmatmul.mubr.f32.gmra.mrb[0].mxu0 %v671
  %v673 = vpop.f32.mrb[0].mxu0
  %v674 = vadd.f32 %v531, %v673
  %v675 = vpop.f32.mrb[0].mxu0
  %676 = vmatprep.mubr.f32.mxu0 0.0
  %v677 = vand.u32 %v23, 4294901760
  %v678 = vsub.f32 %v23, %v677
  %v679 = vand.u32 %v678, 4294901760
  %680 = vmatmul.mubr.f32.gmra.mrb[0].mxu0 %v679
  %v681 = vpop.f32.mrb[0].mxu0
  %v682 = vadd.f32 %v538, %v681
  %v683 = vpop.f32.mrb[0].mxu0
  %684 = vmatprep.mubr.f32.mxu0 0.0
  %v685 = vand.u32 %v24, 4294901760
  %v686 = vsub.f32 %v24, %v685
  %v687 = vand.u32 %v686, 4294901760
  %688 = vmatmul.mubr.f32.gmra.mrb[0].mxu0 %v687
  %v689 = vpop.f32.mrb[0].mxu0
  %v690 = vadd.f32 %v545, %v689
  %v691 = vpop.f32.mrb[0].mxu0
  %692 = vdwg.mxu0
  %693 = vmatprep.subr.mxu0 0.0
  %v694 = vand.u32 %v25, 4294901760
  %v695 = vsub.f32 %v25, %v694
  %v696 = vand.u32 %v695, 4294901760
  %697 = vmatpush1.msra.mxu0 %v696
  %698 = vmatprep.subr.mxu0 0.0
  %v699 = vand.u32 %v26, 4294901760
  %v700 = vsub.f32 %v26, %v699
  %v701 = vand.u32 %v700, 4294901760
  %702 = vmatpush1.msra.mxu0 %v701
  %703 = vmatprep.subr.mxu0 0.0
  %v704 = vand.u32 %v27, 4294901760
  %v705 = vsub.f32 %v27, %v704
  %v706 = vand.u32 %v705, 4294901760
  %707 = vmatpush1.msra.mxu0 %v706
  %708 = vmatprep.subr.mxu0 0.0
  %v709 = vand.u32 %v28, 4294901760
  %v710 = vsub.f32 %v28, %v709
  %v711 = vand.u32 %v710, 4294901760
  %712 = vmatpush1.msra.mxu0 %v711
  %713 = vmatprep.subr.mxu0 0.0
  %v714 = vand.u32 %v29, 4294901760
  %v715 = vsub.f32 %v29, %v714
  %v716 = vand.u32 %v715, 4294901760
  %717 = vmatpush1.msra.mxu0 %v716
  %718 = vmatprep.subr.mxu0 0.0
  %v719 = vand.u32 %v30, 4294901760
  %v720 = vsub.f32 %v30, %v719
  %v721 = vand.u32 %v720, 4294901760
  %722 = vmatpush1.msra.mxu0 %v721
  %723 = vmatprep.subr.mxu0 0.0
  %v724 = vand.u32 %v31, 4294901760
  %v725 = vsub.f32 %v31, %v724
  %v726 = vand.u32 %v725, 4294901760
  %727 = vmatpush1.msra.mxu0 %v726
  %728 = vmatprep.subr.mxu0 0.0
  %v729 = vand.u32 %v32, 4294901760
  %v730 = vsub.f32 %v32, %v729
  %v731 = vand.u32 %v730, 4294901760
  %732 = vmatpush1.msra.mxu0 %v731
  %733 = vmatprep.subr.mxu0 0.0
  %v734 = vand.u32 %v33, 4294901760
  %v735 = vsub.f32 %v33, %v734
  %v736 = vand.u32 %v735, 4294901760
  %737 = vmatpush1.msra.mxu0 %v736
  %738 = vmatprep.subr.mxu0 0.0
  %v739 = vand.u32 %v34, 4294901760
  %v740 = vsub.f32 %v34, %v739
  %v741 = vand.u32 %v740, 4294901760
  %742 = vmatpush1.msra.mxu0 %v741
  %743 = vmatprep.subr.mxu0 0.0
  %v744 = vand.u32 %v35, 4294901760
  %v745 = vsub.f32 %v35, %v744
  %v746 = vand.u32 %v745, 4294901760
  %747 = vmatpush1.msra.mxu0 %v746
  %748 = vmatprep.subr.mxu0 0.0
  %v749 = vand.u32 %v36, 4294901760
  %v750 = vsub.f32 %v36, %v749
  %v751 = vand.u32 %v750, 4294901760
  %752 = vmatpush1.msra.mxu0 %v751
  %753 = vmatprep.subr.mxu0 0.0
  %v754 = vand.u32 %v37, 4294901760
  %v755 = vsub.f32 %v37, %v754
  %v756 = vand.u32 %v755, 4294901760
  %757 = vmatpush1.msra.mxu0 %v756
  %758 = vmatprep.subr.mxu0 0.0
  %v759 = vand.u32 %v38, 4294901760
  %v760 = vsub.f32 %v38, %v759
  %v761 = vand.u32 %v760, 4294901760
  %762 = vmatpush1.msra.mxu0 %v761
  %763 = vmatprep.subr.mxu0 0.0
  %v764 = vand.u32 %v39, 4294901760
  %v765 = vsub.f32 %v39, %v764
  %v766 = vand.u32 %v765, 4294901760
  %767 = vmatpush1.msra.mxu0 %v766
  %768 = vmatprep.subr.mxu0 0.0
  %v769 = vand.u32 %v40, 4294901760
  %v770 = vsub.f32 %v40, %v769
  %v771 = vand.u32 %v770, 4294901760
  %772 = vmatpush1.msra.mxu0 %v771
  %773 = vmatprep.subr.mxu0 0.0
  %774 = vmatpush1.msra.mxu0 0.0
  %775 = vmatprep.subr.mxu0 0.0
  %776 = vmatpush1.msra.mxu0 0.0
  %777 = vmatprep.subr.mxu0 0.0
  %778 = vmatpush1.msra.mxu0 0.0
  %779 = vmatprep.subr.mxu0 0.0
  %780 = vmatpush1.msra.mxu0 0.0
  %781 = vmatprep.subr.mxu0 0.0
  %782 = vmatpush1.msra.mxu0 0.0
  %783 = vmatprep.subr.mxu0 0.0
  %784 = vmatpush1.msra.mxu0 0.0
  %785 = vmatprep.subr.mxu0 0.0
  %786 = vmatpush1.msra.mxu0 0.0
  %787 = vmatprep.subr.mxu0 0.0
  %788 = vmatpush1.msra.mxu0 0.0
  %789 = vmatprep.subr.mxu0 0.0
  %790 = vmatpush1.msra.mxu0 0.0
  %791 = vmatprep.subr.mxu0 0.0
  %792 = vmatpush1.msra.mxu0 0.0
  %793 = vmatprep.subr.mxu0 0.0
  %794 = vmatpush1.msra.mxu0 0.0
  %795 = vmatprep.subr.mxu0 0.0
  %796 = vmatpush1.msra.mxu0 0.0
  %797 = vmatprep.subr.mxu0 0.0
  %798 = vmatpush1.msra.mxu0 0.0
  %799 = vmatprep.subr.mxu0 0.0
  %800 = vmatpush1.msra.mxu0 0.0
  %801 = vmatprep.subr.mxu0 0.0
  %802 = vmatpush1.msra.mxu0 0.0
  %803 = vmatprep.subr.mxu0 0.0
  %804 = vmatpush1.msra.mxu0 0.0
  %805 = vmatprep.mubr.f32.mxu0 0.0
  %v806 = vand.u32 %v17, 4294901760
  %807 = vmatmul.mubr.f32.gmra.mrb[0].mxu0 %v806
  %v808 = vpop.f32.mrb[0].mxu0
  %v809 = vadd.f32 %v634, %v808
  %v810 = vpop.f32.mrb[0].mxu0
  %811 = vmatprep.mubr.f32.mxu0 0.0
  %v812 = vand.u32 %v18, 4294901760
  %813 = vmatmul.mubr.f32.gmra.mrb[0].mxu0 %v812
  %v814 = vpop.f32.mrb[0].mxu0
  %v815 = vadd.f32 %v642, %v814
  %v816 = vpop.f32.mrb[0].mxu0
  %817 = vmatprep.mubr.f32.mxu0 0.0
  %v818 = vand.u32 %v19, 4294901760
  %819 = vmatmul.mubr.f32.gmra.mrb[0].mxu0 %v818
  %v820 = vpop.f32.mrb[0].mxu0
  %v821 = vadd.f32 %v650, %v820
  %v822 = vpop.f32.mrb[0].mxu0
  %823 = vmatprep.mubr.f32.mxu0 0.0
  %v824 = vand.u32 %v20, 4294901760
  %825 = vmatmul.mubr.f32.gmra.mrb[0].mxu0 %v824
  %v826 = vpop.f32.mrb[0].mxu0
  %v827 = vadd.f32 %v658, %v826
  %v828 = vpop.f32.mrb[0].mxu0
  %829 = vmatprep.mubr.f32.mxu0 0.0
  %v830 = vand.u32 %v21, 4294901760
  %831 = vmatmul.mubr.f32.gmra.mrb[0].mxu0 %v830
  %v832 = vpop.f32.mrb[0].mxu0
  %v833 = vadd.f32 %v666, %v832
  %v834 = vpop.f32.mrb[0].mxu0
  %835 = vmatprep.mubr.f32.mxu0 0.0
  %v836 = vand.u32 %v22, 4294901760
  %837 = vmatmul.mubr.f32.gmra.mrb[0].mxu0 %v836
  %v838 = vpop.f32.mrb[0].mxu0
  %v839 = vadd.f32 %v674, %v838
  %v840 = vpop.f32.mrb[0].mxu0
  %841 = vmatprep.mubr.f32.mxu0 0.0
  %v842 = vand.u32 %v23, 4294901760
  %843 = vmatmul.mubr.f32.gmra.mrb[0].mxu0 %v842
  %v844 = vpop.f32.mrb[0].mxu0
  %v845 = vadd.f32 %v682, %v844
  %v846 = vpop.f32.mrb[0].mxu0
  %847 = vmatprep.mubr.f32.mxu0 0.0
  %v848 = vand.u32 %v24, 4294901760
  %849 = vmatmul.mubr.f32.gmra.mrb[0].mxu0 %v848
  %v850 = vpop.f32.mrb[0].mxu0
  %v851 = vadd.f32 %v690, %v850
  %v852 = vpop.f32.mrb[0].mxu0
  %853 = vdwg.mxu0
  %854 = vmatprep.subr.mxu0 0.0
  %v855 = vand.u32 %v25, 4294901760
  %856 = vmatpush1.msra.mxu0 %v855
  %857 = vmatprep.subr.mxu0 0.0
  %v858 = vand.u32 %v26, 4294901760
  %859 = vmatpush1.msra.mxu0 %v858
  %860 = vmatprep.subr.mxu0 0.0
  %v861 = vand.u32 %v27, 4294901760
  %862 = vmatpush1.msra.mxu0 %v861
  %863 = vmatprep.subr.mxu0 0.0
  %v864 = vand.u32 %v28, 4294901760
  %865 = vmatpush1.msra.mxu0 %v864
  %866 = vmatprep.subr.mxu0 0.0
  %v867 = vand.u32 %v29, 4294901760
  %868 = vmatpush1.msra.mxu0 %v867
  %869 = vmatprep.subr.mxu0 0.0
  %v870 = vand.u32 %v30, 4294901760
  %871 = vmatpush1.msra.mxu0 %v870
  %872 = vmatprep.subr.mxu0 0.0
  %v873 = vand.u32 %v31, 4294901760
  %874 = vmatpush1.msra.mxu0 %v873
  %875 = vmatprep.subr.mxu0 0.0
  %v876 = vand.u32 %v32, 4294901760
  %877 = vmatpush1.msra.mxu0 %v876
  %878 = vmatprep.subr.mxu0 0.0
  %v879 = vand.u32 %v33, 4294901760
  %880 = vmatpush1.msra.mxu0 %v879
  %881 = vmatprep.subr.mxu0 0.0
  %v882 = vand.u32 %v34, 4294901760
  %883 = vmatpush1.msra.mxu0 %v882
  %884 = vmatprep.subr.mxu0 0.0
  %v885 = vand.u32 %v35, 4294901760
  %886 = vmatpush1.msra.mxu0 %v885
  %887 = vmatprep.subr.mxu0 0.0
  %v888 = vand.u32 %v36, 4294901760
  %889 = vmatpush1.msra.mxu0 %v888
  %890 = vmatprep.subr.mxu0 0.0
  %v891 = vand.u32 %v37, 4294901760
  %892 = vmatpush1.msra.mxu0 %v891
  %893 = vmatprep.subr.mxu0 0.0
  %v894 = vand.u32 %v38, 4294901760
  %895 = vmatpush1.msra.mxu0 %v894
  %896 = vmatprep.subr.mxu0 0.0
  %v897 = vand.u32 %v39, 4294901760
  %898 = vmatpush1.msra.mxu0 %v897
  %899 = vmatprep.subr.mxu0 0.0
  %v900 = vand.u32 %v40, 4294901760
  %901 = vmatpush1.msra.mxu0 %v900
  %902 = vmatprep.subr.mxu0 0.0
  %903 = vmatpush1.msra.mxu0 0.0
  %904 = vmatprep.subr.mxu0 0.0
  %905 = vmatpush1.msra.mxu0 0.0
  %906 = vmatprep.subr.mxu0 0.0
  %907 = vmatpush1.msra.mxu0 0.0
  %908 = vmatprep.subr.mxu0 0.0
  %909 = vmatpush1.msra.mxu0 0.0
  %910 = vmatprep.subr.mxu0 0.0
  %911 = vmatpush1.msra.mxu0 0.0
  %912 = vmatprep.subr.mxu0 0.0
  %913 = vmatpush1.msra.mxu0 0.0
  %914 = vmatprep.subr.mxu0 0.0
  %915 = vmatpush1.msra.mxu0 0.0
  %916 = vmatprep.subr.mxu0 0.0
  %917 = vmatpush1.msra.mxu0 0.0
  %918 = vmatprep.subr.mxu0 0.0
  %919 = vmatpush1.msra.mxu0 0.0
  %920 = vmatprep.subr.mxu0 0.0
  %921 = vmatpush1.msra.mxu0 0.0
  %922 = vmatprep.subr.mxu0 0.0
  %923 = vmatpush1.msra.mxu0 0.0
  %924 = vmatprep.subr.mxu0 0.0
  %925 = vmatpush1.msra.mxu0 0.0
  %926 = vmatprep.subr.mxu0 0.0
  %927 = vmatpush1.msra.mxu0 0.0
  %928 = vmatprep.subr.mxu0 0.0
  %929 = vmatpush1.msra.mxu0 0.0
  %930 = vmatprep.subr.mxu0 0.0
  %931 = vmatpush1.msra.mxu0 0.0
  %932 = vmatprep.subr.mxu0 0.0
  %933 = vmatpush1.msra.mxu0 0.0
  %934 = vmatprep.mubr.f32.mxu0 0.0
  %v935 = vand.u32 %v17, 4294901760
  %936 = vmatmul.mubr.f32.gmra.mrb[0].mxu0 %v935
  %v937 = vpop.f32.mrb[0].mxu0
  %v938 = vadd.f32 %v809, %v937
  %v939 = vpop.f32.mrb[0].mxu0
  %940 = vmatprep.mubr.f32.mxu0 0.0
  %v941 = vand.u32 %v18, 4294901760
  %942 = vmatmul.mubr.f32.gmra.mrb[0].mxu0 %v941
  %v943 = vpop.f32.mrb[0].mxu0
  %v944 = vadd.f32 %v815, %v943
  %v945 = vpop.f32.mrb[0].mxu0
  %946 = vmatprep.mubr.f32.mxu0 0.0
  %v947 = vand.u32 %v19, 4294901760
  %948 = vmatmul.mubr.f32.gmra.mrb[0].mxu0 %v947
  %v949 = vpop.f32.mrb[0].mxu0
  %v950 = vadd.f32 %v821, %v949
  %v951 = vpop.f32.mrb[0].mxu0
  %952 = vmatprep.mubr.f32.mxu0 0.0
  %v953 = vand.u32 %v20, 4294901760
  %954 = vmatmul.mubr.f32.gmra.mrb[0].mxu0 %v953
  %v955 = vpop.f32.mrb[0].mxu0
  %v956 = vadd.f32 %v827, %v955
  %v957 = vpop.f32.mrb[0].mxu0
  %958 = vmatprep.mubr.f32.mxu0 0.0
  %v959 = vand.u32 %v21, 4294901760
  %960 = vmatmul.mubr.f32.gmra.mrb[0].mxu0 %v959
  %v961 = vpop.f32.mrb[0].mxu0
  %v962 = vadd.f32 %v833, %v961
  %v963 = vpop.f32.mrb[0].mxu0
  %964 = vmatprep.mubr.f32.mxu0 0.0
  %v965 = vand.u32 %v22, 4294901760
  %966 = vmatmul.mubr.f32.gmra.mrb[0].mxu0 %v965
  %v967 = vpop.f32.mrb[0].mxu0
  %v968 = vadd.f32 %v839, %v967
  %v969 = vpop.f32.mrb[0].mxu0
  %970 = vmatprep.mubr.f32.mxu0 0.0
  %v971 = vand.u32 %v23, 4294901760
  %972 = vmatmul.mubr.f32.gmra.mrb[0].mxu0 %v971
  %v973 = vpop.f32.mrb[0].mxu0
  %v974 = vadd.f32 %v845, %v973
  %v975 = vpop.f32.mrb[0].mxu0
  %976 = vmatprep.mubr.f32.mxu0 0.0
  %v977 = vand.u32 %v24, 4294901760
  %978 = vmatmul.mubr.f32.gmra.mrb[0].mxu0 %v977
  %v979 = vpop.f32.mrb[0].mxu0
  %v980 = vadd.f32 %v851, %v979
  %v981 = vpop.f32.mrb[0].mxu0
  %982 = vdwg.mxu0
  %v983 = vmul.f32 %v938, 0.0625
  %v984 = vmul.f32 %v944, 0.0625
  %v985 = vmul.f32 %v950, 0.0625
  %v986 = vmul.f32 %v956, 0.0625
  %v987 = vmul.f32 %v962, 0.0625
  %v988 = vmul.f32 %v968, 0.0625
  %v989 = vmul.f32 %v974, 0.0625
  %v990 = vmul.f32 %v980, 0.0625
  %v991 = vsub.f32 %v17, %v983
  %v992 = vsub.f32 %v18, %v984
  %v993 = vsub.f32 %v19, %v985
  %v994 = vsub.f32 %v20, %v986
  %v995 = vsub.f32 %v21, %v987
  %v996 = vsub.f32 %v22, %v988
  %v997 = vsub.f32 %v23, %v989
  %v998 = vsub.f32 %v24, %v990
  %v999 = vmul.f32 %v991, %v991
  %v1000 = vmul.f32 %v992, %v992
  %v1001 = vmul.f32 %v993, %v993
  %v1002 = vmul.f32 %v994, %v994
  %v1003 = vmul.f32 %v995, %v995
  %v1004 = vmul.f32 %v996, %v996
  %v1005 = vmul.f32 %v997, %v997
  %v1006 = vmul.f32 %v998, %v998
  %1007 = vmatprep.subr.mxu0 0.0
  %v1008 = vand.u32 %v25, 4294901760
  %1009 = vmatpush1.msra.mxu0 %v1008
  %1010 = vmatprep.subr.mxu0 0.0
  %v1011 = vand.u32 %v26, 4294901760
  %1012 = vmatpush1.msra.mxu0 %v1011
  %1013 = vmatprep.subr.mxu0 0.0
  %v1014 = vand.u32 %v27, 4294901760
  %1015 = vmatpush1.msra.mxu0 %v1014
  %1016 = vmatprep.subr.mxu0 0.0
  %v1017 = vand.u32 %v28, 4294901760
  %1018 = vmatpush1.msra.mxu0 %v1017
  %1019 = vmatprep.subr.mxu0 0.0
  %v1020 = vand.u32 %v29, 4294901760
  %1021 = vmatpush1.msra.mxu0 %v1020
  %1022 = vmatprep.subr.mxu0 0.0
  %v1023 = vand.u32 %v30, 4294901760
  %1024 = vmatpush1.msra.mxu0 %v1023
  %1025 = vmatprep.subr.mxu0 0.0
  %v1026 = vand.u32 %v31, 4294901760
  %1027 = vmatpush1.msra.mxu0 %v1026
  %1028 = vmatprep.subr.mxu0 0.0
  %v1029 = vand.u32 %v32, 4294901760
  %1030 = vmatpush1.msra.mxu0 %v1029
  %1031 = vmatprep.subr.mxu0 0.0
  %v1032 = vand.u32 %v33, 4294901760
  %1033 = vmatpush1.msra.mxu0 %v1032
  %1034 = vmatprep.subr.mxu0 0.0
  %v1035 = vand.u32 %v34, 4294901760
  %1036 = vmatpush1.msra.mxu0 %v1035
  %1037 = vmatprep.subr.mxu0 0.0
  %v1038 = vand.u32 %v35, 4294901760
  %1039 = vmatpush1.msra.mxu0 %v1038
  %1040 = vmatprep.subr.mxu0 0.0
  %v1041 = vand.u32 %v36, 4294901760
  %1042 = vmatpush1.msra.mxu0 %v1041
  %1043 = vmatprep.subr.mxu0 0.0
  %v1044 = vand.u32 %v37, 4294901760
  %1045 = vmatpush1.msra.mxu0 %v1044
  %1046 = vmatprep.subr.mxu0 0.0
  %v1047 = vand.u32 %v38, 4294901760
  %1048 = vmatpush1.msra.mxu0 %v1047
  %1049 = vmatprep.subr.mxu0 0.0
  %v1050 = vand.u32 %v39, 4294901760
  %1051 = vmatpush1.msra.mxu0 %v1050
  %1052 = vmatprep.subr.mxu0 0.0
  %v1053 = vand.u32 %v40, 4294901760
  %1054 = vmatpush1.msra.mxu0 %v1053
  %1055 = vmatprep.subr.mxu0 0.0
  %1056 = vmatpush1.msra.mxu0 0.0
  %1057 = vmatprep.subr.mxu0 0.0
  %1058 = vmatpush1.msra.mxu0 0.0
  %1059 = vmatprep.subr.mxu0 0.0
  %1060 = vmatpush1.msra.mxu0 0.0
  %1061 = vmatprep.subr.mxu0 0.0
  %1062 = vmatpush1.msra.mxu0 0.0
  %1063 = vmatprep.subr.mxu0 0.0
  %1064 = vmatpush1.msra.mxu0 0.0
  %1065 = vmatprep.subr.mxu0 0.0
  %1066 = vmatpush1.msra.mxu0 0.0
  %1067 = vmatprep.subr.mxu0 0.0
  %1068 = vmatpush1.msra.mxu0 0.0
  %1069 = vmatprep.subr.mxu0 0.0
  %1070 = vmatpush1.msra.mxu0 0.0
  %1071 = vmatprep.subr.mxu0 0.0
  %1072 = vmatpush1.msra.mxu0 0.0
  %1073 = vmatprep.subr.mxu0 0.0
  %1074 = vmatpush1.msra.mxu0 0.0
  %1075 = vmatprep.subr.mxu0 0.0
  %1076 = vmatpush1.msra.mxu0 0.0
  %1077 = vmatprep.subr.mxu0 0.0
  %1078 = vmatpush1.msra.mxu0 0.0
  %1079 = vmatprep.subr.mxu0 0.0
  %1080 = vmatpush1.msra.mxu0 0.0
  %1081 = vmatprep.subr.mxu0 0.0
  %1082 = vmatpush1.msra.mxu0 0.0
  %1083 = vmatprep.subr.mxu0 0.0
  %1084 = vmatpush1.msra.mxu0 0.0
  %1085 = vmatprep.subr.mxu0 0.0
  %1086 = vmatpush1.msra.mxu0 0.0
  %1087 = vmatprep.mubr.f32.mxu0 0.0
  %v1088 = vand.u32 %v999, 4294901760
  %v1089 = vsub.f32 %v999, %v1088
  %v1090 = vand.u32 %v1089, 4294901760
  %v1091 = vsub.f32 %v1089, %v1090
  %v1092 = vand.u32 %v1091, 4294901760
  %1093 = vmatmul.mubr.f32.gmra.mrb[0].mxu0 %v1092
  %v1094 = vpop.f32.mrb[0].mxu0
  %v1095 = vadd.f32 0.0, %v1094
  %v1096 = vpop.f32.mrb[0].mxu0
  %1097 = vmatprep.mubr.f32.mxu0 0.0
  %v1098 = vand.u32 %v1000, 4294901760
  %v1099 = vsub.f32 %v1000, %v1098
  %v1100 = vand.u32 %v1099, 4294901760
  %v1101 = vsub.f32 %v1099, %v1100
  %v1102 = vand.u32 %v1101, 4294901760
  %1103 = vmatmul.mubr.f32.gmra.mrb[0].mxu0 %v1102
  %v1104 = vpop.f32.mrb[0].mxu0
  %v1105 = vadd.f32 0.0, %v1104
  %v1106 = vpop.f32.mrb[0].mxu0
  %1107 = vmatprep.mubr.f32.mxu0 0.0
  %v1108 = vand.u32 %v1001, 4294901760
  %v1109 = vsub.f32 %v1001, %v1108
  %v1110 = vand.u32 %v1109, 4294901760
  %v1111 = vsub.f32 %v1109, %v1110
  %v1112 = vand.u32 %v1111, 4294901760
  %1113 = vmatmul.mubr.f32.gmra.mrb[0].mxu0 %v1112
  %v1114 = vpop.f32.mrb[0].mxu0
  %v1115 = vadd.f32 0.0, %v1114
  %v1116 = vpop.f32.mrb[0].mxu0
  %1117 = vmatprep.mubr.f32.mxu0 0.0
  %v1118 = vand.u32 %v1002, 4294901760
  %v1119 = vsub.f32 %v1002, %v1118
  %v1120 = vand.u32 %v1119, 4294901760
  %v1121 = vsub.f32 %v1119, %v1120
  %v1122 = vand.u32 %v1121, 4294901760
  %1123 = vmatmul.mubr.f32.gmra.mrb[0].mxu0 %v1122
  %v1124 = vpop.f32.mrb[0].mxu0
  %v1125 = vadd.f32 0.0, %v1124
  %v1126 = vpop.f32.mrb[0].mxu0
  %1127 = vmatprep.mubr.f32.mxu0 0.0
  %v1128 = vand.u32 %v1003, 4294901760
  %v1129 = vsub.f32 %v1003, %v1128
  %v1130 = vand.u32 %v1129, 4294901760
  %v1131 = vsub.f32 %v1129, %v1130
  %v1132 = vand.u32 %v1131, 4294901760
  %1133 = vmatmul.mubr.f32.gmra.mrb[0].mxu0 %v1132
  %v1134 = vpop.f32.mrb[0].mxu0
  %v1135 = vadd.f32 0.0, %v1134
  %v1136 = vpop.f32.mrb[0].mxu0
  %1137 = vmatprep.mubr.f32.mxu0 0.0
  %v1138 = vand.u32 %v1004, 4294901760
  %v1139 = vsub.f32 %v1004, %v1138
  %v1140 = vand.u32 %v1139, 4294901760
  %v1141 = vsub.f32 %v1139, %v1140
  %v1142 = vand.u32 %v1141, 4294901760
  %1143 = vmatmul.mubr.f32.gmra.mrb[0].mxu0 %v1142
  %v1144 = vpop.f32.mrb[0].mxu0
  %v1145 = vadd.f32 0.0, %v1144
  %v1146 = vpop.f32.mrb[0].mxu0
  %1147 = vmatprep.mubr.f32.mxu0 0.0
  %v1148 = vand.u32 %v1005, 4294901760
  %v1149 = vsub.f32 %v1005, %v1148
  %v1150 = vand.u32 %v1149, 4294901760
  %v1151 = vsub.f32 %v1149, %v1150
  %v1152 = vand.u32 %v1151, 4294901760
  %1153 = vmatmul.mubr.f32.gmra.mrb[0].mxu0 %v1152
  %v1154 = vpop.f32.mrb[0].mxu0
  %v1155 = vadd.f32 0.0, %v1154
  %v1156 = vpop.f32.mrb[0].mxu0
  %1157 = vmatprep.mubr.f32.mxu0 0.0
  %v1158 = vand.u32 %v1006, 4294901760
  %v1159 = vsub.f32 %v1006, %v1158
  %v1160 = vand.u32 %v1159, 4294901760
  %v1161 = vsub.f32 %v1159, %v1160
  %v1162 = vand.u32 %v1161, 4294901760
  %1163 = vmatmul.mubr.f32.gmra.mrb[0].mxu0 %v1162
  %v1164 = vpop.f32.mrb[0].mxu0
  %v1165 = vadd.f32 0.0, %v1164
  %v1166 = vpop.f32.mrb[0].mxu0
  %1167 = vdwg.mxu0
  %1168 = vmatprep.subr.mxu0 0.0
  %v1169 = vand.u32 %v25, 4294901760
  %v1170 = vsub.f32 %v25, %v1169
  %v1171 = vand.u32 %v1170, 4294901760
  %v1172 = vsub.f32 %v1170, %v1171
  %v1173 = vand.u32 %v1172, 4294901760
  %1174 = vmatpush1.msra.mxu0 %v1173
  %1175 = vmatprep.subr.mxu0 0.0
  %v1176 = vand.u32 %v26, 4294901760
  %v1177 = vsub.f32 %v26, %v1176
  %v1178 = vand.u32 %v1177, 4294901760
  %v1179 = vsub.f32 %v1177, %v1178
  %v1180 = vand.u32 %v1179, 4294901760
  %1181 = vmatpush1.msra.mxu0 %v1180
  %1182 = vmatprep.subr.mxu0 0.0
  %v1183 = vand.u32 %v27, 4294901760
  %v1184 = vsub.f32 %v27, %v1183
  %v1185 = vand.u32 %v1184, 4294901760
  %v1186 = vsub.f32 %v1184, %v1185
  %v1187 = vand.u32 %v1186, 4294901760
  %1188 = vmatpush1.msra.mxu0 %v1187
  %1189 = vmatprep.subr.mxu0 0.0
  %v1190 = vand.u32 %v28, 4294901760
  %v1191 = vsub.f32 %v28, %v1190
  %v1192 = vand.u32 %v1191, 4294901760
  %v1193 = vsub.f32 %v1191, %v1192
  %v1194 = vand.u32 %v1193, 4294901760
  %1195 = vmatpush1.msra.mxu0 %v1194
  %1196 = vmatprep.subr.mxu0 0.0
  %v1197 = vand.u32 %v29, 4294901760
  %v1198 = vsub.f32 %v29, %v1197
  %v1199 = vand.u32 %v1198, 4294901760
  %v1200 = vsub.f32 %v1198, %v1199
  %v1201 = vand.u32 %v1200, 4294901760
  %1202 = vmatpush1.msra.mxu0 %v1201
  %1203 = vmatprep.subr.mxu0 0.0
  %v1204 = vand.u32 %v30, 4294901760
  %v1205 = vsub.f32 %v30, %v1204
  %v1206 = vand.u32 %v1205, 4294901760
  %v1207 = vsub.f32 %v1205, %v1206
  %v1208 = vand.u32 %v1207, 4294901760
  %1209 = vmatpush1.msra.mxu0 %v1208
  %1210 = vmatprep.subr.mxu0 0.0
  %v1211 = vand.u32 %v31, 4294901760
  %v1212 = vsub.f32 %v31, %v1211
  %v1213 = vand.u32 %v1212, 4294901760
  %v1214 = vsub.f32 %v1212, %v1213
  %v1215 = vand.u32 %v1214, 4294901760
  %1216 = vmatpush1.msra.mxu0 %v1215
  %1217 = vmatprep.subr.mxu0 0.0
  %v1218 = vand.u32 %v32, 4294901760
  %v1219 = vsub.f32 %v32, %v1218
  %v1220 = vand.u32 %v1219, 4294901760
  %v1221 = vsub.f32 %v1219, %v1220
  %v1222 = vand.u32 %v1221, 4294901760
  %1223 = vmatpush1.msra.mxu0 %v1222
  %1224 = vmatprep.subr.mxu0 0.0
  %v1225 = vand.u32 %v33, 4294901760
  %v1226 = vsub.f32 %v33, %v1225
  %v1227 = vand.u32 %v1226, 4294901760
  %v1228 = vsub.f32 %v1226, %v1227
  %v1229 = vand.u32 %v1228, 4294901760
  %1230 = vmatpush1.msra.mxu0 %v1229
  %1231 = vmatprep.subr.mxu0 0.0
  %v1232 = vand.u32 %v34, 4294901760
  %v1233 = vsub.f32 %v34, %v1232
  %v1234 = vand.u32 %v1233, 4294901760
  %v1235 = vsub.f32 %v1233, %v1234
  %v1236 = vand.u32 %v1235, 4294901760
  %1237 = vmatpush1.msra.mxu0 %v1236
  %1238 = vmatprep.subr.mxu0 0.0
  %v1239 = vand.u32 %v35, 4294901760
  %v1240 = vsub.f32 %v35, %v1239
  %v1241 = vand.u32 %v1240, 4294901760
  %v1242 = vsub.f32 %v1240, %v1241
  %v1243 = vand.u32 %v1242, 4294901760
  %1244 = vmatpush1.msra.mxu0 %v1243
  %1245 = vmatprep.subr.mxu0 0.0
  %v1246 = vand.u32 %v36, 4294901760
  %v1247 = vsub.f32 %v36, %v1246
  %v1248 = vand.u32 %v1247, 4294901760
  %v1249 = vsub.f32 %v1247, %v1248
  %v1250 = vand.u32 %v1249, 4294901760
  %1251 = vmatpush1.msra.mxu0 %v1250
  %1252 = vmatprep.subr.mxu0 0.0
  %v1253 = vand.u32 %v37, 4294901760
  %v1254 = vsub.f32 %v37, %v1253
  %v1255 = vand.u32 %v1254, 4294901760
  %v1256 = vsub.f32 %v1254, %v1255
  %v1257 = vand.u32 %v1256, 4294901760
  %1258 = vmatpush1.msra.mxu0 %v1257
  %1259 = vmatprep.subr.mxu0 0.0
  %v1260 = vand.u32 %v38, 4294901760
  %v1261 = vsub.f32 %v38, %v1260
  %v1262 = vand.u32 %v1261, 4294901760
  %v1263 = vsub.f32 %v1261, %v1262
  %v1264 = vand.u32 %v1263, 4294901760
  %1265 = vmatpush1.msra.mxu0 %v1264
  %1266 = vmatprep.subr.mxu0 0.0
  %v1267 = vand.u32 %v39, 4294901760
  %v1268 = vsub.f32 %v39, %v1267
  %v1269 = vand.u32 %v1268, 4294901760
  %v1270 = vsub.f32 %v1268, %v1269
  %v1271 = vand.u32 %v1270, 4294901760
  %1272 = vmatpush1.msra.mxu0 %v1271
  %1273 = vmatprep.subr.mxu0 0.0
  %v1274 = vand.u32 %v40, 4294901760
  %v1275 = vsub.f32 %v40, %v1274
  %v1276 = vand.u32 %v1275, 4294901760
  %v1277 = vsub.f32 %v1275, %v1276
  %v1278 = vand.u32 %v1277, 4294901760
  %1279 = vmatpush1.msra.mxu0 %v1278
  %1280 = vmatprep.subr.mxu0 0.0
  %1281 = vmatpush1.msra.mxu0 0.0
  %1282 = vmatprep.subr.mxu0 0.0
  %1283 = vmatpush1.msra.mxu0 0.0
  %1284 = vmatprep.subr.mxu0 0.0
  %1285 = vmatpush1.msra.mxu0 0.0
  %1286 = vmatprep.subr.mxu0 0.0
  %1287 = vmatpush1.msra.mxu0 0.0
  %1288 = vmatprep.subr.mxu0 0.0
  %1289 = vmatpush1.msra.mxu0 0.0
  %1290 = vmatprep.subr.mxu0 0.0
  %1291 = vmatpush1.msra.mxu0 0.0
  %1292 = vmatprep.subr.mxu0 0.0
  %1293 = vmatpush1.msra.mxu0 0.0
  %1294 = vmatprep.subr.mxu0 0.0
  %1295 = vmatpush1.msra.mxu0 0.0
  %1296 = vmatprep.subr.mxu0 0.0
  %1297 = vmatpush1.msra.mxu0 0.0
  %1298 = vmatprep.subr.mxu0 0.0
  %1299 = vmatpush1.msra.mxu0 0.0
  %1300 = vmatprep.subr.mxu0 0.0
  %1301 = vmatpush1.msra.mxu0 0.0
  %1302 = vmatprep.subr.mxu0 0.0
  %1303 = vmatpush1.msra.mxu0 0.0
  %1304 = vmatprep.subr.mxu0 0.0
  %1305 = vmatpush1.msra.mxu0 0.0
  %1306 = vmatprep.subr.mxu0 0.0
  %1307 = vmatpush1.msra.mxu0 0.0
  %1308 = vmatprep.subr.mxu0 0.0
  %1309 = vmatpush1.msra.mxu0 0.0
  %1310 = vmatprep.subr.mxu0 0.0
  %1311 = vmatpush1.msra.mxu0 0.0
  %1312 = vmatprep.mubr.f32.mxu0 0.0
  %v1313 = vand.u32 %v999, 4294901760
  %1314 = vmatmul.mubr.f32.gmra.mrb[0].mxu0 %v1313
  %v1315 = vpop.f32.mrb[0].mxu0
  %v1316 = vadd.f32 %v1095, %v1315
  %v1317 = vpop.f32.mrb[0].mxu0
  %1318 = vmatprep.mubr.f32.mxu0 0.0
  %v1319 = vand.u32 %v1000, 4294901760
  %1320 = vmatmul.mubr.f32.gmra.mrb[0].mxu0 %v1319
  %v1321 = vpop.f32.mrb[0].mxu0
  %v1322 = vadd.f32 %v1105, %v1321
  %v1323 = vpop.f32.mrb[0].mxu0
  %1324 = vmatprep.mubr.f32.mxu0 0.0
  %v1325 = vand.u32 %v1001, 4294901760
  %1326 = vmatmul.mubr.f32.gmra.mrb[0].mxu0 %v1325
  %v1327 = vpop.f32.mrb[0].mxu0
  %v1328 = vadd.f32 %v1115, %v1327
  %v1329 = vpop.f32.mrb[0].mxu0
  %1330 = vmatprep.mubr.f32.mxu0 0.0
  %v1331 = vand.u32 %v1002, 4294901760
  %1332 = vmatmul.mubr.f32.gmra.mrb[0].mxu0 %v1331
  %v1333 = vpop.f32.mrb[0].mxu0
  %v1334 = vadd.f32 %v1125, %v1333
  %v1335 = vpop.f32.mrb[0].mxu0
  %1336 = vmatprep.mubr.f32.mxu0 0.0
  %v1337 = vand.u32 %v1003, 4294901760
  %1338 = vmatmul.mubr.f32.gmra.mrb[0].mxu0 %v1337
  %v1339 = vpop.f32.mrb[0].mxu0
  %v1340 = vadd.f32 %v1135, %v1339
  %v1341 = vpop.f32.mrb[0].mxu0
  %1342 = vmatprep.mubr.f32.mxu0 0.0
  %v1343 = vand.u32 %v1004, 4294901760
  %1344 = vmatmul.mubr.f32.gmra.mrb[0].mxu0 %v1343
  %v1345 = vpop.f32.mrb[0].mxu0
  %v1346 = vadd.f32 %v1145, %v1345
  %v1347 = vpop.f32.mrb[0].mxu0
  %1348 = vmatprep.mubr.f32.mxu0 0.0
  %v1349 = vand.u32 %v1005, 4294901760
  %1350 = vmatmul.mubr.f32.gmra.mrb[0].mxu0 %v1349
  %v1351 = vpop.f32.mrb[0].mxu0
  %v1352 = vadd.f32 %v1155, %v1351
  %v1353 = vpop.f32.mrb[0].mxu0
  %1354 = vmatprep.mubr.f32.mxu0 0.0
  %v1355 = vand.u32 %v1006, 4294901760
  %1356 = vmatmul.mubr.f32.gmra.mrb[0].mxu0 %v1355
  %v1357 = vpop.f32.mrb[0].mxu0
  %v1358 = vadd.f32 %v1165, %v1357
  %v1359 = vpop.f32.mrb[0].mxu0
  %1360 = vdwg.mxu0
  %1361 = vmatprep.subr.mxu0 0.0
  %v1362 = vand.u32 %v25, 4294901760
  %v1363 = vsub.f32 %v25, %v1362
  %1364 = vmatpush1.msra.mxu0 %v1363
  %1365 = vmatprep.subr.mxu0 0.0
  %v1366 = vand.u32 %v26, 4294901760
  %v1367 = vsub.f32 %v26, %v1366
  %1368 = vmatpush1.msra.mxu0 %v1367
  %1369 = vmatprep.subr.mxu0 0.0
  %v1370 = vand.u32 %v27, 4294901760
  %v1371 = vsub.f32 %v27, %v1370
  %1372 = vmatpush1.msra.mxu0 %v1371
  %1373 = vmatprep.subr.mxu0 0.0
  %v1374 = vand.u32 %v28, 4294901760
  %v1375 = vsub.f32 %v28, %v1374
  %1376 = vmatpush1.msra.mxu0 %v1375
  %1377 = vmatprep.subr.mxu0 0.0
  %v1378 = vand.u32 %v29, 4294901760
  %v1379 = vsub.f32 %v29, %v1378
  %1380 = vmatpush1.msra.mxu0 %v1379
  %1381 = vmatprep.subr.mxu0 0.0
  %v1382 = vand.u32 %v30, 4294901760
  %v1383 = vsub.f32 %v30, %v1382
  %1384 = vmatpush1.msra.mxu0 %v1383
  %1385 = vmatprep.subr.mxu0 0.0
  %v1386 = vand.u32 %v31, 4294901760
  %v1387 = vsub.f32 %v31, %v1386
  %1388 = vmatpush1.msra.mxu0 %v1387
  %1389 = vmatprep.subr.mxu0 0.0
  %v1390 = vand.u32 %v32, 4294901760
  %v1391 = vsub.f32 %v32, %v1390
  %1392 = vmatpush1.msra.mxu0 %v1391
  %1393 = vmatprep.subr.mxu0 0.0
  %v1394 = vand.u32 %v33, 4294901760
  %v1395 = vsub.f32 %v33, %v1394
  %1396 = vmatpush1.msra.mxu0 %v1395
  %1397 = vmatprep.subr.mxu0 0.0
  %v1398 = vand.u32 %v34, 4294901760
  %v1399 = vsub.f32 %v34, %v1398
  %1400 = vmatpush1.msra.mxu0 %v1399
  %1401 = vmatprep.subr.mxu0 0.0
  %v1402 = vand.u32 %v35, 4294901760
  %v1403 = vsub.f32 %v35, %v1402
  %1404 = vmatpush1.msra.mxu0 %v1403
  %1405 = vmatprep.subr.mxu0 0.0
  %v1406 = vand.u32 %v36, 4294901760
  %v1407 = vsub.f32 %v36, %v1406
  %1408 = vmatpush1.msra.mxu0 %v1407
  %1409 = vmatprep.subr.mxu0 0.0
  %v1410 = vand.u32 %v37, 4294901760
  %v1411 = vsub.f32 %v37, %v1410
  %1412 = vmatpush1.msra.mxu0 %v1411
  %1413 = vmatprep.subr.mxu0 0.0
  %v1414 = vand.u32 %v38, 4294901760
  %v1415 = vsub.f32 %v38, %v1414
  %1416 = vmatpush1.msra.mxu0 %v1415
  %1417 = vmatprep.subr.mxu0 0.0
  %v1418 = vand.u32 %v39, 4294901760
  %v1419 = vsub.f32 %v39, %v1418
  %1420 = vmatpush1.msra.mxu0 %v1419
  %1421 = vmatprep.subr.mxu0 0.0
  %v1422 = vand.u32 %v40, 4294901760
  %v1423 = vsub.f32 %v40, %v1422
  %1424 = vmatpush1.msra.mxu0 %v1423
  %1425 = vmatprep.subr.mxu0 0.0
  %1426 = vmatpush1.msra.mxu0 0.0
  %1427 = vmatprep.subr.mxu0 0.0
  %1428 = vmatpush1.msra.mxu0 0.0
  %1429 = vmatprep.subr.mxu0 0.0
  %1430 = vmatpush1.msra.mxu0 0.0
  %1431 = vmatprep.subr.mxu0 0.0
  %1432 = vmatpush1.msra.mxu0 0.0
  %1433 = vmatprep.subr.mxu0 0.0
  %1434 = vmatpush1.msra.mxu0 0.0
  %1435 = vmatprep.subr.mxu0 0.0
  %1436 = vmatpush1.msra.mxu0 0.0
  %1437 = vmatprep.subr.mxu0 0.0
  %1438 = vmatpush1.msra.mxu0 0.0
  %1439 = vmatprep.subr.mxu0 0.0
  %1440 = vmatpush1.msra.mxu0 0.0
  %1441 = vmatprep.subr.mxu0 0.0
  %1442 = vmatpush1.msra.mxu0 0.0
  %1443 = vmatprep.subr.mxu0 0.0
  %1444 = vmatpush1.msra.mxu0 0.0
  %1445 = vmatprep.subr.mxu0 0.0
  %1446 = vmatpush1.msra.mxu0 0.0
  %1447 = vmatprep.subr.mxu0 0.0
  %1448 = vmatpush1.msra.mxu0 0.0
  %1449 = vmatprep.subr.mxu0 0.0
  %1450 = vmatpush1.msra.mxu0 0.0
  %1451 = vmatprep.subr.mxu0 0.0
  %1452 = vmatpush1.msra.mxu0 0.0
  %1453 = vmatprep.subr.mxu0 0.0
  %1454 = vmatpush1.msra.mxu0 0.0
  %1455 = vmatprep.subr.mxu0 0.0
  %1456 = vmatpush1.msra.mxu0 0.0
  %1457 = vmatprep.mubr.f32.mxu0 0.0
  %v1458 = vand.u32 %v999, 4294901760
  %v1459 = vsub.f32 %v999, %v1458
  %1460 = vmatmul.mubr.f32.gmra.mrb[0].mxu0 %v1459
  %v1461 = vpop.f32.mrb[0].mxu0
  %v1462 = vadd.f32 %v1316, %v1461
  %v1463 = vpop.f32.mrb[0].mxu0
  %1464 = vmatprep.mubr.f32.mxu0 0.0
  %v1465 = vand.u32 %v1000, 4294901760
  %v1466 = vsub.f32 %v1000, %v1465
  %1467 = vmatmul.mubr.f32.gmra.mrb[0].mxu0 %v1466
  %v1468 = vpop.f32.mrb[0].mxu0
  %v1469 = vadd.f32 %v1322, %v1468
  %v1470 = vpop.f32.mrb[0].mxu0
  %1471 = vmatprep.mubr.f32.mxu0 0.0
  %v1472 = vand.u32 %v1001, 4294901760
  %v1473 = vsub.f32 %v1001, %v1472
  %1474 = vmatmul.mubr.f32.gmra.mrb[0].mxu0 %v1473
  %v1475 = vpop.f32.mrb[0].mxu0
  %v1476 = vadd.f32 %v1328, %v1475
  %v1477 = vpop.f32.mrb[0].mxu0
  %1478 = vmatprep.mubr.f32.mxu0 0.0
  %v1479 = vand.u32 %v1002, 4294901760
  %v1480 = vsub.f32 %v1002, %v1479
  %1481 = vmatmul.mubr.f32.gmra.mrb[0].mxu0 %v1480
  %v1482 = vpop.f32.mrb[0].mxu0
  %v1483 = vadd.f32 %v1334, %v1482
  %v1484 = vpop.f32.mrb[0].mxu0
  %1485 = vmatprep.mubr.f32.mxu0 0.0
  %v1486 = vand.u32 %v1003, 4294901760
  %v1487 = vsub.f32 %v1003, %v1486
  %1488 = vmatmul.mubr.f32.gmra.mrb[0].mxu0 %v1487
  %v1489 = vpop.f32.mrb[0].mxu0
  %v1490 = vadd.f32 %v1340, %v1489
  %v1491 = vpop.f32.mrb[0].mxu0
  %1492 = vmatprep.mubr.f32.mxu0 0.0
  %v1493 = vand.u32 %v1004, 4294901760
  %v1494 = vsub.f32 %v1004, %v1493
  %1495 = vmatmul.mubr.f32.gmra.mrb[0].mxu0 %v1494
  %v1496 = vpop.f32.mrb[0].mxu0
  %v1497 = vadd.f32 %v1346, %v1496
  %v1498 = vpop.f32.mrb[0].mxu0
  %1499 = vmatprep.mubr.f32.mxu0 0.0
  %v1500 = vand.u32 %v1005, 4294901760
  %v1501 = vsub.f32 %v1005, %v1500
  %1502 = vmatmul.mubr.f32.gmra.mrb[0].mxu0 %v1501
  %v1503 = vpop.f32.mrb[0].mxu0
  %v1504 = vadd.f32 %v1352, %v1503
  %v1505 = vpop.f32.mrb[0].mxu0
  %1506 = vmatprep.mubr.f32.mxu0 0.0
  %v1507 = vand.u32 %v1006, 4294901760
  %v1508 = vsub.f32 %v1006, %v1507
  %1509 = vmatmul.mubr.f32.gmra.mrb[0].mxu0 %v1508
  %v1510 = vpop.f32.mrb[0].mxu0
  %v1511 = vadd.f32 %v1358, %v1510
  %v1512 = vpop.f32.mrb[0].mxu0
  %1513 = vdwg.mxu0
  %1514 = vmatprep.subr.mxu0 0.0
  %v1515 = vand.u32 %v25, 4294901760
  %1516 = vmatpush1.msra.mxu0 %v1515
  %1517 = vmatprep.subr.mxu0 0.0
  %v1518 = vand.u32 %v26, 4294901760
  %1519 = vmatpush1.msra.mxu0 %v1518
  %1520 = vmatprep.subr.mxu0 0.0
  %v1521 = vand.u32 %v27, 4294901760
  %1522 = vmatpush1.msra.mxu0 %v1521
  %1523 = vmatprep.subr.mxu0 0.0
  %v1524 = vand.u32 %v28, 4294901760
  %1525 = vmatpush1.msra.mxu0 %v1524
  %1526 = vmatprep.subr.mxu0 0.0
  %v1527 = vand.u32 %v29, 4294901760
  %1528 = vmatpush1.msra.mxu0 %v1527
  %1529 = vmatprep.subr.mxu0 0.0
  %v1530 = vand.u32 %v30, 4294901760
  %1531 = vmatpush1.msra.mxu0 %v1530
  %1532 = vmatprep.subr.mxu0 0.0
  %v1533 = vand.u32 %v31, 4294901760
  %1534 = vmatpush1.msra.mxu0 %v1533
  %1535 = vmatprep.subr.mxu0 0.0
  %v1536 = vand.u32 %v32, 4294901760
  %1537 = vmatpush1.msra.mxu0 %v1536
  %1538 = vmatprep.subr.mxu0 0.0
  %v1539 = vand.u32 %v33, 4294901760
  %1540 = vmatpush1.msra.mxu0 %v1539
  %1541 = vmatprep.subr.mxu0 0.0
  %v1542 = vand.u32 %v34, 4294901760
  %1543 = vmatpush1.msra.mxu0 %v1542
  %1544 = vmatprep.subr.mxu0 0.0
  %v1545 = vand.u32 %v35, 4294901760
  %1546 = vmatpush1.msra.mxu0 %v1545
  %1547 = vmatprep.subr.mxu0 0.0
  %v1548 = vand.u32 %v36, 4294901760
  %1549 = vmatpush1.msra.mxu0 %v1548
  %1550 = vmatprep.subr.mxu0 0.0
  %v1551 = vand.u32 %v37, 4294901760
  %1552 = vmatpush1.msra.mxu0 %v1551
  %1553 = vmatprep.subr.mxu0 0.0
  %v1554 = vand.u32 %v38, 4294901760
  %1555 = vmatpush1.msra.mxu0 %v1554
  %1556 = vmatprep.subr.mxu0 0.0
  %v1557 = vand.u32 %v39, 4294901760
  %1558 = vmatpush1.msra.mxu0 %v1557
  %1559 = vmatprep.subr.mxu0 0.0
  %v1560 = vand.u32 %v40, 4294901760
  %1561 = vmatpush1.msra.mxu0 %v1560
  %1562 = vmatprep.subr.mxu0 0.0
  %1563 = vmatpush1.msra.mxu0 0.0
  %1564 = vmatprep.subr.mxu0 0.0
  %1565 = vmatpush1.msra.mxu0 0.0
  %1566 = vmatprep.subr.mxu0 0.0
  %1567 = vmatpush1.msra.mxu0 0.0
  %1568 = vmatprep.subr.mxu0 0.0
  %1569 = vmatpush1.msra.mxu0 0.0
  %1570 = vmatprep.subr.mxu0 0.0
  %1571 = vmatpush1.msra.mxu0 0.0
  %1572 = vmatprep.subr.mxu0 0.0
  %1573 = vmatpush1.msra.mxu0 0.0
  %1574 = vmatprep.subr.mxu0 0.0
  %1575 = vmatpush1.msra.mxu0 0.0
  %1576 = vmatprep.subr.mxu0 0.0
  %1577 = vmatpush1.msra.mxu0 0.0
  %1578 = vmatprep.subr.mxu0 0.0
  %1579 = vmatpush1.msra.mxu0 0.0
  %1580 = vmatprep.subr.mxu0 0.0
  %1581 = vmatpush1.msra.mxu0 0.0
  %1582 = vmatprep.subr.mxu0 0.0
  %1583 = vmatpush1.msra.mxu0 0.0
  %1584 = vmatprep.subr.mxu0 0.0
  %1585 = vmatpush1.msra.mxu0 0.0
  %1586 = vmatprep.subr.mxu0 0.0
  %1587 = vmatpush1.msra.mxu0 0.0
  %1588 = vmatprep.subr.mxu0 0.0
  %1589 = vmatpush1.msra.mxu0 0.0
  %1590 = vmatprep.subr.mxu0 0.0
  %1591 = vmatpush1.msra.mxu0 0.0
  %1592 = vmatprep.subr.mxu0 0.0
  %1593 = vmatpush1.msra.mxu0 0.0
  %1594 = vmatprep.mubr.f32.mxu0 0.0
  %v1595 = vand.u32 %v999, 4294901760
  %v1596 = vsub.f32 %v999, %v1595
  %v1597 = vand.u32 %v1596, 4294901760
  %1598 = vmatmul.mubr.f32.gmra.mrb[0].mxu0 %v1597
  %v1599 = vpop.f32.mrb[0].mxu0
  %v1600 = vadd.f32 %v1462, %v1599
  %v1601 = vpop.f32.mrb[0].mxu0
  %1602 = vmatprep.mubr.f32.mxu0 0.0
  %v1603 = vand.u32 %v1000, 4294901760
  %v1604 = vsub.f32 %v1000, %v1603
  %v1605 = vand.u32 %v1604, 4294901760
  %1606 = vmatmul.mubr.f32.gmra.mrb[0].mxu0 %v1605
  %v1607 = vpop.f32.mrb[0].mxu0
  %v1608 = vadd.f32 %v1469, %v1607
  %v1609 = vpop.f32.mrb[0].mxu0
  %1610 = vmatprep.mubr.f32.mxu0 0.0
  %v1611 = vand.u32 %v1001, 4294901760
  %v1612 = vsub.f32 %v1001, %v1611
  %v1613 = vand.u32 %v1612, 4294901760
  %1614 = vmatmul.mubr.f32.gmra.mrb[0].mxu0 %v1613
  %v1615 = vpop.f32.mrb[0].mxu0
  %v1616 = vadd.f32 %v1476, %v1615
  %v1617 = vpop.f32.mrb[0].mxu0
  %1618 = vmatprep.mubr.f32.mxu0 0.0
  %v1619 = vand.u32 %v1002, 4294901760
  %v1620 = vsub.f32 %v1002, %v1619
  %v1621 = vand.u32 %v1620, 4294901760
  %1622 = vmatmul.mubr.f32.gmra.mrb[0].mxu0 %v1621
  %v1623 = vpop.f32.mrb[0].mxu0
  %v1624 = vadd.f32 %v1483, %v1623
  %v1625 = vpop.f32.mrb[0].mxu0
  %1626 = vmatprep.mubr.f32.mxu0 0.0
  %v1627 = vand.u32 %v1003, 4294901760
  %v1628 = vsub.f32 %v1003, %v1627
  %v1629 = vand.u32 %v1628, 4294901760
  %1630 = vmatmul.mubr.f32.gmra.mrb[0].mxu0 %v1629
  %v1631 = vpop.f32.mrb[0].mxu0
  %v1632 = vadd.f32 %v1490, %v1631
  %v1633 = vpop.f32.mrb[0].mxu0
  %1634 = vmatprep.mubr.f32.mxu0 0.0
  %v1635 = vand.u32 %v1004, 4294901760
  %v1636 = vsub.f32 %v1004, %v1635
  %v1637 = vand.u32 %v1636, 4294901760
  %1638 = vmatmul.mubr.f32.gmra.mrb[0].mxu0 %v1637
  %v1639 = vpop.f32.mrb[0].mxu0
  %v1640 = vadd.f32 %v1497, %v1639
  %v1641 = vpop.f32.mrb[0].mxu0
  %1642 = vmatprep.mubr.f32.mxu0 0.0
  %v1643 = vand.u32 %v1005, 4294901760
  %v1644 = vsub.f32 %v1005, %v1643
  %v1645 = vand.u32 %v1644, 4294901760
  %1646 = vmatmul.mubr.f32.gmra.mrb[0].mxu0 %v1645
  %v1647 = vpop.f32.mrb[0].mxu0
  %v1648 = vadd.f32 %v1504, %v1647
  %v1649 = vpop.f32.mrb[0].mxu0
  %1650 = vmatprep.mubr.f32.mxu0 0.0
  %v1651 = vand.u32 %v1006, 4294901760
  %v1652 = vsub.f32 %v1006, %v1651
  %v1653 = vand.u32 %v1652, 4294901760
  %1654 = vmatmul.mubr.f32.gmra.mrb[0].mxu0 %v1653
  %v1655 = vpop.f32.mrb[0].mxu0
  %v1656 = vadd.f32 %v1511, %v1655
  %v1657 = vpop.f32.mrb[0].mxu0
  %1658 = vdwg.mxu0
  %1659 = vmatprep.subr.mxu0 0.0
  %v1660 = vand.u32 %v25, 4294901760
  %v1661 = vsub.f32 %v25, %v1660
  %v1662 = vand.u32 %v1661, 4294901760
  %1663 = vmatpush1.msra.mxu0 %v1662
  %1664 = vmatprep.subr.mxu0 0.0
  %v1665 = vand.u32 %v26, 4294901760
  %v1666 = vsub.f32 %v26, %v1665
  %v1667 = vand.u32 %v1666, 4294901760
  %1668 = vmatpush1.msra.mxu0 %v1667
  %1669 = vmatprep.subr.mxu0 0.0
  %v1670 = vand.u32 %v27, 4294901760
  %v1671 = vsub.f32 %v27, %v1670
  %v1672 = vand.u32 %v1671, 4294901760
  %1673 = vmatpush1.msra.mxu0 %v1672
  %1674 = vmatprep.subr.mxu0 0.0
  %v1675 = vand.u32 %v28, 4294901760
  %v1676 = vsub.f32 %v28, %v1675
  %v1677 = vand.u32 %v1676, 4294901760
  %1678 = vmatpush1.msra.mxu0 %v1677
  %1679 = vmatprep.subr.mxu0 0.0
  %v1680 = vand.u32 %v29, 4294901760
  %v1681 = vsub.f32 %v29, %v1680
  %v1682 = vand.u32 %v1681, 4294901760
  %1683 = vmatpush1.msra.mxu0 %v1682
  %1684 = vmatprep.subr.mxu0 0.0
  %v1685 = vand.u32 %v30, 4294901760
  %v1686 = vsub.f32 %v30, %v1685
  %v1687 = vand.u32 %v1686, 4294901760
  %1688 = vmatpush1.msra.mxu0 %v1687
  %1689 = vmatprep.subr.mxu0 0.0
  %v1690 = vand.u32 %v31, 4294901760
  %v1691 = vsub.f32 %v31, %v1690
  %v1692 = vand.u32 %v1691, 4294901760
  %1693 = vmatpush1.msra.mxu0 %v1692
  %1694 = vmatprep.subr.mxu0 0.0
  %v1695 = vand.u32 %v32, 4294901760
  %v1696 = vsub.f32 %v32, %v1695
  %v1697 = vand.u32 %v1696, 4294901760
  %1698 = vmatpush1.msra.mxu0 %v1697
  %1699 = vmatprep.subr.mxu0 0.0
  %v1700 = vand.u32 %v33, 4294901760
  %v1701 = vsub.f32 %v33, %v1700
  %v1702 = vand.u32 %v1701, 4294901760
  %1703 = vmatpush1.msra.mxu0 %v1702
  %1704 = vmatprep.subr.mxu0 0.0
  %v1705 = vand.u32 %v34, 4294901760
  %v1706 = vsub.f32 %v34, %v1705
  %v1707 = vand.u32 %v1706, 4294901760
  %1708 = vmatpush1.msra.mxu0 %v1707
  %1709 = vmatprep.subr.mxu0 0.0
  %v1710 = vand.u32 %v35, 4294901760
  %v1711 = vsub.f32 %v35, %v1710
  %v1712 = vand.u32 %v1711, 4294901760
  %1713 = vmatpush1.msra.mxu0 %v1712
  %1714 = vmatprep.subr.mxu0 0.0
  %v1715 = vand.u32 %v36, 4294901760
  %v1716 = vsub.f32 %v36, %v1715
  %v1717 = vand.u32 %v1716, 4294901760
  %1718 = vmatpush1.msra.mxu0 %v1717
  %1719 = vmatprep.subr.mxu0 0.0
  %v1720 = vand.u32 %v37, 4294901760
  %v1721 = vsub.f32 %v37, %v1720
  %v1722 = vand.u32 %v1721, 4294901760
  %1723 = vmatpush1.msra.mxu0 %v1722
  %1724 = vmatprep.subr.mxu0 0.0
  %v1725 = vand.u32 %v38, 4294901760
  %v1726 = vsub.f32 %v38, %v1725
  %v1727 = vand.u32 %v1726, 4294901760
  %1728 = vmatpush1.msra.mxu0 %v1727
  %1729 = vmatprep.subr.mxu0 0.0
  %v1730 = vand.u32 %v39, 4294901760
  %v1731 = vsub.f32 %v39, %v1730
  %v1732 = vand.u32 %v1731, 4294901760
  %1733 = vmatpush1.msra.mxu0 %v1732
  %1734 = vmatprep.subr.mxu0 0.0
  %v1735 = vand.u32 %v40, 4294901760
  %v1736 = vsub.f32 %v40, %v1735
  %v1737 = vand.u32 %v1736, 4294901760
  %1738 = vmatpush1.msra.mxu0 %v1737
  %1739 = vmatprep.subr.mxu0 0.0
  %1740 = vmatpush1.msra.mxu0 0.0
  %1741 = vmatprep.subr.mxu0 0.0
  %1742 = vmatpush1.msra.mxu0 0.0
  %1743 = vmatprep.subr.mxu0 0.0
  %1744 = vmatpush1.msra.mxu0 0.0
  %1745 = vmatprep.subr.mxu0 0.0
  %1746 = vmatpush1.msra.mxu0 0.0
  %1747 = vmatprep.subr.mxu0 0.0
  %1748 = vmatpush1.msra.mxu0 0.0
  %1749 = vmatprep.subr.mxu0 0.0
  %1750 = vmatpush1.msra.mxu0 0.0
  %1751 = vmatprep.subr.mxu0 0.0
  %1752 = vmatpush1.msra.mxu0 0.0
  %1753 = vmatprep.subr.mxu0 0.0
  %1754 = vmatpush1.msra.mxu0 0.0
  %1755 = vmatprep.subr.mxu0 0.0
  %1756 = vmatpush1.msra.mxu0 0.0
  %1757 = vmatprep.subr.mxu0 0.0
  %1758 = vmatpush1.msra.mxu0 0.0
  %1759 = vmatprep.subr.mxu0 0.0
  %1760 = vmatpush1.msra.mxu0 0.0
  %1761 = vmatprep.subr.mxu0 0.0
  %1762 = vmatpush1.msra.mxu0 0.0
  %1763 = vmatprep.subr.mxu0 0.0
  %1764 = vmatpush1.msra.mxu0 0.0
  %1765 = vmatprep.subr.mxu0 0.0
  %1766 = vmatpush1.msra.mxu0 0.0
  %1767 = vmatprep.subr.mxu0 0.0
  %1768 = vmatpush1.msra.mxu0 0.0
  %1769 = vmatprep.subr.mxu0 0.0
  %1770 = vmatpush1.msra.mxu0 0.0
  %1771 = vmatprep.mubr.f32.mxu0 0.0
  %v1772 = vand.u32 %v999, 4294901760
  %1773 = vmatmul.mubr.f32.gmra.mrb[0].mxu0 %v1772
  %v1774 = vpop.f32.mrb[0].mxu0
  %v1775 = vadd.f32 %v1600, %v1774
  %v1776 = vpop.f32.mrb[0].mxu0
  %1777 = vmatprep.mubr.f32.mxu0 0.0
  %v1778 = vand.u32 %v1000, 4294901760
  %1779 = vmatmul.mubr.f32.gmra.mrb[0].mxu0 %v1778
  %v1780 = vpop.f32.mrb[0].mxu0
  %v1781 = vadd.f32 %v1608, %v1780
  %v1782 = vpop.f32.mrb[0].mxu0
  %1783 = vmatprep.mubr.f32.mxu0 0.0
  %v1784 = vand.u32 %v1001, 4294901760
  %1785 = vmatmul.mubr.f32.gmra.mrb[0].mxu0 %v1784
  %v1786 = vpop.f32.mrb[0].mxu0
  %v1787 = vadd.f32 %v1616, %v1786
  %v1788 = vpop.f32.mrb[0].mxu0
  %1789 = vmatprep.mubr.f32.mxu0 0.0
  %v1790 = vand.u32 %v1002, 4294901760
  %1791 = vmatmul.mubr.f32.gmra.mrb[0].mxu0 %v1790
  %v1792 = vpop.f32.mrb[0].mxu0
  %v1793 = vadd.f32 %v1624, %v1792
  %v1794 = vpop.f32.mrb[0].mxu0
  %1795 = vmatprep.mubr.f32.mxu0 0.0
  %v1796 = vand.u32 %v1003, 4294901760
  %1797 = vmatmul.mubr.f32.gmra.mrb[0].mxu0 %v1796
  %v1798 = vpop.f32.mrb[0].mxu0
  %v1799 = vadd.f32 %v1632, %v1798
  %v1800 = vpop.f32.mrb[0].mxu0
  %1801 = vmatprep.mubr.f32.mxu0 0.0
  %v1802 = vand.u32 %v1004, 4294901760
  %1803 = vmatmul.mubr.f32.gmra.mrb[0].mxu0 %v1802
  %v1804 = vpop.f32.mrb[0].mxu0
  %v1805 = vadd.f32 %v1640, %v1804
  %v1806 = vpop.f32.mrb[0].mxu0
  %1807 = vmatprep.mubr.f32.mxu0 0.0
  %v1808 = vand.u32 %v1005, 4294901760
  %1809 = vmatmul.mubr.f32.gmra.mrb[0].mxu0 %v1808
  %v1810 = vpop.f32.mrb[0].mxu0
  %v1811 = vadd.f32 %v1648, %v1810
  %v1812 = vpop.f32.mrb[0].mxu0
  %1813 = vmatprep.mubr.f32.mxu0 0.0
  %v1814 = vand.u32 %v1006, 4294901760
  %1815 = vmatmul.mubr.f32.gmra.mrb[0].mxu0 %v1814
  %v1816 = vpop.f32.mrb[0].mxu0
  %v1817 = vadd.f32 %v1656, %v1816
  %v1818 = vpop.f32.mrb[0].mxu0
  %1819 = vdwg.mxu0
  %1820 = vmatprep.subr.mxu0 0.0
  %v1821 = vand.u32 %v25, 4294901760
  %1822 = vmatpush1.msra.mxu0 %v1821
  %1823 = vmatprep.subr.mxu0 0.0
  %v1824 = vand.u32 %v26, 4294901760
  %1825 = vmatpush1.msra.mxu0 %v1824
  %1826 = vmatprep.subr.mxu0 0.0
  %v1827 = vand.u32 %v27, 4294901760
  %1828 = vmatpush1.msra.mxu0 %v1827
  %1829 = vmatprep.subr.mxu0 0.0
  %v1830 = vand.u32 %v28, 4294901760
  %1831 = vmatpush1.msra.mxu0 %v1830
  %1832 = vmatprep.subr.mxu0 0.0
  %v1833 = vand.u32 %v29, 4294901760
  %1834 = vmatpush1.msra.mxu0 %v1833
  %1835 = vmatprep.subr.mxu0 0.0
  %v1836 = vand.u32 %v30, 4294901760
  %1837 = vmatpush1.msra.mxu0 %v1836
  %1838 = vmatprep.subr.mxu0 0.0
  %v1839 = vand.u32 %v31, 4294901760
  %1840 = vmatpush1.msra.mxu0 %v1839
  %1841 = vmatprep.subr.mxu0 0.0
  %v1842 = vand.u32 %v32, 4294901760
  %1843 = vmatpush1.msra.mxu0 %v1842
  %1844 = vmatprep.subr.mxu0 0.0
  %v1845 = vand.u32 %v33, 4294901760
  %1846 = vmatpush1.msra.mxu0 %v1845
  %1847 = vmatprep.subr.mxu0 0.0
  %v1848 = vand.u32 %v34, 4294901760
  %1849 = vmatpush1.msra.mxu0 %v1848
  %1850 = vmatprep.subr.mxu0 0.0
  %v1851 = vand.u32 %v35, 4294901760
  %1852 = vmatpush1.msra.mxu0 %v1851
  %1853 = vmatprep.subr.mxu0 0.0
  %v1854 = vand.u32 %v36, 4294901760
  %1855 = vmatpush1.msra.mxu0 %v1854
  %1856 = vmatprep.subr.mxu0 0.0
  %v1857 = vand.u32 %v37, 4294901760
  %1858 = vmatpush1.msra.mxu0 %v1857
  %1859 = vmatprep.subr.mxu0 0.0
  %v1860 = vand.u32 %v38, 4294901760
  %1861 = vmatpush1.msra.mxu0 %v1860
  %1862 = vmatprep.subr.mxu0 0.0
  %v1863 = vand.u32 %v39, 4294901760
  %1864 = vmatpush1.msra.mxu0 %v1863
  %1865 = vmatprep.subr.mxu0 0.0
  %v1866 = vand.u32 %v40, 4294901760
  %1867 = vmatpush1.msra.mxu0 %v1866
  %1868 = vmatprep.subr.mxu0 0.0
  %1869 = vmatpush1.msra.mxu0 0.0
  %1870 = vmatprep.subr.mxu0 0.0
  %1871 = vmatpush1.msra.mxu0 0.0
  %1872 = vmatprep.subr.mxu0 0.0
  %1873 = vmatpush1.msra.mxu0 0.0
  %1874 = vmatprep.subr.mxu0 0.0
  %1875 = vmatpush1.msra.mxu0 0.0
  %1876 = vmatprep.subr.mxu0 0.0
  %1877 = vmatpush1.msra.mxu0 0.0
  %1878 = vmatprep.subr.mxu0 0.0
  %1879 = vmatpush1.msra.mxu0 0.0
  %1880 = vmatprep.subr.mxu0 0.0
  %1881 = vmatpush1.msra.mxu0 0.0
  %1882 = vmatprep.subr.mxu0 0.0
  %1883 = vmatpush1.msra.mxu0 0.0
  %1884 = vmatprep.subr.mxu0 0.0
  %1885 = vmatpush1.msra.mxu0 0.0
  %1886 = vmatprep.subr.mxu0 0.0
  %1887 = vmatpush1.msra.mxu0 0.0
  %1888 = vmatprep.subr.mxu0 0.0
  %1889 = vmatpush1.msra.mxu0 0.0
  %1890 = vmatprep.subr.mxu0 0.0
  %1891 = vmatpush1.msra.mxu0 0.0
  %1892 = vmatprep.subr.mxu0 0.0
  %1893 = vmatpush1.msra.mxu0 0.0
  %1894 = vmatprep.subr.mxu0 0.0
  %1895 = vmatpush1.msra.mxu0 0.0
  %1896 = vmatprep.subr.mxu0 0.0
  %1897 = vmatpush1.msra.mxu0 0.0
  %1898 = vmatprep.subr.mxu0 0.0
  %1899 = vmatpush1.msra.mxu0 0.0
  %1900 = vmatprep.mubr.f32.mxu0 0.0
  %v1901 = vand.u32 %v999, 4294901760
  %1902 = vmatmul.mubr.f32.gmra.mrb[0].mxu0 %v1901
  %v1903 = vpop.f32.mrb[0].mxu0
  %v1904 = vadd.f32 %v1775, %v1903
  %v1905 = vpop.f32.mrb[0].mxu0
  %1906 = vmatprep.mubr.f32.mxu0 0.0
  %v1907 = vand.u32 %v1000, 4294901760
  %1908 = vmatmul.mubr.f32.gmra.mrb[0].mxu0 %v1907
  %v1909 = vpop.f32.mrb[0].mxu0
  %v1910 = vadd.f32 %v1781, %v1909
  %v1911 = vpop.f32.mrb[0].mxu0
  %1912 = vmatprep.mubr.f32.mxu0 0.0
  %v1913 = vand.u32 %v1001, 4294901760
  %1914 = vmatmul.mubr.f32.gmra.mrb[0].mxu0 %v1913
  %v1915 = vpop.f32.mrb[0].mxu0
  %v1916 = vadd.f32 %v1787, %v1915
  %v1917 = vpop.f32.mrb[0].mxu0
  %1918 = vmatprep.mubr.f32.mxu0 0.0
  %v1919 = vand.u32 %v1002, 4294901760
  %1920 = vmatmul.mubr.f32.gmra.mrb[0].mxu0 %v1919
  %v1921 = vpop.f32.mrb[0].mxu0
  %v1922 = vadd.f32 %v1793, %v1921
  %v1923 = vpop.f32.mrb[0].mxu0
  %1924 = vmatprep.mubr.f32.mxu0 0.0
  %v1925 = vand.u32 %v1003, 4294901760
  %1926 = vmatmul.mubr.f32.gmra.mrb[0].mxu0 %v1925
  %v1927 = vpop.f32.mrb[0].mxu0
  %v1928 = vadd.f32 %v1799, %v1927
  %v1929 = vpop.f32.mrb[0].mxu0
  %1930 = vmatprep.mubr.f32.mxu0 0.0
  %v1931 = vand.u32 %v1004, 4294901760
  %1932 = vmatmul.mubr.f32.gmra.mrb[0].mxu0 %v1931
  %v1933 = vpop.f32.mrb[0].mxu0
  %v1934 = vadd.f32 %v1805, %v1933
  %v1935 = vpop.f32.mrb[0].mxu0
  %1936 = vmatprep.mubr.f32.mxu0 0.0
  %v1937 = vand.u32 %v1005, 4294901760
  %1938 = vmatmul.mubr.f32.gmra.mrb[0].mxu0 %v1937
  %v1939 = vpop.f32.mrb[0].mxu0
  %v1940 = vadd.f32 %v1811, %v1939
  %v1941 = vpop.f32.mrb[0].mxu0
  %1942 = vmatprep.mubr.f32.mxu0 0.0
  %v1943 = vand.u32 %v1006, 4294901760
  %1944 = vmatmul.mubr.f32.gmra.mrb[0].mxu0 %v1943
  %v1945 = vpop.f32.mrb[0].mxu0
  %v1946 = vadd.f32 %v1817, %v1945
  %v1947 = vpop.f32.mrb[0].mxu0
  %1948 = vdwg.mxu0
  %v1949 = vmul.f32 %v1904, 0.0625
  %v1950 = vmul.f32 %v1910, 0.0625
  %v1951 = vmul.f32 %v1916, 0.0625
  %v1952 = vmul.f32 %v1922, 0.0625
  %v1953 = vmul.f32 %v1928, 0.0625
  %v1954 = vmul.f32 %v1934, 0.0625
  %v1955 = vmul.f32 %v1940, 0.0625
  %v1956 = vmul.f32 %v1946, 0.0625
  %v1957 = vadd.f32 %v1949, 1e-05
  %v1958 = vadd.f32 %v1950, 1e-05
  %v1959 = vadd.f32 %v1951, 1e-05
  %v1960 = vadd.f32 %v1952, 1e-05
  %v1961 = vadd.f32 %v1953, 1e-05
  %v1962 = vadd.f32 %v1954, 1e-05
  %v1963 = vadd.f32 %v1955, 1e-05
  %v1964 = vadd.f32 %v1956, 1e-05
  %v1965 = vrsqrt.pop %v1957
  %v1966 = vrsqrt.pop %v1958
  %v1967 = vrsqrt.pop %v1959
  %v1968 = vrsqrt.pop %v1960
  %v1969 = vrsqrt.pop %v1961
  %v1970 = vrsqrt.pop %v1962
  %v1971 = vrsqrt.pop %v1963
  %v1972 = vrsqrt.pop %v1964
  %v1973 = vmul.f32 %v991, %v1965
  %v1974 = vmul.f32 %v992, %v1966
  %v1975 = vmul.f32 %v993, %v1967
  %v1976 = vmul.f32 %v994, %v1968
  %v1977 = vmul.f32 %v995, %v1969
  %v1978 = vmul.f32 %v996, %v1970
  %v1979 = vmul.f32 %v997, %v1971
  %v1980 = vmul.f32 %v998, %v1972
  %v1981 = vld [vmem:[%s2] sm:$0x1]
  %v1983 = vlaneseq
  %v1984 = vshrl.u32 %v1983, 7
  %v1985 = vsub.s32 0, %v1984
  %v1986 = vrot.slane %v1981, %v1985
  %v1988 = vmul.f32 %v1973, %v1986
  %v1989 = vmul.f32 %v1974, %v1986
  %v1990 = vmul.f32 %v1975, %v1986
  %v1991 = vmul.f32 %v1976, %v1986
  %v1992 = vmul.f32 %v1977, %v1986
  %v1993 = vmul.f32 %v1978, %v1986
  %v1994 = vmul.f32 %v1979, %v1986
  %v1995 = vmul.f32 %v1980, %v1986
  %v1996 = vld [vmem:[%s3] sm:$0x1]
  %v1998 = vlaneseq
  %v1999 = vshrl.u32 %v1998, 7
  %v2000 = vsub.s32 0, %v1999
  %v2001 = vrot.slane %v1996, %v2000
  %v2003 = vadd.f32 %v1988, %v2001
  %v2004 = vadd.f32 %v1989, %v2001
  %v2005 = vadd.f32 %v1990, %v2001
  %v2006 = vadd.f32 %v1991, %v2001
  %v2007 = vadd.f32 %v1992, %v2001
  %v2008 = vadd.f32 %v1993, %v2001
  %v2009 = vadd.f32 %v1994, %v2001
  %v2010 = vadd.f32 %v1995, %v2001
  %2011 = vst [vmem:[%s4] sm:$0xff] %v2003
  %2012 = vst [vmem:[%s4 + $0x8] sm:$0xff] %v2004
  %2013 = vst [vmem:[%s4 + $0x10] sm:$0xff] %v2005
  %2014 = vst [vmem:[%s4 + $0x18] sm:$0xff] %v2006
  %2015 = vst [vmem:[%s4 + $0x20] sm:$0xff] %v2007
  %2016 = vst [vmem:[%s4 + $0x28] sm:$0xff] %v2008
  %2017 = vst [vmem:[%s4 + $0x30] sm:$0xff] %v2009
  %2018 = vst [vmem:[%s4 + $0x38] sm:$0xff] %v2010
  // Predicated region
  $region18: #{sfca_forward.9} parent=0 // pred_check
    _
  $region19: #{sfca_forward.9} parent=0 // pred_check_branch
    %2020 = sbr.rel (0) target = $region21
  $region20: #{sfca_forward.9} parent=0 // pred_region
    _
  $region21: #{sfca_forward.9} parent=0 // pred_fallthru
    _
  // Predicated region
  $region22: #{sfca_forward.9} parent=0 // pred_check
    _
  $region23: #{sfca_forward.9} parent=0 // pred_check_branch
    %2022 = sbr.rel (0) target = $region25
  $region24: #{sfca_forward.9} parent=0 // pred_region
    _
  $region25: #{sfca_forward.9} parent=0 // pred_fallthru
    _

</llo_original>
